<compile_context>
chip_gen: v7x
topology: tpu7x:2x2x1
jax: 0.10.0
libtpu: 0.0.40
codegen_flags: <defaults>
</compile_context>

<pallas_src>
import jax
import jax.numpy as jnp
from jax.experimental import pallas as pl
from jax.experimental.pallas import tpu as pltpu

EPS = 1e-5           # BatchNorm2d default eps
K = 7                # SpatialGate kernel size
PAD = (K - 1) // 2   # = 3


def _make_spatial_gate_kernel(N, C, H, W):
    Hp, Wp = H + 2 * PAD, W + 2 * PAD
    HWp = Hp * Wp                     # flat padded spatial size (484)
    L = (H - 1) * Wp + W              # flat conv-output length incl. junk cols (346)
    OFF0 = PAD * Wp + PAD             # flat offset of pixel (0,0) in padded map (69)
    KK = K * K
    NC = N * C

    def kernel(x_ref, mask_ref, w_ref, g_ref, b_ref, o_ref):
        # x_ref: [N*C, Hp*Wp] — spatially zero-padded input, flattened.
        x = x_ref[...]
        xr = x.reshape(N, C, HWp)

        # ---- ChannelPool on the padded input (max / mean over channels).
        # Padding lanes are zero in every channel, so these ARE the zero-padded
        # pooled maps, built entirely in registers (no scratch round trip).
        pmax = jnp.max(xr, axis=1)                    # [N, Hp*Wp]
        pmean = jnp.sum(xr, axis=1) * (1.0 / C)       # [N, Hp*Wp]

        # ---- 7x7 conv, 2 in-ch -> 1 out-ch (kept OFF the MXU, see header).
        # Tap (ky,kx): one contiguous lane-slice of length L at offset ky*Wp+kx
        # + a scalar-broadcast FMA.  Four independent accumulator chains.
        a0 = jnp.zeros((N, L), jnp.float32)
        a1 = jnp.zeros((N, L), jnp.float32)
        a2 = jnp.zeros((N, L), jnp.float32)
        a3 = jnp.zeros((N, L), jnp.float32)
        for ky in range(K):
            for kx in range(K):
                off = ky * Wp + kx
                wmax = w_ref[ky * K + kx]             # weight[0, 0, ky, kx]
                wmean = w_ref[KK + ky * K + kx]       # weight[0, 1, ky, kx]
                tmax = pmax[:, off:off + L]
                tmean = pmean[:, off:off + L]
                if ky % 2 == 0:
                    a0 = a0 + wmax * tmax
                    a2 = a2 + wmean * tmean
                else:
                    a1 = a1 + wmax * tmax
                    a3 = a3 + wmean * tmean
        acc = (a0 + a1) + (a2 + a3)                   # [N, L]; cols W..Wp are junk

        # ---- BatchNorm2d(1): training-mode batch stats, biased variance,
        # centered two-pass formulation; mask zeroes the junk columns.
        mask = mask_ref[...]                          # [1, L] of {0,1}
        inv_cnt = 1.0 / (N * H * W)
        mu = jnp.sum(acc * mask, keepdims=True) * inv_cnt            # [1,1]
        d = acc - mu
        dm = d * mask
        var = jnp.sum(dm * dm, keepdims=True) * inv_cnt              # [1,1]
        y = d * (jax.lax.rsqrt(var + EPS) * g_ref[0]) + b_ref[0]     # [N, L]

        # ---- sigmoid gate (stable tanh form, EUP), broadcast over channels.
        scale = 0.5 * jnp.tanh(0.5 * y) + 0.5                        # [N, L]

        # x at output pixel (i,j) lives at padded lane (i*Wp+j) + OFF0, so the
        # gating multiply needs just one contiguous slice of x.  Junk columns
        # hit padding lanes of x (zero) and are dropped by the wrapper.
        xg = x[:, OFF0:OFF0 + L].reshape(N, C, L)
        o_ref[...] = (xg * scale.reshape(N, 1, L)).reshape(NC, L)

    return kernel


def spatial_gate(x_nchw, params):
    """SpatialGate forward (training-mode BN batch statistics).

    x_nchw: [N, C, H, W]; params: conv weight [1,2,7,7], BN gamma/beta [1].
    """
    N, C, H, W = x_nchw.shape
    Hp, Wp = H + 2 * PAD, W + 2 * PAD
    L = (H - 1) * Wp + W

    x = x_nchw.astype(jnp.float32)
    # Zero-pad spatially and flatten -> [N*C, Hp*Wp].  (Cheap, fusable XLA
    # pad/reshape; it lets the kernel keep the padded pooled maps in registers.)
    x_pad = jnp.pad(x, ((0, 0), (0, 0), (PAD, PAD), (PAD, PAD)))
    x2 = x_pad.reshape(N * C, Hp * Wp)

    # {0,1} mask over the flat conv-output lanes: 1 where the lane is a real
    # output pixel (column < W inside its Wp-strided row), 0 for junk columns.
    mask = (jnp.arange(L, dtype=jnp.int32) % Wp < W).astype(jnp.float32)
    mask = mask.reshape(1, L)

    w = params["w"].reshape(-1).astype(jnp.float32)            # [2*7*7]
    g = params["gamma"].reshape(1).astype(jnp.float32)
    b = params["beta"].reshape(1).astype(jnp.float32)

    vmem = pl.BlockSpec(memory_space=pltpu.MemorySpace.VMEM)
    smem = pl.BlockSpec(memory_space=pltpu.MemorySpace.SMEM)

    out = pl.pallas_call(
        _make_spatial_gate_kernel(N, C, H, W),
        out_shape=jax.ShapeDtypeStruct((N * C, L), jnp.float32),
        in_specs=[vmem, vmem, smem, smem, smem],
        out_specs=vmem,
    )(x2, mask, w, g, b)

    # Strip the Wp-W junk columns of each Wp-strided output row -> [N,C,H,W].
    out = jnp.pad(out, ((0, 0), (0, H * Wp - L))).reshape(N, C, H, Wp)
    return out[:, :, :, :W]


def _reference(x, params):
    """Pure-JAX reference of SpatialGate (training-mode BN, batch stats)."""
    cmax = jnp.max(x, axis=1, keepdims=True)
    cmean = jnp.mean(x, axis=1, keepdims=True)
    xc = jnp.concatenate([cmax, cmean], axis=1)                # [N,2,H,W]
    conv = jax.lax.conv_general_dilated(
        xc, params["w"], window_strides=(1, 1),
        padding=((PAD, PAD), (PAD, PAD)),
        dimension_numbers=("NCHW", "OIHW", "NCHW"),
        precision=jax.lax.Precision.HIGHEST)
    mu = jnp.mean(conv)
    var = jnp.mean((conv - mu) ** 2)
    y = (conv - mu) * jax.lax.rsqrt(var + EPS) * params["gamma"][0] + params["beta"][0]
    return x * jax.nn.sigmoid(y)


if __name__ == "__main__":
    key = jax.random.PRNGKey(0)
    kx_, kw_ = jax.random.split(key)
    N, C, H, W = 2, 4, 16, 16
    x = jax.random.normal(kx_, (N, C, H, W), jnp.float32)
    params = dict(
        w=jax.random.normal(kw_, (1, 2, K, K), jnp.float32) * 0.1,  # Conv2d(2,1,7) weight
        gamma=jnp.ones((1,), jnp.float32),                          # BatchNorm2d(1) affine
        beta=jnp.zeros((1,), jnp.float32),
    )

    y = spatial_gate(x, params)
    y = jax.block_until_ready(y)
    assert y.shape == (N, C, H, W), y.shape
    assert y.dtype == jnp.float32

    ref = _reference(x, params)
    err = float(jnp.max(jnp.abs(y - ref)))
    assert err < 1e-3, f"max abs err vs reference: {err}"

    print("KERNEL_OK")
</pallas_src>

<mosaic_0001>
module attributes {stable_mosaic.version = 11 : i64} {
  func.func @kernel(%arg0: memref<8x484xf32, #tpu.memory_space<vmem>>, %arg1: memref<1x346xf32, #tpu.memory_space<vmem>>, %arg2: memref<98xf32, #tpu.memory_space<smem>>, %arg3: memref<1xf32, #tpu.memory_space<smem>>, %arg4: memref<1xf32, #tpu.memory_space<smem>>, %arg5: memref<8x346xf32, #tpu.memory_space<vmem>>) attributes {dimension_semantics = [], scalar_prefetch = 0 : i64, scratch_operands = 0 : i64, tpu.core_type = #tpu.core_type<tc>} {
    %c0 = arith.constant 0 : index
    %c0_0 = arith.constant 0 : index
    %0 = vector.load %arg0[%c0, %c0_0] : memref<8x484xf32, #tpu.memory_space<vmem>>, vector<8x484xf32>
    %1 = vector.shape_cast %0 : vector<8x484xf32> to vector<2x4x484xf32>
    %cst = arith.constant dense<0xFF800000> : vector<2x484xf32>
    %2 = vector.multi_reduction <maximumf>, %1, %cst [1] : vector<2x4x484xf32> to vector<2x484xf32>
    %cst_1 = arith.constant dense<0.000000e+00> : vector<2x484xf32>
    %3 = vector.multi_reduction <add>, %1, %cst_1 [1] : vector<2x4x484xf32> to vector<2x484xf32>
    %cst_2 = arith.constant 2.500000e-01 : f32
    %4 = vector.broadcast %cst_2 : f32 to vector<2x484xf32>
    %5 = arith.mulf %3, %4 : vector<2x484xf32>
    %cst_3 = arith.constant 0.000000e+00 : f32
    %6 = vector.broadcast %cst_3 : f32 to vector<2x346xf32>
    %cst_4 = arith.constant 0.000000e+00 : f32
    %7 = vector.broadcast %cst_4 : f32 to vector<2x346xf32>
    %cst_5 = arith.constant 0.000000e+00 : f32
    %8 = vector.broadcast %cst_5 : f32 to vector<2x346xf32>
    %cst_6 = arith.constant 0.000000e+00 : f32
    %9 = vector.broadcast %cst_6 : f32 to vector<2x346xf32>
    %c0_7 = arith.constant 0 : index
    %10 = memref.load %arg2[%c0_7] : memref<98xf32, #tpu.memory_space<smem>>
    %c49 = arith.constant 49 : index
    %11 = memref.load %arg2[%c49] : memref<98xf32, #tpu.memory_space<smem>>
    %12 = vector.extract_strided_slice %2 {offsets = [0, 0], sizes = [2, 346], strides = [1, 1]} : vector<2x484xf32> to vector<2x346xf32>
    %13 = vector.extract_strided_slice %5 {offsets = [0, 0], sizes = [2, 346], strides = [1, 1]} : vector<2x484xf32> to vector<2x346xf32>
    %14 = vector.broadcast %10 : f32 to vector<2x346xf32>
    %15 = arith.mulf %14, %12 : vector<2x346xf32>
    %16 = arith.addf %6, %15 : vector<2x346xf32>
    %17 = vector.broadcast %11 : f32 to vector<2x346xf32>
    %18 = arith.mulf %17, %13 : vector<2x346xf32>
    %19 = arith.addf %8, %18 : vector<2x346xf32>
    %c1 = arith.constant 1 : index
    %20 = memref.load %arg2[%c1] : memref<98xf32, #tpu.memory_space<smem>>
    %c50 = arith.constant 50 : index
    %21 = memref.load %arg2[%c50] : memref<98xf32, #tpu.memory_space<smem>>
    %22 = vector.extract_strided_slice %2 {offsets = [0, 1], sizes = [2, 346], strides = [1, 1]} : vector<2x484xf32> to vector<2x346xf32>
    %23 = vector.extract_strided_slice %5 {offsets = [0, 1], sizes = [2, 346], strides = [1, 1]} : vector<2x484xf32> to vector<2x346xf32>
    %24 = vector.broadcast %20 : f32 to vector<2x346xf32>
    %25 = arith.mulf %24, %22 : vector<2x346xf32>
    %26 = arith.addf %16, %25 : vector<2x346xf32>
    %27 = vector.broadcast %21 : f32 to vector<2x346xf32>
    %28 = arith.mulf %27, %23 : vector<2x346xf32>
    %29 = arith.addf %19, %28 : vector<2x346xf32>
    %c2 = arith.constant 2 : index
    %30 = memref.load %arg2[%c2] : memref<98xf32, #tpu.memory_space<smem>>
    %c51 = arith.constant 51 : index
    %31 = memref.load %arg2[%c51] : memref<98xf32, #tpu.memory_space<smem>>
    %32 = vector.extract_strided_slice %2 {offsets = [0, 2], sizes = [2, 346], strides = [1, 1]} : vector<2x484xf32> to vector<2x346xf32>
    %33 = vector.extract_strided_slice %5 {offsets = [0, 2], sizes = [2, 346], strides = [1, 1]} : vector<2x484xf32> to vector<2x346xf32>
    %34 = vector.broadcast %30 : f32 to vector<2x346xf32>
    %35 = arith.mulf %34, %32 : vector<2x346xf32>
    %36 = arith.addf %26, %35 : vector<2x346xf32>
    %37 = vector.broadcast %31 : f32 to vector<2x346xf32>
    %38 = arith.mulf %37, %33 : vector<2x346xf32>
    %39 = arith.addf %29, %38 : vector<2x346xf32>
    %c3 = arith.constant 3 : index
    %40 = memref.load %arg2[%c3] : memref<98xf32, #tpu.memory_space<smem>>
    %c52 = arith.constant 52 : index
    %41 = memref.load %arg2[%c52] : memref<98xf32, #tpu.memory_space<smem>>
    %42 = vector.extract_strided_slice %2 {offsets = [0, 3], sizes = [2, 346], strides = [1, 1]} : vector<2x484xf32> to vector<2x346xf32>
    %43 = vector.extract_strided_slice %5 {offsets = [0, 3], sizes = [2, 346], strides = [1, 1]} : vector<2x484xf32> to vector<2x346xf32>
    %44 = vector.broadcast %40 : f32 to vector<2x346xf32>
    %45 = arith.mulf %44, %42 : vector<2x346xf32>
    %46 = arith.addf %36, %45 : vector<2x346xf32>
    %47 = vector.broadcast %41 : f32 to vector<2x346xf32>
    %48 = arith.mulf %47, %43 : vector<2x346xf32>
    %49 = arith.addf %39, %48 : vector<2x346xf32>
    %c4 = arith.constant 4 : index
    %50 = memref.load %arg2[%c4] : memref<98xf32, #tpu.memory_space<smem>>
    %c53 = arith.constant 53 : index
    %51 = memref.load %arg2[%c53] : memref<98xf32, #tpu.memory_space<smem>>
    %52 = vector.extract_strided_slice %2 {offsets = [0, 4], sizes = [2, 346], strides = [1, 1]} : vector<2x484xf32> to vector<2x346xf32>
    %53 = vector.extract_strided_slice %5 {offsets = [0, 4], sizes = [2, 346], strides = [1, 1]} : vector<2x484xf32> to vector<2x346xf32>
    %54 = vector.broadcast %50 : f32 to vector<2x346xf32>
    %55 = arith.mulf %54, %52 : vector<2x346xf32>
    %56 = arith.addf %46, %55 : vector<2x346xf32>
    %57 = vector.broadcast %51 : f32 to vector<2x346xf32>
    %58 = arith.mulf %57, %53 : vector<2x346xf32>
    %59 = arith.addf %49, %58 : vector<2x346xf32>
    %c5 = arith.constant 5 : index
    %60 = memref.load %arg2[%c5] : memref<98xf32, #tpu.memory_space<smem>>
    %c54 = arith.constant 54 : index
    %61 = memref.load %arg2[%c54] : memref<98xf32, #tpu.memory_space<smem>>
    %62 = vector.extract_strided_slice %2 {offsets = [0, 5], sizes = [2, 346], strides = [1, 1]} : vector<2x484xf32> to vector<2x346xf32>
    %63 = vector.extract_strided_slice %5 {offsets = [0, 5], sizes = [2, 346], strides = [1, 1]} : vector<2x484xf32> to vector<2x346xf32>
    %64 = vector.broadcast %60 : f32 to vector<2x346xf32>
    %65 = arith.mulf %64, %62 : vector<2x346xf32>
    %66 = arith.addf %56, %65 : vector<2x346xf32>
    %67 = vector.broadcast %61 : f32 to vector<2x346xf32>
    %68 = arith.mulf %67, %63 : vector<2x346xf32>
    %69 = arith.addf %59, %68 : vector<2x346xf32>
    %c6 = arith.constant 6 : index
    %70 = memref.load %arg2[%c6] : memref<98xf32, #tpu.memory_space<smem>>
    %c55 = arith.constant 55 : index
    %71 = memref.load %arg2[%c55] : memref<98xf32, #tpu.memory_space<smem>>
    %72 = vector.extract_strided_slice %2 {offsets = [0, 6], sizes = [2, 346], strides = [1, 1]} : vector<2x484xf32> to vector<2x346xf32>
    %73 = vector.extract_strided_slice %5 {offsets = [0, 6], sizes = [2, 346], strides = [1, 1]} : vector<2x484xf32> to vector<2x346xf32>
    %74 = vector.broadcast %70 : f32 to vector<2x346xf32>
    %75 = arith.mulf %74, %72 : vector<2x346xf32>
    %76 = arith.addf %66, %75 : vector<2x346xf32>
    %77 = vector.broadcast %71 : f32 to vector<2x346xf32>
    %78 = arith.mulf %77, %73 : vector<2x346xf32>
    %79 = arith.addf %69, %78 : vector<2x346xf32>
    %c7 = arith.constant 7 : index
    %80 = memref.load %arg2[%c7] : memref<98xf32, #tpu.memory_space<smem>>
    %c56 = arith.constant 56 : index
    %81 = memref.load %arg2[%c56] : memref<98xf32, #tpu.memory_space<smem>>
    %82 = vector.extract_strided_slice %2 {offsets = [0, 22], sizes = [2, 346], strides = [1, 1]} : vector<2x484xf32> to vector<2x346xf32>
    %83 = vector.extract_strided_slice %5 {offsets = [0, 22], sizes = [2, 346], strides = [1, 1]} : vector<2x484xf32> to vector<2x346xf32>
    %84 = vector.broadcast %80 : f32 to vector<2x346xf32>
    %85 = arith.mulf %84, %82 : vector<2x346xf32>
    %86 = arith.addf %7, %85 : vector<2x346xf32>
    %87 = vector.broadcast %81 : f32 to vector<2x346xf32>
    %88 = arith.mulf %87, %83 : vector<2x346xf32>
    %89 = arith.addf %9, %88 : vector<2x346xf32>
    %c8 = arith.constant 8 : index
    %90 = memref.load %arg2[%c8] : memref<98xf32, #tpu.memory_space<smem>>
    %c57 = arith.constant 57 : index
    %91 = memref.load %arg2[%c57] : memref<98xf32, #tpu.memory_space<smem>>
    %92 = vector.extract_strided_slice %2 {offsets = [0, 23], sizes = [2, 346], strides = [1, 1]} : vector<2x484xf32> to vector<2x346xf32>
    %93 = vector.extract_strided_slice %5 {offsets = [0, 23], sizes = [2, 346], strides = [1, 1]} : vector<2x484xf32> to vector<2x346xf32>
    %94 = vector.broadcast %90 : f32 to vector<2x346xf32>
    %95 = arith.mulf %94, %92 : vector<2x346xf32>
    %96 = arith.addf %86, %95 : vector<2x346xf32>
    %97 = vector.broadcast %91 : f32 to vector<2x346xf32>
    %98 = arith.mulf %97, %93 : vector<2x346xf32>
    %99 = arith.addf %89, %98 : vector<2x346xf32>
    %c9 = arith.constant 9 : index
    %100 = memref.load %arg2[%c9] : memref<98xf32, #tpu.memory_space<smem>>
    %c58 = arith.constant 58 : index
    %101 = memref.load %arg2[%c58] : memref<98xf32, #tpu.memory_space<smem>>
    %102 = vector.extract_strided_slice %2 {offsets = [0, 24], sizes = [2, 346], strides = [1, 1]} : vector<2x484xf32> to vector<2x346xf32>
    %103 = vector.extract_strided_slice %5 {offsets = [0, 24], sizes = [2, 346], strides = [1, 1]} : vector<2x484xf32> to vector<2x346xf32>
    %104 = vector.broadcast %100 : f32 to vector<2x346xf32>
    %105 = arith.mulf %104, %102 : vector<2x346xf32>
    %106 = arith.addf %96, %105 : vector<2x346xf32>
    %107 = vector.broadcast %101 : f32 to vector<2x346xf32>
    %108 = arith.mulf %107, %103 : vector<2x346xf32>
    %109 = arith.addf %99, %108 : vector<2x346xf32>
    %c10 = arith.constant 10 : index
    %110 = memref.load %arg2[%c10] : memref<98xf32, #tpu.memory_space<smem>>
    %c59 = arith.constant 59 : index
    %111 = memref.load %arg2[%c59] : memref<98xf32, #tpu.memory_space<smem>>
    %112 = vector.extract_strided_slice %2 {offsets = [0, 25], sizes = [2, 346], strides = [1, 1]} : vector<2x484xf32> to vector<2x346xf32>
    %113 = vector.extract_strided_slice %5 {offsets = [0, 25], sizes = [2, 346], strides = [1, 1]} : vector<2x484xf32> to vector<2x346xf32>
    %114 = vector.broadcast %110 : f32 to vector<2x346xf32>
    %115 = arith.mulf %114, %112 : vector<2x346xf32>
    %116 = arith.addf %106, %115 : vector<2x346xf32>
    %117 = vector.broadcast %111 : f32 to vector<2x346xf32>
    %118 = arith.mulf %117, %113 : vector<2x346xf32>
    %119 = arith.addf %109, %118 : vector<2x346xf32>
    %c11 = arith.constant 11 : index
    %120 = memref.load %arg2[%c11] : memref<98xf32, #tpu.memory_space<smem>>
    %c60 = arith.constant 60 : index
    %121 = memref.load %arg2[%c60] : memref<98xf32, #tpu.memory_space<smem>>
    %122 = vector.extract_strided_slice %2 {offsets = [0, 26], sizes = [2, 346], strides = [1, 1]} : vector<2x484xf32> to vector<2x346xf32>
    %123 = vector.extract_strided_slice %5 {offsets = [0, 26], sizes = [2, 346], strides = [1, 1]} : vector<2x484xf32> to vector<2x346xf32>
    %124 = vector.broadcast %120 : f32 to vector<2x346xf32>
    %125 = arith.mulf %124, %122 : vector<2x346xf32>
    %126 = arith.addf %116, %125 : vector<2x346xf32>
    %127 = vector.broadcast %121 : f32 to vector<2x346xf32>
    %128 = arith.mulf %127, %123 : vector<2x346xf32>
    %129 = arith.addf %119, %128 : vector<2x346xf32>
    %c12 = arith.constant 12 : index
    %130 = memref.load %arg2[%c12] : memref<98xf32, #tpu.memory_space<smem>>
    %c61 = arith.constant 61 : index
    %131 = memref.load %arg2[%c61] : memref<98xf32, #tpu.memory_space<smem>>
    %132 = vector.extract_strided_slice %2 {offsets = [0, 27], sizes = [2, 346], strides = [1, 1]} : vector<2x484xf32> to vector<2x346xf32>
    %133 = vector.extract_strided_slice %5 {offsets = [0, 27], sizes = [2, 346], strides = [1, 1]} : vector<2x484xf32> to vector<2x346xf32>
    %134 = vector.broadcast %130 : f32 to vector<2x346xf32>
    %135 = arith.mulf %134, %132 : vector<2x346xf32>
    %136 = arith.addf %126, %135 : vector<2x346xf32>
    %137 = vector.broadcast %131 : f32 to vector<2x346xf32>
    %138 = arith.mulf %137, %133 : vector<2x346xf32>
    %139 = arith.addf %129, %138 : vector<2x346xf32>
    %c13 = arith.constant 13 : index
    %140 = memref.load %arg2[%c13] : memref<98xf32, #tpu.memory_space<smem>>
    %c62 = arith.constant 62 : index
    %141 = memref.load %arg2[%c62] : memref<98xf32, #tpu.memory_space<smem>>
    %142 = vector.extract_strided_slice %2 {offsets = [0, 28], sizes = [2, 346], strides = [1, 1]} : vector<2x484xf32> to vector<2x346xf32>
    %143 = vector.extract_strided_slice %5 {offsets = [0, 28], sizes = [2, 346], strides = [1, 1]} : vector<2x484xf32> to vector<2x346xf32>
    %144 = vector.broadcast %140 : f32 to vector<2x346xf32>
    %145 = arith.mulf %144, %142 : vector<2x346xf32>
    %146 = arith.addf %136, %145 : vector<2x346xf32>
    %147 = vector.broadcast %141 : f32 to vector<2x346xf32>
    %148 = arith.mulf %147, %143 : vector<2x346xf32>
    %149 = arith.addf %139, %148 : vector<2x346xf32>
    %c14 = arith.constant 14 : index
    %150 = memref.load %arg2[%c14] : memref<98xf32, #tpu.memory_space<smem>>
    %c63 = arith.constant 63 : index
    %151 = memref.load %arg2[%c63] : memref<98xf32, #tpu.memory_space<smem>>
    %152 = vector.extract_strided_slice %2 {offsets = [0, 44], sizes = [2, 346], strides = [1, 1]} : vector<2x484xf32> to vector<2x346xf32>
    %153 = vector.extract_strided_slice %5 {offsets = [0, 44], sizes = [2, 346], strides = [1, 1]} : vector<2x484xf32> to vector<2x346xf32>
    %154 = vector.broadcast %150 : f32 to vector<2x346xf32>
    %155 = arith.mulf %154, %152 : vector<2x346xf32>
    %156 = arith.addf %76, %155 : vector<2x346xf32>
    %157 = vector.broadcast %151 : f32 to vector<2x346xf32>
    %158 = arith.mulf %157, %153 : vector<2x346xf32>
    %159 = arith.addf %79, %158 : vector<2x346xf32>
    %c15 = arith.constant 15 : index
    %160 = memref.load %arg2[%c15] : memref<98xf32, #tpu.memory_space<smem>>
    %c64 = arith.constant 64 : index
    %161 = memref.load %arg2[%c64] : memref<98xf32, #tpu.memory_space<smem>>
    %162 = vector.extract_strided_slice %2 {offsets = [0, 45], sizes = [2, 346], strides = [1, 1]} : vector<2x484xf32> to vector<2x346xf32>
    %163 = vector.extract_strided_slice %5 {offsets = [0, 45], sizes = [2, 346], strides = [1, 1]} : vector<2x484xf32> to vector<2x346xf32>
    %164 = vector.broadcast %160 : f32 to vector<2x346xf32>
    %165 = arith.mulf %164, %162 : vector<2x346xf32>
    %166 = arith.addf %156, %165 : vector<2x346xf32>
    %167 = vector.broadcast %161 : f32 to vector<2x346xf32>
    %168 = arith.mulf %167, %163 : vector<2x346xf32>
    %169 = arith.addf %159, %168 : vector<2x346xf32>
    %c16 = arith.constant 16 : index
    %170 = memref.load %arg2[%c16] : memref<98xf32, #tpu.memory_space<smem>>
    %c65 = arith.constant 65 : index
    %171 = memref.load %arg2[%c65] : memref<98xf32, #tpu.memory_space<smem>>
    %172 = vector.extract_strided_slice %2 {offsets = [0, 46], sizes = [2, 346], strides = [1, 1]} : vector<2x484xf32> to vector<2x346xf32>
    %173 = vector.extract_strided_slice %5 {offsets = [0, 46], sizes = [2, 346], strides = [1, 1]} : vector<2x484xf32> to vector<2x346xf32>
    %174 = vector.broadcast %170 : f32 to vector<2x346xf32>
    %175 = arith.mulf %174, %172 : vector<2x346xf32>
    %176 = arith.addf %166, %175 : vector<2x346xf32>
    %177 = vector.broadcast %171 : f32 to vector<2x346xf32>
    %178 = arith.mulf %177, %173 : vector<2x346xf32>
    %179 = arith.addf %169, %178 : vector<2x346xf32>
    %c17 = arith.constant 17 : index
    %180 = memref.load %arg2[%c17] : memref<98xf32, #tpu.memory_space<smem>>
    %c66 = arith.constant 66 : index
    %181 = memref.load %arg2[%c66] : memref<98xf32, #tpu.memory_space<smem>>
    %182 = vector.extract_strided_slice %2 {offsets = [0, 47], sizes = [2, 346], strides = [1, 1]} : vector<2x484xf32> to vector<2x346xf32>
    %183 = vector.extract_strided_slice %5 {offsets = [0, 47], sizes = [2, 346], strides = [1, 1]} : vector<2x484xf32> to vector<2x346xf32>
    %184 = vector.broadcast %180 : f32 to vector<2x346xf32>
    %185 = arith.mulf %184, %182 : vector<2x346xf32>
    %186 = arith.addf %176, %185 : vector<2x346xf32>
    %187 = vector.broadcast %181 : f32 to vector<2x346xf32>
    %188 = arith.mulf %187, %183 : vector<2x346xf32>
    %189 = arith.addf %179, %188 : vector<2x346xf32>
    %c18 = arith.constant 18 : index
    %190 = memref.load %arg2[%c18] : memref<98xf32, #tpu.memory_space<smem>>
    %c67 = arith.constant 67 : index
    %191 = memref.load %arg2[%c67] : memref<98xf32, #tpu.memory_space<smem>>
    %192 = vector.extract_strided_slice %2 {offsets = [0, 48], sizes = [2, 346], strides = [1, 1]} : vector<2x484xf32> to vector<2x346xf32>
    %193 = vector.extract_strided_slice %5 {offsets = [0, 48], sizes = [2, 346], strides = [1, 1]} : vector<2x484xf32> to vector<2x346xf32>
    %194 = vector.broadcast %190 : f32 to vector<2x346xf32>
    %195 = arith.mulf %194, %192 : vector<2x346xf32>
    %196 = arith.addf %186, %195 : vector<2x346xf32>
    %197 = vector.broadcast %191 : f32 to vector<2x346xf32>
    %198 = arith.mulf %197, %193 : vector<2x346xf32>
    %199 = arith.addf %189, %198 : vector<2x346xf32>
    %c19 = arith.constant 19 : index
    %200 = memref.load %arg2[%c19] : memref<98xf32, #tpu.memory_space<smem>>
    %c68 = arith.constant 68 : index
    %201 = memref.load %arg2[%c68] : memref<98xf32, #tpu.memory_space<smem>>
    %202 = vector.extract_strided_slice %2 {offsets = [0, 49], sizes = [2, 346], strides = [1, 1]} : vector<2x484xf32> to vector<2x346xf32>
    %203 = vector.extract_strided_slice %5 {offsets = [0, 49], sizes = [2, 346], strides = [1, 1]} : vector<2x484xf32> to vector<2x346xf32>
    %204 = vector.broadcast %200 : f32 to vector<2x346xf32>
    %205 = arith.mulf %204, %202 : vector<2x346xf32>
    %206 = arith.addf %196, %205 : vector<2x346xf32>
    %207 = vector.broadcast %201 : f32 to vector<2x346xf32>
    %208 = arith.mulf %207, %203 : vector<2x346xf32>
    %209 = arith.addf %199, %208 : vector<2x346xf32>
    %c20 = arith.constant 20 : index
    %210 = memref.load %arg2[%c20] : memref<98xf32, #tpu.memory_space<smem>>
    %c69 = arith.constant 69 : index
    %211 = memref.load %arg2[%c69] : memref<98xf32, #tpu.memory_space<smem>>
    %212 = vector.extract_strided_slice %2 {offsets = [0, 50], sizes = [2, 346], strides = [1, 1]} : vector<2x484xf32> to vector<2x346xf32>
    %213 = vector.extract_strided_slice %5 {offsets = [0, 50], sizes = [2, 346], strides = [1, 1]} : vector<2x484xf32> to vector<2x346xf32>
    %214 = vector.broadcast %210 : f32 to vector<2x346xf32>
    %215 = arith.mulf %214, %212 : vector<2x346xf32>
    %216 = arith.addf %206, %215 : vector<2x346xf32>
    %217 = vector.broadcast %211 : f32 to vector<2x346xf32>
    %218 = arith.mulf %217, %213 : vector<2x346xf32>
    %219 = arith.addf %209, %218 : vector<2x346xf32>
    %c21 = arith.constant 21 : index
    %220 = memref.load %arg2[%c21] : memref<98xf32, #tpu.memory_space<smem>>
    %c70 = arith.constant 70 : index
    %221 = memref.load %arg2[%c70] : memref<98xf32, #tpu.memory_space<smem>>
    %222 = vector.extract_strided_slice %2 {offsets = [0, 66], sizes = [2, 346], strides = [1, 1]} : vector<2x484xf32> to vector<2x346xf32>
    %223 = vector.extract_strided_slice %5 {offsets = [0, 66], sizes = [2, 346], strides = [1, 1]} : vector<2x484xf32> to vector<2x346xf32>
    %224 = vector.broadcast %220 : f32 to vector<2x346xf32>
    %225 = arith.mulf %224, %222 : vector<2x346xf32>
    %226 = arith.addf %146, %225 : vector<2x346xf32>
    %227 = vector.broadcast %221 : f32 to vector<2x346xf32>
    %228 = arith.mulf %227, %223 : vector<2x346xf32>
    %229 = arith.addf %149, %228 : vector<2x346xf32>
    %c22 = arith.constant 22 : index
    %230 = memref.load %arg2[%c22] : memref<98xf32, #tpu.memory_space<smem>>
    %c71 = arith.constant 71 : index
    %231 = memref.load %arg2[%c71] : memref<98xf32, #tpu.memory_space<smem>>
    %232 = vector.extract_strided_slice %2 {offsets = [0, 67], sizes = [2, 346], strides = [1, 1]} : vector<2x484xf32> to vector<2x346xf32>
    %233 = vector.extract_strided_slice %5 {offsets = [0, 67], sizes = [2, 346], strides = [1, 1]} : vector<2x484xf32> to vector<2x346xf32>
    %234 = vector.broadcast %230 : f32 to vector<2x346xf32>
    %235 = arith.mulf %234, %232 : vector<2x346xf32>
    %236 = arith.addf %226, %235 : vector<2x346xf32>
    %237 = vector.broadcast %231 : f32 to vector<2x346xf32>
    %238 = arith.mulf %237, %233 : vector<2x346xf32>
    %239 = arith.addf %229, %238 : vector<2x346xf32>
    %c23 = arith.constant 23 : index
    %240 = memref.load %arg2[%c23] : memref<98xf32, #tpu.memory_space<smem>>
    %c72 = arith.constant 72 : index
    %241 = memref.load %arg2[%c72] : memref<98xf32, #tpu.memory_space<smem>>
    %242 = vector.extract_strided_slice %2 {offsets = [0, 68], sizes = [2, 346], strides = [1, 1]} : vector<2x484xf32> to vector<2x346xf32>
    %243 = vector.extract_strided_slice %5 {offsets = [0, 68], sizes = [2, 346], strides = [1, 1]} : vector<2x484xf32> to vector<2x346xf32>
    %244 = vector.broadcast %240 : f32 to vector<2x346xf32>
    %245 = arith.mulf %244, %242 : vector<2x346xf32>
    %246 = arith.addf %236, %245 : vector<2x346xf32>
    %247 = vector.broadcast %241 : f32 to vector<2x346xf32>
    %248 = arith.mulf %247, %243 : vector<2x346xf32>
    %249 = arith.addf %239, %248 : vector<2x346xf32>
    %c24 = arith.constant 24 : index
    %250 = memref.load %arg2[%c24] : memref<98xf32, #tpu.memory_space<smem>>
    %c73 = arith.constant 73 : index
    %251 = memref.load %arg2[%c73] : memref<98xf32, #tpu.memory_space<smem>>
    %252 = vector.extract_strided_slice %2 {offsets = [0, 69], sizes = [2, 346], strides = [1, 1]} : vector<2x484xf32> to vector<2x346xf32>
    %253 = vector.extract_strided_slice %5 {offsets = [0, 69], sizes = [2, 346], strides = [1, 1]} : vector<2x484xf32> to vector<2x346xf32>
    %254 = vector.broadcast %250 : f32 to vector<2x346xf32>
    %255 = arith.mulf %254, %252 : vector<2x346xf32>
    %256 = arith.addf %246, %255 : vector<2x346xf32>
    %257 = vector.broadcast %251 : f32 to vector<2x346xf32>
    %258 = arith.mulf %257, %253 : vector<2x346xf32>
    %259 = arith.addf %249, %258 : vector<2x346xf32>
    %c25 = arith.constant 25 : index
    %260 = memref.load %arg2[%c25] : memref<98xf32, #tpu.memory_space<smem>>
    %c74 = arith.constant 74 : index
    %261 = memref.load %arg2[%c74] : memref<98xf32, #tpu.memory_space<smem>>
    %262 = vector.extract_strided_slice %2 {offsets = [0, 70], sizes = [2, 346], strides = [1, 1]} : vector<2x484xf32> to vector<2x346xf32>
    %263 = vector.extract_strided_slice %5 {offsets = [0, 70], sizes = [2, 346], strides = [1, 1]} : vector<2x484xf32> to vector<2x346xf32>
    %264 = vector.broadcast %260 : f32 to vector<2x346xf32>
    %265 = arith.mulf %264, %262 : vector<2x346xf32>
    %266 = arith.addf %256, %265 : vector<2x346xf32>
    %267 = vector.broadcast %261 : f32 to vector<2x346xf32>
    %268 = arith.mulf %267, %263 : vector<2x346xf32>
    %269 = arith.addf %259, %268 : vector<2x346xf32>
    %c26 = arith.constant 26 : index
    %270 = memref.load %arg2[%c26] : memref<98xf32, #tpu.memory_space<smem>>
    %c75 = arith.constant 75 : index
    %271 = memref.load %arg2[%c75] : memref<98xf32, #tpu.memory_space<smem>>
    %272 = vector.extract_strided_slice %2 {offsets = [0, 71], sizes = [2, 346], strides = [1, 1]} : vector<2x484xf32> to vector<2x346xf32>
    %273 = vector.extract_strided_slice %5 {offsets = [0, 71], sizes = [2, 346], strides = [1, 1]} : vector<2x484xf32> to vector<2x346xf32>
    %274 = vector.broadcast %270 : f32 to vector<2x346xf32>
    %275 = arith.mulf %274, %272 : vector<2x346xf32>
    %276 = arith.addf %266, %275 : vector<2x346xf32>
    %277 = vector.broadcast %271 : f32 to vector<2x346xf32>
    %278 = arith.mulf %277, %273 : vector<2x346xf32>
    %279 = arith.addf %269, %278 : vector<2x346xf32>
    %c27 = arith.constant 27 : index
    %280 = memref.load %arg2[%c27] : memref<98xf32, #tpu.memory_space<smem>>
    %c76 = arith.constant 76 : index
    %281 = memref.load %arg2[%c76] : memref<98xf32, #tpu.memory_space<smem>>
    %282 = vector.extract_strided_slice %2 {offsets = [0, 72], sizes = [2, 346], strides = [1, 1]} : vector<2x484xf32> to vector<2x346xf32>
    %283 = vector.extract_strided_slice %5 {offsets = [0, 72], sizes = [2, 346], strides = [1, 1]} : vector<2x484xf32> to vector<2x346xf32>
    %284 = vector.broadcast %280 : f32 to vector<2x346xf32>
    %285 = arith.mulf %284, %282 : vector<2x346xf32>
    %286 = arith.addf %276, %285 : vector<2x346xf32>
    %287 = vector.broadcast %281 : f32 to vector<2x346xf32>
    %288 = arith.mulf %287, %283 : vector<2x346xf32>
    %289 = arith.addf %279, %288 : vector<2x346xf32>
    %c28 = arith.constant 28 : index
    %290 = memref.load %arg2[%c28] : memref<98xf32, #tpu.memory_space<smem>>
    %c77 = arith.constant 77 : index
    %291 = memref.load %arg2[%c77] : memref<98xf32, #tpu.memory_space<smem>>
    %292 = vector.extract_strided_slice %2 {offsets = [0, 88], sizes = [2, 346], strides = [1, 1]} : vector<2x484xf32> to vector<2x346xf32>
    %293 = vector.extract_strided_slice %5 {offsets = [0, 88], sizes = [2, 346], strides = [1, 1]} : vector<2x484xf32> to vector<2x346xf32>
    %294 = vector.broadcast %290 : f32 to vector<2x346xf32>
    %295 = arith.mulf %294, %292 : vector<2x346xf32>
    %296 = arith.addf %216, %295 : vector<2x346xf32>
    %297 = vector.broadcast %291 : f32 to vector<2x346xf32>
    %298 = arith.mulf %297, %293 : vector<2x346xf32>
    %299 = arith.addf %219, %298 : vector<2x346xf32>
    %c29 = arith.constant 29 : index
    %300 = memref.load %arg2[%c29] : memref<98xf32, #tpu.memory_space<smem>>
    %c78 = arith.constant 78 : index
    %301 = memref.load %arg2[%c78] : memref<98xf32, #tpu.memory_space<smem>>
    %302 = vector.extract_strided_slice %2 {offsets = [0, 89], sizes = [2, 346], strides = [1, 1]} : vector<2x484xf32> to vector<2x346xf32>
    %303 = vector.extract_strided_slice %5 {offsets = [0, 89], sizes = [2, 346], strides = [1, 1]} : vector<2x484xf32> to vector<2x346xf32>
    %304 = vector.broadcast %300 : f32 to vector<2x346xf32>
    %305 = arith.mulf %304, %302 : vector<2x346xf32>
    %306 = arith.addf %296, %305 : vector<2x346xf32>
    %307 = vector.broadcast %301 : f32 to vector<2x346xf32>
    %308 = arith.mulf %307, %303 : vector<2x346xf32>
    %309 = arith.addf %299, %308 : vector<2x346xf32>
    %c30 = arith.constant 30 : index
    %310 = memref.load %arg2[%c30] : memref<98xf32, #tpu.memory_space<smem>>
    %c79 = arith.constant 79 : index
    %311 = memref.load %arg2[%c79] : memref<98xf32, #tpu.memory_space<smem>>
    %312 = vector.extract_strided_slice %2 {offsets = [0, 90], sizes = [2, 346], strides = [1, 1]} : vector<2x484xf32> to vector<2x346xf32>
    %313 = vector.extract_strided_slice %5 {offsets = [0, 90], sizes = [2, 346], strides = [1, 1]} : vector<2x484xf32> to vector<2x346xf32>
    %314 = vector.broadcast %310 : f32 to vector<2x346xf32>
    %315 = arith.mulf %314, %312 : vector<2x346xf32>
    %316 = arith.addf %306, %315 : vector<2x346xf32>
    %317 = vector.broadcast %311 : f32 to vector<2x346xf32>
    %318 = arith.mulf %317, %313 : vector<2x346xf32>
    %319 = arith.addf %309, %318 : vector<2x346xf32>
    %c31 = arith.constant 31 : index
    %320 = memref.load %arg2[%c31] : memref<98xf32, #tpu.memory_space<smem>>
    %c80 = arith.constant 80 : index
    %321 = memref.load %arg2[%c80] : memref<98xf32, #tpu.memory_space<smem>>
    %322 = vector.extract_strided_slice %2 {offsets = [0, 91], sizes = [2, 346], strides = [1, 1]} : vector<2x484xf32> to vector<2x346xf32>
    %323 = vector.extract_strided_slice %5 {offsets = [0, 91], sizes = [2, 346], strides = [1, 1]} : vector<2x484xf32> to vector<2x346xf32>
    %324 = vector.broadcast %320 : f32 to vector<2x346xf32>
    %325 = arith.mulf %324, %322 : vector<2x346xf32>
    %326 = arith.addf %316, %325 : vector<2x346xf32>
    %327 = vector.broadcast %321 : f32 to vector<2x346xf32>
    %328 = arith.mulf %327, %323 : vector<2x346xf32>
    %329 = arith.addf %319, %328 : vector<2x346xf32>
    %c32 = arith.constant 32 : index
    %330 = memref.load %arg2[%c32] : memref<98xf32, #tpu.memory_space<smem>>
    %c81 = arith.constant 81 : index
    %331 = memref.load %arg2[%c81] : memref<98xf32, #tpu.memory_space<smem>>
    %332 = vector.extract_strided_slice %2 {offsets = [0, 92], sizes = [2, 346], strides = [1, 1]} : vector<2x484xf32> to vector<2x346xf32>
    %333 = vector.extract_strided_slice %5 {offsets = [0, 92], sizes = [2, 346], strides = [1, 1]} : vector<2x484xf32> to vector<2x346xf32>
    %334 = vector.broadcast %330 : f32 to vector<2x346xf32>
    %335 = arith.mulf %334, %332 : vector<2x346xf32>
    %336 = arith.addf %326, %335 : vector<2x346xf32>
    %337 = vector.broadcast %331 : f32 to vector<2x346xf32>
    %338 = arith.mulf %337, %333 : vector<2x346xf32>
    %339 = arith.addf %329, %338 : vector<2x346xf32>
    %c33 = arith.constant 33 : index
    %340 = memref.load %arg2[%c33] : memref<98xf32, #tpu.memory_space<smem>>
    %c82 = arith.constant 82 : index
    %341 = memref.load %arg2[%c82] : memref<98xf32, #tpu.memory_space<smem>>
    %342 = vector.extract_strided_slice %2 {offsets = [0, 93], sizes = [2, 346], strides = [1, 1]} : vector<2x484xf32> to vector<2x346xf32>
    %343 = vector.extract_strided_slice %5 {offsets = [0, 93], sizes = [2, 346], strides = [1, 1]} : vector<2x484xf32> to vector<2x346xf32>
    %344 = vector.broadcast %340 : f32 to vector<2x346xf32>
    %345 = arith.mulf %344, %342 : vector<2x346xf32>
    %346 = arith.addf %336, %345 : vector<2x346xf32>
    %347 = vector.broadcast %341 : f32 to vector<2x346xf32>
    %348 = arith.mulf %347, %343 : vector<2x346xf32>
    %349 = arith.addf %339, %348 : vector<2x346xf32>
    %c34 = arith.constant 34 : index
    %350 = memref.load %arg2[%c34] : memref<98xf32, #tpu.memory_space<smem>>
    %c83 = arith.constant 83 : index
    %351 = memref.load %arg2[%c83] : memref<98xf32, #tpu.memory_space<smem>>
    %352 = vector.extract_strided_slice %2 {offsets = [0, 94], sizes = [2, 346], strides = [1, 1]} : vector<2x484xf32> to vector<2x346xf32>
    %353 = vector.extract_strided_slice %5 {offsets = [0, 94], sizes = [2, 346], strides = [1, 1]} : vector<2x484xf32> to vector<2x346xf32>
    %354 = vector.broadcast %350 : f32 to vector<2x346xf32>
    %355 = arith.mulf %354, %352 : vector<2x346xf32>
    %356 = arith.addf %346, %355 : vector<2x346xf32>
    %357 = vector.broadcast %351 : f32 to vector<2x346xf32>
    %358 = arith.mulf %357, %353 : vector<2x346xf32>
    %359 = arith.addf %349, %358 : vector<2x346xf32>
    %c35 = arith.constant 35 : index
    %360 = memref.load %arg2[%c35] : memref<98xf32, #tpu.memory_space<smem>>
    %c84 = arith.constant 84 : index
    %361 = memref.load %arg2[%c84] : memref<98xf32, #tpu.memory_space<smem>>
    %362 = vector.extract_strided_slice %2 {offsets = [0, 110], sizes = [2, 346], strides = [1, 1]} : vector<2x484xf32> to vector<2x346xf32>
    %363 = vector.extract_strided_slice %5 {offsets = [0, 110], sizes = [2, 346], strides = [1, 1]} : vector<2x484xf32> to vector<2x346xf32>
    %364 = vector.broadcast %360 : f32 to vector<2x346xf32>
    %365 = arith.mulf %364, %362 : vector<2x346xf32>
    %366 = arith.addf %286, %365 : vector<2x346xf32>
    %367 = vector.broadcast %361 : f32 to vector<2x346xf32>
    %368 = arith.mulf %367, %363 : vector<2x346xf32>
    %369 = arith.addf %289, %368 : vector<2x346xf32>
    %c36 = arith.constant 36 : index
    %370 = memref.load %arg2[%c36] : memref<98xf32, #tpu.memory_space<smem>>
    %c85 = arith.constant 85 : index
    %371 = memref.load %arg2[%c85] : memref<98xf32, #tpu.memory_space<smem>>
    %372 = vector.extract_strided_slice %2 {offsets = [0, 111], sizes = [2, 346], strides = [1, 1]} : vector<2x484xf32> to vector<2x346xf32>
    %373 = vector.extract_strided_slice %5 {offsets = [0, 111], sizes = [2, 346], strides = [1, 1]} : vector<2x484xf32> to vector<2x346xf32>
    %374 = vector.broadcast %370 : f32 to vector<2x346xf32>
    %375 = arith.mulf %374, %372 : vector<2x346xf32>
    %376 = arith.addf %366, %375 : vector<2x346xf32>
    %377 = vector.broadcast %371 : f32 to vector<2x346xf32>
    %378 = arith.mulf %377, %373 : vector<2x346xf32>
    %379 = arith.addf %369, %378 : vector<2x346xf32>
    %c37 = arith.constant 37 : index
    %380 = memref.load %arg2[%c37] : memref<98xf32, #tpu.memory_space<smem>>
    %c86 = arith.constant 86 : index
    %381 = memref.load %arg2[%c86] : memref<98xf32, #tpu.memory_space<smem>>
    %382 = vector.extract_strided_slice %2 {offsets = [0, 112], sizes = [2, 346], strides = [1, 1]} : vector<2x484xf32> to vector<2x346xf32>
    %383 = vector.extract_strided_slice %5 {offsets = [0, 112], sizes = [2, 346], strides = [1, 1]} : vector<2x484xf32> to vector<2x346xf32>
    %384 = vector.broadcast %380 : f32 to vector<2x346xf32>
    %385 = arith.mulf %384, %382 : vector<2x346xf32>
    %386 = arith.addf %376, %385 : vector<2x346xf32>
    %387 = vector.broadcast %381 : f32 to vector<2x346xf32>
    %388 = arith.mulf %387, %383 : vector<2x346xf32>
    %389 = arith.addf %379, %388 : vector<2x346xf32>
    %c38 = arith.constant 38 : index
    %390 = memref.load %arg2[%c38] : memref<98xf32, #tpu.memory_space<smem>>
    %c87 = arith.constant 87 : index
    %391 = memref.load %arg2[%c87] : memref<98xf32, #tpu.memory_space<smem>>
    %392 = vector.extract_strided_slice %2 {offsets = [0, 113], sizes = [2, 346], strides = [1, 1]} : vector<2x484xf32> to vector<2x346xf32>
    %393 = vector.extract_strided_slice %5 {offsets = [0, 113], sizes = [2, 346], strides = [1, 1]} : vector<2x484xf32> to vector<2x346xf32>
    %394 = vector.broadcast %390 : f32 to vector<2x346xf32>
    %395 = arith.mulf %394, %392 : vector<2x346xf32>
    %396 = arith.addf %386, %395 : vector<2x346xf32>
    %397 = vector.broadcast %391 : f32 to vector<2x346xf32>
    %398 = arith.mulf %397, %393 : vector<2x346xf32>
    %399 = arith.addf %389, %398 : vector<2x346xf32>
    %c39 = arith.constant 39 : index
    %400 = memref.load %arg2[%c39] : memref<98xf32, #tpu.memory_space<smem>>
    %c88 = arith.constant 88 : index
    %401 = memref.load %arg2[%c88] : memref<98xf32, #tpu.memory_space<smem>>
    %402 = vector.extract_strided_slice %2 {offsets = [0, 114], sizes = [2, 346], strides = [1, 1]} : vector<2x484xf32> to vector<2x346xf32>
    %403 = vector.extract_strided_slice %5 {offsets = [0, 114], sizes = [2, 346], strides = [1, 1]} : vector<2x484xf32> to vector<2x346xf32>
    %404 = vector.broadcast %400 : f32 to vector<2x346xf32>
    %405 = arith.mulf %404, %402 : vector<2x346xf32>
    %406 = arith.addf %396, %405 : vector<2x346xf32>
    %407 = vector.broadcast %401 : f32 to vector<2x346xf32>
    %408 = arith.mulf %407, %403 : vector<2x346xf32>
    %409 = arith.addf %399, %408 : vector<2x346xf32>
    %c40 = arith.constant 40 : index
    %410 = memref.load %arg2[%c40] : memref<98xf32, #tpu.memory_space<smem>>
    %c89 = arith.constant 89 : index
    %411 = memref.load %arg2[%c89] : memref<98xf32, #tpu.memory_space<smem>>
    %412 = vector.extract_strided_slice %2 {offsets = [0, 115], sizes = [2, 346], strides = [1, 1]} : vector<2x484xf32> to vector<2x346xf32>
    %413 = vector.extract_strided_slice %5 {offsets = [0, 115], sizes = [2, 346], strides = [1, 1]} : vector<2x484xf32> to vector<2x346xf32>
    %414 = vector.broadcast %410 : f32 to vector<2x346xf32>
    %415 = arith.mulf %414, %412 : vector<2x346xf32>
    %416 = arith.addf %406, %415 : vector<2x346xf32>
    %417 = vector.broadcast %411 : f32 to vector<2x346xf32>
    %418 = arith.mulf %417, %413 : vector<2x346xf32>
    %419 = arith.addf %409, %418 : vector<2x346xf32>
    %c41 = arith.constant 41 : index
    %420 = memref.load %arg2[%c41] : memref<98xf32, #tpu.memory_space<smem>>
    %c90 = arith.constant 90 : index
    %421 = memref.load %arg2[%c90] : memref<98xf32, #tpu.memory_space<smem>>
    %422 = vector.extract_strided_slice %2 {offsets = [0, 116], sizes = [2, 346], strides = [1, 1]} : vector<2x484xf32> to vector<2x346xf32>
    %423 = vector.extract_strided_slice %5 {offsets = [0, 116], sizes = [2, 346], strides = [1, 1]} : vector<2x484xf32> to vector<2x346xf32>
    %424 = vector.broadcast %420 : f32 to vector<2x346xf32>
    %425 = arith.mulf %424, %422 : vector<2x346xf32>
    %426 = arith.addf %416, %425 : vector<2x346xf32>
    %427 = vector.broadcast %421 : f32 to vector<2x346xf32>
    %428 = arith.mulf %427, %423 : vector<2x346xf32>
    %429 = arith.addf %419, %428 : vector<2x346xf32>
    %c42 = arith.constant 42 : index
    %430 = memref.load %arg2[%c42] : memref<98xf32, #tpu.memory_space<smem>>
    %c91 = arith.constant 91 : index
    %431 = memref.load %arg2[%c91] : memref<98xf32, #tpu.memory_space<smem>>
    %432 = vector.extract_strided_slice %2 {offsets = [0, 132], sizes = [2, 346], strides = [1, 1]} : vector<2x484xf32> to vector<2x346xf32>
    %433 = vector.extract_strided_slice %5 {offsets = [0, 132], sizes = [2, 346], strides = [1, 1]} : vector<2x484xf32> to vector<2x346xf32>
    %434 = vector.broadcast %430 : f32 to vector<2x346xf32>
    %435 = arith.mulf %434, %432 : vector<2x346xf32>
    %436 = arith.addf %356, %435 : vector<2x346xf32>
    %437 = vector.broadcast %431 : f32 to vector<2x346xf32>
    %438 = arith.mulf %437, %433 : vector<2x346xf32>
    %439 = arith.addf %359, %438 : vector<2x346xf32>
    %c43 = arith.constant 43 : index
    %440 = memref.load %arg2[%c43] : memref<98xf32, #tpu.memory_space<smem>>
    %c92 = arith.constant 92 : index
    %441 = memref.load %arg2[%c92] : memref<98xf32, #tpu.memory_space<smem>>
    %442 = vector.extract_strided_slice %2 {offsets = [0, 133], sizes = [2, 346], strides = [1, 1]} : vector<2x484xf32> to vector<2x346xf32>
    %443 = vector.extract_strided_slice %5 {offsets = [0, 133], sizes = [2, 346], strides = [1, 1]} : vector<2x484xf32> to vector<2x346xf32>
    %444 = vector.broadcast %440 : f32 to vector<2x346xf32>
    %445 = arith.mulf %444, %442 : vector<2x346xf32>
    %446 = arith.addf %436, %445 : vector<2x346xf32>
    %447 = vector.broadcast %441 : f32 to vector<2x346xf32>
    %448 = arith.mulf %447, %443 : vector<2x346xf32>
    %449 = arith.addf %439, %448 : vector<2x346xf32>
    %c44 = arith.constant 44 : index
    %450 = memref.load %arg2[%c44] : memref<98xf32, #tpu.memory_space<smem>>
    %c93 = arith.constant 93 : index
    %451 = memref.load %arg2[%c93] : memref<98xf32, #tpu.memory_space<smem>>
    %452 = vector.extract_strided_slice %2 {offsets = [0, 134], sizes = [2, 346], strides = [1, 1]} : vector<2x484xf32> to vector<2x346xf32>
    %453 = vector.extract_strided_slice %5 {offsets = [0, 134], sizes = [2, 346], strides = [1, 1]} : vector<2x484xf32> to vector<2x346xf32>
    %454 = vector.broadcast %450 : f32 to vector<2x346xf32>
    %455 = arith.mulf %454, %452 : vector<2x346xf32>
    %456 = arith.addf %446, %455 : vector<2x346xf32>
    %457 = vector.broadcast %451 : f32 to vector<2x346xf32>
    %458 = arith.mulf %457, %453 : vector<2x346xf32>
    %459 = arith.addf %449, %458 : vector<2x346xf32>
    %c45 = arith.constant 45 : index
    %460 = memref.load %arg2[%c45] : memref<98xf32, #tpu.memory_space<smem>>
    %c94 = arith.constant 94 : index
    %461 = memref.load %arg2[%c94] : memref<98xf32, #tpu.memory_space<smem>>
    %462 = vector.extract_strided_slice %2 {offsets = [0, 135], sizes = [2, 346], strides = [1, 1]} : vector<2x484xf32> to vector<2x346xf32>
    %463 = vector.extract_strided_slice %5 {offsets = [0, 135], sizes = [2, 346], strides = [1, 1]} : vector<2x484xf32> to vector<2x346xf32>
    %464 = vector.broadcast %460 : f32 to vector<2x346xf32>
    %465 = arith.mulf %464, %462 : vector<2x346xf32>
    %466 = arith.addf %456, %465 : vector<2x346xf32>
    %467 = vector.broadcast %461 : f32 to vector<2x346xf32>
    %468 = arith.mulf %467, %463 : vector<2x346xf32>
    %469 = arith.addf %459, %468 : vector<2x346xf32>
    %c46 = arith.constant 46 : index
    %470 = memref.load %arg2[%c46] : memref<98xf32, #tpu.memory_space<smem>>
    %c95 = arith.constant 95 : index
    %471 = memref.load %arg2[%c95] : memref<98xf32, #tpu.memory_space<smem>>
    %472 = vector.extract_strided_slice %2 {offsets = [0, 136], sizes = [2, 346], strides = [1, 1]} : vector<2x484xf32> to vector<2x346xf32>
    %473 = vector.extract_strided_slice %5 {offsets = [0, 136], sizes = [2, 346], strides = [1, 1]} : vector<2x484xf32> to vector<2x346xf32>
    %474 = vector.broadcast %470 : f32 to vector<2x346xf32>
    %475 = arith.mulf %474, %472 : vector<2x346xf32>
    %476 = arith.addf %466, %475 : vector<2x346xf32>
    %477 = vector.broadcast %471 : f32 to vector<2x346xf32>
    %478 = arith.mulf %477, %473 : vector<2x346xf32>
    %479 = arith.addf %469, %478 : vector<2x346xf32>
    %c47 = arith.constant 47 : index
    %480 = memref.load %arg2[%c47] : memref<98xf32, #tpu.memory_space<smem>>
    %c96 = arith.constant 96 : index
    %481 = memref.load %arg2[%c96] : memref<98xf32, #tpu.memory_space<smem>>
    %482 = vector.extract_strided_slice %2 {offsets = [0, 137], sizes = [2, 346], strides = [1, 1]} : vector<2x484xf32> to vector<2x346xf32>
    %483 = vector.extract_strided_slice %5 {offsets = [0, 137], sizes = [2, 346], strides = [1, 1]} : vector<2x484xf32> to vector<2x346xf32>
    %484 = vector.broadcast %480 : f32 to vector<2x346xf32>
    %485 = arith.mulf %484, %482 : vector<2x346xf32>
    %486 = arith.addf %476, %485 : vector<2x346xf32>
    %487 = vector.broadcast %481 : f32 to vector<2x346xf32>
    %488 = arith.mulf %487, %483 : vector<2x346xf32>
    %489 = arith.addf %479, %488 : vector<2x346xf32>
    %c48 = arith.constant 48 : index
    %490 = memref.load %arg2[%c48] : memref<98xf32, #tpu.memory_space<smem>>
    %c97 = arith.constant 97 : index
    %491 = memref.load %arg2[%c97] : memref<98xf32, #tpu.memory_space<smem>>
    %492 = vector.extract_strided_slice %2 {offsets = [0, 138], sizes = [2, 346], strides = [1, 1]} : vector<2x484xf32> to vector<2x346xf32>
    %493 = vector.extract_strided_slice %5 {offsets = [0, 138], sizes = [2, 346], strides = [1, 1]} : vector<2x484xf32> to vector<2x346xf32>
    %494 = vector.broadcast %490 : f32 to vector<2x346xf32>
    %495 = arith.mulf %494, %492 : vector<2x346xf32>
    %496 = arith.addf %486, %495 : vector<2x346xf32>
    %497 = vector.broadcast %491 : f32 to vector<2x346xf32>
    %498 = arith.mulf %497, %493 : vector<2x346xf32>
    %499 = arith.addf %489, %498 : vector<2x346xf32>
    %500 = arith.addf %496, %426 : vector<2x346xf32>
    %501 = arith.addf %499, %429 : vector<2x346xf32>
    %502 = arith.addf %500, %501 : vector<2x346xf32>
    %c0_8 = arith.constant 0 : index
    %c0_9 = arith.constant 0 : index
    %503 = vector.load %arg1[%c0_8, %c0_9] : memref<1x346xf32, #tpu.memory_space<vmem>>, vector<1x346xf32>
    %504 = vector.broadcast %503 : vector<1x346xf32> to vector<2x346xf32>
    %505 = arith.mulf %502, %504 : vector<2x346xf32>
    %506 = vector.shape_cast %505 : vector<2x346xf32> to vector<1x2x346xf32>
    %cst_10 = arith.constant dense<0.000000e+00> : vector<1xf32>
    %507 = vector.multi_reduction <add>, %506, %cst_10 [1, 2] : vector<1x2x346xf32> to vector<1xf32>
    %508 = vector.shape_cast %507 : vector<1xf32> to vector<1x1x1xf32>
    %509 = vector.extract %508[0, 0, 0] : f32 from vector<1x1x1xf32>
    %510 = vector.broadcast %509 : f32 to vector<1x1xf32>
    %cst_11 = arith.constant 0.001953125 : f32
    %511 = vector.broadcast %cst_11 : f32 to vector<1x1xf32>
    %512 = arith.mulf %510, %511 : vector<1x1xf32>
    %513 = vector.broadcast %512 : vector<1x1xf32> to vector<2x346xf32>
    %514 = arith.subf %502, %513 : vector<2x346xf32>
    %515 = vector.broadcast %503 : vector<1x346xf32> to vector<2x346xf32>
    %516 = arith.mulf %514, %515 : vector<2x346xf32>
    %517 = arith.mulf %516, %516 : vector<2x346xf32>
    %518 = vector.shape_cast %517 : vector<2x346xf32> to vector<1x2x346xf32>
    %cst_12 = arith.constant dense<0.000000e+00> : vector<1xf32>
    %519 = vector.multi_reduction <add>, %518, %cst_12 [1, 2] : vector<1x2x346xf32> to vector<1xf32>
    %520 = vector.shape_cast %519 : vector<1xf32> to vector<1x1x1xf32>
    %521 = vector.extract %520[0, 0, 0] : f32 from vector<1x1x1xf32>
    %522 = vector.broadcast %521 : f32 to vector<1x1xf32>
    %cst_13 = arith.constant 0.001953125 : f32
    %523 = vector.broadcast %cst_13 : f32 to vector<1x1xf32>
    %524 = arith.mulf %522, %523 : vector<1x1xf32>
    %cst_14 = arith.constant 9.99999974E-6 : f32
    %525 = vector.broadcast %cst_14 : f32 to vector<1x1xf32>
    %526 = arith.addf %524, %525 : vector<1x1xf32>
    %527 = math.rsqrt %526 : vector<1x1xf32>
    %c0_15 = arith.constant 0 : index
    %528 = memref.load %arg3[%c0_15] : memref<1xf32, #tpu.memory_space<smem>>
    %529 = vector.broadcast %528 : f32 to vector<1x1xf32>
    %530 = arith.mulf %527, %529 : vector<1x1xf32>
    %531 = vector.broadcast %530 : vector<1x1xf32> to vector<2x346xf32>
    %532 = arith.mulf %514, %531 : vector<2x346xf32>
    %c0_16 = arith.constant 0 : index
    %533 = memref.load %arg4[%c0_16] : memref<1xf32, #tpu.memory_space<smem>>
    %534 = vector.broadcast %533 : f32 to vector<2x346xf32>
    %535 = arith.addf %532, %534 : vector<2x346xf32>
    %cst_17 = arith.constant 5.000000e-01 : f32
    %536 = vector.broadcast %cst_17 : f32 to vector<2x346xf32>
    %537 = arith.mulf %536, %535 : vector<2x346xf32>
    %538 = math.tanh %537 : vector<2x346xf32>
    %cst_18 = arith.constant 5.000000e-01 : f32
    %539 = vector.broadcast %cst_18 : f32 to vector<2x346xf32>
    %540 = arith.mulf %539, %538 : vector<2x346xf32>
    %cst_19 = arith.constant 5.000000e-01 : f32
    %541 = vector.broadcast %cst_19 : f32 to vector<2x346xf32>
    %542 = arith.addf %540, %541 : vector<2x346xf32>
    %543 = vector.extract_strided_slice %0 {offsets = [0, 69], sizes = [8, 346], strides = [1, 1]} : vector<8x484xf32> to vector<8x346xf32>
    %544 = vector.shape_cast %543 : vector<8x346xf32> to vector<2x4x346xf32>
    %545 = vector.shape_cast %542 : vector<2x346xf32> to vector<2x1x346xf32>
    %546 = vector.broadcast %545 : vector<2x1x346xf32> to vector<2x4x346xf32>
    %547 = arith.mulf %544, %546 : vector<2x4x346xf32>
    %548 = vector.shape_cast %547 : vector<2x4x346xf32> to vector<8x346xf32>
    %c0_20 = arith.constant 0 : index
    %c0_21 = arith.constant 0 : index
    %549 = vector.load %arg5[%c0_20, %c0_21] : memref<8x346xf32, #tpu.memory_space<vmem>>, vector<8x346xf32>
    tpu.vector_store %arg5[%c0_20, %c0_21], %548 {strides = array<i32>} : memref<8x346xf32, #tpu.memory_space<vmem>>, vector<8x346xf32>,
    return
  }
}

</mosaic_0001>

<llo_original>
// kernel: tpu_custom_call.1
$region0: #{tpu_custom_call.1}
  #allocation0 [shape = 'u32[]', space=smem, size = 0x4, offset = 0x4, fixed_abs, tag = 'smem constant byte address 0x4 - core index']
  #allocation1 [shape = 'u32[144,128]{1,0:T(1,128)}', space=vmem, size = 0x12000, scoped, tag = 'internal scratch']
  #allocation2 [shape = 'f32[1]{0:T(128)S(6)}', space=smem, size = 0x200, scoped, tag = 'scoped memory for tpu_custom_call.1']
  #allocation3 [shape = 'f32[1]{0:T(128)S(6)}', space=smem, size = 0x200, scoped, tag = 'scoped memory for tpu_custom_call.1']
  %s0 = inlined_call_operand.hbm [shape: f32[8,484], index: 0, kind: input, shape index: {}]
  %s1 = inlined_call_operand.vmem [shape: f32[1,346], index: 1, kind: input, shape index: {}]
  %s2 = inlined_call_operand.vmem [shape: f32[98], index: 2, kind: input, shape index: {}]
  %s3 = inlined_call_operand.<no memory space> [shape: f32[1], index: 3, kind: input, shape index: {}]
  %s4 = inlined_call_operand.<no memory space> [shape: f32[1], index: 4, kind: input, shape index: {}]
  %s5 = inlined_call_operand.hbm [shape: f32[8,346], index: 5, kind: output, shape index: {}]
  %s6 = sld [smem:[#allocation0]]
  $region38: #{tpu_custom_call.1} parent=0
    _
  %s8 = ssub.s32 1, %s6
  %s9 = scalar_select 0, %s8, %s6
  %10 = sst [smem:[#allocation2]] %s3
  %11 = sst [smem:[#allocation3]] %s4
  $region1: #{tpu_custom_call.1} parent=0
    #allocation4 [shape = 'u8[16384]{0}', space=vmem, size = 0x4000, scoped, tag = 'input window, operand 0, single buffered']
    #allocation5 [shape = 's32[1]{0}', space=sflag, size = 0x4, scoped, tag = 'scoped memory for tpu_custom_call.1']
    #allocation6 [shape = 's32[1]{0}', space=sflag, size = 0x4, scoped, tag = 'scoped memory for tpu_custom_call.1']
    #allocation7 [shape = 's32[1]{0}', space=sflag, size = 0x4, scoped, tag = 'scoped memory for tpu_custom_call.1']
    #allocation8 [shape = 'u8[512]{0}', space=smem, size = 0x200, scoped, tag = 'input window, operand 2, single buffered']
    #allocation9 [shape = 'u8[12288]{0}', space=vmem, size = 0x3000, scoped, tag = 'output window, operand 0, single buffered']
    %12 = vsyncpa [#allocation5], 0
    %13 = vsyncpa [#allocation7], 0
    %14 = vsyncpa [#allocation6], 0
    // Predicated region
    $region2: #{tpu_custom_call.1} parent=1 // pred_check
      _
    $region3: #{tpu_custom_call.1} parent=1 // pred_check_branch
      %16 = sbr.rel (0) target = $region5
    $region4: #{tpu_custom_call.1} parent=1 // pred_region
      %s18 = ssub.s32 512, 512
      %19 = vsyncadd [#allocation5], %s18
      %s21 = sshll.u32 [#allocation4], 4
      %s22 = int_to_ptr.vmem [resolvable:$true] %s21
      %24 = dma.hbm_to_vmem [thread:$0]  %s0, 512, %s22, [#allocation5]
    $region5: #{tpu_custom_call.1} parent=1 // pred_fallthru
      _
    // Predicated region
    $region6: #{tpu_custom_call.1} parent=1 // pred_check
      _
    $region7: #{tpu_custom_call.1} parent=1 // pred_check_branch
      %26 = sbr.rel (0) target = $region9
    $region8: #{tpu_custom_call.1} parent=1 // pred_region
      _
    $region9: #{tpu_custom_call.1} parent=1 // pred_fallthru
      _
    // Predicated region
    $region10: #{tpu_custom_call.1} parent=1 // pred_check
      _
    $region11: #{tpu_custom_call.1} parent=1 // pred_check_branch
      %28 = sbr.rel (0) target = $region13
    $region12: #{tpu_custom_call.1} parent=1 // pred_region
      %s30 = ssub.s32 16, 16
      %31 = vsyncadd [#allocation7], %s30
      %s33 = sshll.u32 %s2, 4
      %s34 = int_to_ptr.vmem [resolvable:$true] %s33
      %36 = dma.vmem_to_smem %s34, 16, [#allocation8], [#allocation7]
    $region13: #{tpu_custom_call.1} parent=1 // pred_fallthru
      _
    // Predicated region
    $region14: #{tpu_custom_call.1} parent=1 // pred_check
      _
    $region15: #{tpu_custom_call.1} parent=1 // pred_check_branch
      %38 = sbr.rel (0) target = $region17
    $region16: #{tpu_custom_call.1} parent=1 // pred_region
      _
    $region17: #{tpu_custom_call.1} parent=1 // pred_fallthru
      _
    // Predicated region
    $region18: #{tpu_custom_call.1} parent=1 // pred_check
      _
    $region19: #{tpu_custom_call.1} parent=1 // pred_check_branch
      %40 = sbr.rel (0) target = $region21
    $region20: #{tpu_custom_call.1} parent=1 // pred_region
      _
    $region21: #{tpu_custom_call.1} parent=1 // pred_fallthru
      _
    // Predicated region
    $region22: #{tpu_custom_call.1} parent=1 // pred_check
      _
    $region23: #{tpu_custom_call.1} parent=1 // pred_check_branch
      %42 = sbr.rel (0) target = $region25
    $region24: #{tpu_custom_call.1} parent=1 // pred_region
      %43 = dma.done [#allocation5], 512
    $region25: #{tpu_custom_call.1} parent=1 // pred_fallthru
      _
    // Predicated region
    $region26: #{tpu_custom_call.1} parent=1 // pred_check
      _
    $region27: #{tpu_custom_call.1} parent=1 // pred_check_branch
      %45 = sbr.rel (0) target = $region29
    $region28: #{tpu_custom_call.1} parent=1 // pred_region
      %46 = dma.done [#allocation7], 16
    $region29: #{tpu_custom_call.1} parent=1 // pred_fallthru
      _
    %47 = sfence
    %v48 = vld [vmem:[#allocation4] sm:$0xff]
    %v49 = vld [vmem:[#allocation4 + $0x8] sm:$0xff]
    %v50 = vld [vmem:[#allocation4 + $0x10] sm:$0xff]
    %v51 = vld [vmem:[#allocation4 + $0x18] sm:$0xff]
    %v56 = vcombine.low %v48, %v49
    %v57 = vcombine.high %v48, %v49
    %v58 = vcombine.low %v50, %v51
    %v59 = vcombine.high %v50, %v51
    %v64 = vcombine.high %v56, %v56
    %v65 = vcombine.high %v58, %v58
    %v66 = vcombine.high %v57, %v57
    %v67 = vcombine.high %v59, %v59
    %vm72 = vcmask 1043456
    %v73 = vsel %vm72, %v56, -inf
    %v74 = vrot.slane %v73, 4
    %v75 = vmax.f32 %v73, %v74
    %v76 = vrot.slane %v75, 2
    %v77 = vmax.f32 %v75, %v76
    %v78 = vrot.slane %v77, 1
    %v79 = vmax.f32 %v77, %v78
    %v80 = vsel %vm72, %v64, -inf
    %v81 = vrot.slane %v80, 4
    %v82 = vmax.f32 %v80, %v81
    %v83 = vrot.slane %v82, 2
    %v84 = vmax.f32 %v82, %v83
    %v85 = vrot.slane %v84, 1
    %v86 = vmax.f32 %v84, %v85
    %v87 = vsel %vm72, %v58, -inf
    %v88 = vrot.slane %v87, 4
    %v89 = vmax.f32 %v87, %v88
    %v90 = vrot.slane %v89, 2
    %v91 = vmax.f32 %v89, %v90
    %v92 = vrot.slane %v91, 1
    %v93 = vmax.f32 %v91, %v92
    %vm94 = vcmask 814080
    %v95 = vsel %vm94, %v65, -inf
    %v96 = vrot.slane %v95, 4
    %v97 = vmax.f32 %v95, %v96
    %v98 = vrot.slane %v97, 2
    %v99 = vmax.f32 %v97, %v98
    %v100 = vrot.slane %v99, 1
    %v101 = vmax.f32 %v99, %v100
    %v102 = vsel %vm72, %v57, -inf
    %v103 = vrot.slane %v102, 4
    %v104 = vmax.f32 %v102, %v103
    %v105 = vrot.slane %v104, 2
    %v106 = vmax.f32 %v104, %v105
    %v107 = vrot.slane %v106, 1
    %v108 = vmax.f32 %v106, %v107
    %v109 = vsel %vm72, %v66, -inf
    %v110 = vrot.slane %v109, 4
    %v111 = vmax.f32 %v109, %v110
    %v112 = vrot.slane %v111, 2
    %v113 = vmax.f32 %v111, %v112
    %v114 = vrot.slane %v113, 1
    %v115 = vmax.f32 %v113, %v114
    %v116 = vsel %vm72, %v59, -inf
    %v117 = vrot.slane %v116, 4
    %v118 = vmax.f32 %v116, %v117
    %v119 = vrot.slane %v118, 2
    %v120 = vmax.f32 %v118, %v119
    %v121 = vrot.slane %v120, 1
    %v122 = vmax.f32 %v120, %v121
    %v123 = vsel %vm94, %v67, -inf
    %v124 = vrot.slane %v123, 4
    %v125 = vmax.f32 %v123, %v124
    %v126 = vrot.slane %v125, 2
    %v127 = vmax.f32 %v125, %v126
    %v128 = vrot.slane %v127, 1
    %v129 = vmax.f32 %v127, %v128
    %v130 = vsel %vm72, %v56, 0.0
    %v131 = vrot.slane %v130, 4
    %v132 = vadd.f32 %v130, %v131
    %v133 = vrot.slane %v132, 2
    %v134 = vadd.f32 %v132, %v133
    %v135 = vrot.slane %v134, 1
    %v136 = vadd.f32 %v134, %v135
    %v137 = vsel %vm72, %v64, 0.0
    %v138 = vrot.slane %v137, 4
    %v139 = vadd.f32 %v137, %v138
    %v140 = vrot.slane %v139, 2
    %v141 = vadd.f32 %v139, %v140
    %v142 = vrot.slane %v141, 1
    %v143 = vadd.f32 %v141, %v142
    %v144 = vsel %vm72, %v58, 0.0
    %v145 = vrot.slane %v144, 4
    %v146 = vadd.f32 %v144, %v145
    %v147 = vrot.slane %v146, 2
    %v148 = vadd.f32 %v146, %v147
    %v149 = vrot.slane %v148, 1
    %v150 = vadd.f32 %v148, %v149
    %v151 = vsel %vm94, %v65, 0.0
    %v152 = vrot.slane %v151, 4
    %v153 = vadd.f32 %v151, %v152
    %v154 = vrot.slane %v153, 2
    %v155 = vadd.f32 %v153, %v154
    %v156 = vrot.slane %v155, 1
    %v157 = vadd.f32 %v155, %v156
    %v158 = vsel %vm72, %v57, 0.0
    %v159 = vrot.slane %v158, 4
    %v160 = vadd.f32 %v158, %v159
    %v161 = vrot.slane %v160, 2
    %v162 = vadd.f32 %v160, %v161
    %v163 = vrot.slane %v162, 1
    %v164 = vadd.f32 %v162, %v163
    %v165 = vsel %vm72, %v66, 0.0
    %v166 = vrot.slane %v165, 4
    %v167 = vadd.f32 %v165, %v166
    %v168 = vrot.slane %v167, 2
    %v169 = vadd.f32 %v167, %v168
    %v170 = vrot.slane %v169, 1
    %v171 = vadd.f32 %v169, %v170
    %v172 = vsel %vm72, %v59, 0.0
    %v173 = vrot.slane %v172, 4
    %v174 = vadd.f32 %v172, %v173
    %v175 = vrot.slane %v174, 2
    %v176 = vadd.f32 %v174, %v175
    %v177 = vrot.slane %v176, 1
    %v178 = vadd.f32 %v176, %v177
    %v179 = vsel %vm94, %v67, 0.0
    %v180 = vrot.slane %v179, 4
    %v181 = vadd.f32 %v179, %v180
    %v182 = vrot.slane %v181, 2
    %v183 = vadd.f32 %v181, %v182
    %v184 = vrot.slane %v183, 1
    %v185 = vadd.f32 %v183, %v184
    %v186 = vmul.f32 %v136, 0.25
    %v187 = vmul.f32 %v143, 0.25
    %v188 = vmul.f32 %v150, 0.25
    %v189 = vmul.f32 %v157, 0.25
    %v190 = vmul.f32 %v164, 0.25
    %v191 = vmul.f32 %v171, 0.25
    %v192 = vmul.f32 %v178, 0.25
    %v193 = vmul.f32 %v185, 0.25
    %s194 = sld [smem:[#allocation8]]
    %s195 = sld [smem:[#allocation8 + $0x31]]
    %v196 = vstv %s194
    %v197 = vmul.f32 %v196, %v79
    %v198 = vmul.f32 %v196, %v86
    %v199 = vmul.f32 %v196, %v93
    %v200 = vmul.f32 %v196, %v108
    %v201 = vmul.f32 %v196, %v115
    %v202 = vmul.f32 %v196, %v122
    %v203 = vadd.f32 %v197, 0.0
    %v204 = vadd.f32 %v198, 0.0
    %v205 = vadd.f32 %v199, 0.0
    %v206 = vadd.f32 %v200, 0.0
    %v207 = vadd.f32 %v201, 0.0
    %v208 = vadd.f32 %v202, 0.0
    %v209 = vstv %s195
    %v210 = vmul.f32 %v209, %v186
    %v211 = vmul.f32 %v209, %v187
    %v212 = vmul.f32 %v209, %v188
    %v213 = vmul.f32 %v209, %v190
    %v214 = vmul.f32 %v209, %v191
    %v215 = vmul.f32 %v209, %v192
    %v216 = vadd.f32 %v210, 0.0
    %v217 = vadd.f32 %v211, 0.0
    %v218 = vadd.f32 %v212, 0.0
    %v219 = vadd.f32 %v213, 0.0
    %v220 = vadd.f32 %v214, 0.0
    %v221 = vadd.f32 %v215, 0.0
    %s222 = sld [smem:[#allocation8 + $0x1]]
    %s223 = sld [smem:[#allocation8 + $0x32]]
    %v224 = vstv %s222
    %v225 = vmul.f32 %v224, %v79
    %v226 = vmul.f32 %v224, %v86
    %v227 = vmul.f32 %v224, %v93
    %v228 = vmul.f32 %v224, %v108
    %v229 = vmul.f32 %v224, %v115
    %v230 = vmul.f32 %v224, %v122
    %237 = vrot.lane.b32.xlu0 %v225, 127
    %v238 = vpop.permute.xlu0 %237
    %239 = vrot.lane.b32.xlu0 %v226, 127
    %v240 = vpop.permute.xlu0 %239
    %241 = vrot.lane.b32.xlu0 %v227, 127
    %v242 = vpop.permute.xlu0 %241
    %243 = vrot.lane.b32.xlu0 %v228, 127
    %v244 = vpop.permute.xlu0 %243
    %245 = vrot.lane.b32.xlu0 %v229, 127
    %v246 = vpop.permute.xlu0 %245
    %247 = vrot.lane.b32.xlu0 %v230, 127
    %v248 = vpop.permute.xlu0 %247
    %vm249 = vcmask 1039360
    %v250 = vsel %vm249, %v238, %v240
    %v251 = vsel %vm249, %v240, %v242
    %v252 = vsel %vm249, %v244, %v246
    %v253 = vsel %vm249, %v246, %v248
    %v260 = vadd.f32 %v203, %v250
    %v261 = vadd.f32 %v204, %v251
    %v262 = vadd.f32 %v205, %v242
    %v263 = vadd.f32 %v206, %v252
    %v264 = vadd.f32 %v207, %v253
    %v265 = vadd.f32 %v208, %v248
    %v266 = vstv %s223
    %v267 = vmul.f32 %v266, %v186
    %v268 = vmul.f32 %v266, %v187
    %v269 = vmul.f32 %v266, %v188
    %v270 = vmul.f32 %v266, %v190
    %v271 = vmul.f32 %v266, %v191
    %v272 = vmul.f32 %v266, %v192
    %279 = vrot.lane.b32.xlu0 %v267, 127
    %v280 = vpop.permute.xlu0 %279
    %281 = vrot.lane.b32.xlu0 %v268, 127
    %v282 = vpop.permute.xlu0 %281
    %283 = vrot.lane.b32.xlu0 %v269, 127
    %v284 = vpop.permute.xlu0 %283
    %285 = vrot.lane.b32.xlu0 %v270, 127
    %v286 = vpop.permute.xlu0 %285
    %287 = vrot.lane.b32.xlu0 %v271, 127
    %v288 = vpop.permute.xlu0 %287
    %289 = vrot.lane.b32.xlu0 %v272, 127
    %v290 = vpop.permute.xlu0 %289
    %v291 = vsel %vm249, %v280, %v282
    %v292 = vsel %vm249, %v282, %v284
    %v293 = vsel %vm249, %v286, %v288
    %v294 = vsel %vm249, %v288, %v290
    %v301 = vadd.f32 %v216, %v291
    %v302 = vadd.f32 %v217, %v292
    %v303 = vadd.f32 %v218, %v284
    %v304 = vadd.f32 %v219, %v293
    %v305 = vadd.f32 %v220, %v294
    %v306 = vadd.f32 %v221, %v290
    %s307 = sld [smem:[#allocation8 + $0x2]]
    %s308 = sld [smem:[#allocation8 + $0x33]]
    %v309 = vstv %s307
    %v310 = vmul.f32 %v309, %v79
    %v311 = vmul.f32 %v309, %v86
    %v312 = vmul.f32 %v309, %v93
    %v313 = vmul.f32 %v309, %v108
    %v314 = vmul.f32 %v309, %v115
    %v315 = vmul.f32 %v309, %v122
    %322 = vrot.lane.b32.xlu0 %v310, 126
    %v323 = vpop.permute.xlu0 %322
    %324 = vrot.lane.b32.xlu0 %v311, 126
    %v325 = vpop.permute.xlu0 %324
    %326 = vrot.lane.b32.xlu0 %v312, 126
    %v327 = vpop.permute.xlu0 %326
    %328 = vrot.lane.b32.xlu0 %v313, 126
    %v329 = vpop.permute.xlu0 %328
    %330 = vrot.lane.b32.xlu0 %v314, 126
    %v331 = vpop.permute.xlu0 %330
    %332 = vrot.lane.b32.xlu0 %v315, 126
    %v333 = vpop.permute.xlu0 %332
    %vm334 = vcmask 1031168
    %v335 = vsel %vm334, %v323, %v325
    %v336 = vsel %vm334, %v325, %v327
    %v337 = vsel %vm334, %v329, %v331
    %v338 = vsel %vm334, %v331, %v333
    %v345 = vadd.f32 %v260, %v335
    %v346 = vadd.f32 %v261, %v336
    %v347 = vadd.f32 %v262, %v327
    %v348 = vadd.f32 %v263, %v337
    %v349 = vadd.f32 %v264, %v338
    %v350 = vadd.f32 %v265, %v333
    %v351 = vstv %s308
    %v352 = vmul.f32 %v351, %v186
    %v353 = vmul.f32 %v351, %v187
    %v354 = vmul.f32 %v351, %v188
    %v355 = vmul.f32 %v351, %v190
    %v356 = vmul.f32 %v351, %v191
    %v357 = vmul.f32 %v351, %v192
    %364 = vrot.lane.b32.xlu0 %v352, 126
    %v365 = vpop.permute.xlu0 %364
    %366 = vrot.lane.b32.xlu0 %v353, 126
    %v367 = vpop.permute.xlu0 %366
    %368 = vrot.lane.b32.xlu0 %v354, 126
    %v369 = vpop.permute.xlu0 %368
    %370 = vrot.lane.b32.xlu0 %v355, 126
    %v371 = vpop.permute.xlu0 %370
    %372 = vrot.lane.b32.xlu0 %v356, 126
    %v373 = vpop.permute.xlu0 %372
    %374 = vrot.lane.b32.xlu0 %v357, 126
    %v375 = vpop.permute.xlu0 %374
    %v376 = vsel %vm334, %v365, %v367
    %v377 = vsel %vm334, %v367, %v369
    %v378 = vsel %vm334, %v371, %v373
    %v379 = vsel %vm334, %v373, %v375
    %v386 = vadd.f32 %v301, %v376
    %v387 = vadd.f32 %v302, %v377
    %v388 = vadd.f32 %v303, %v369
    %v389 = vadd.f32 %v304, %v378
    %v390 = vadd.f32 %v305, %v379
    %v391 = vadd.f32 %v306, %v375
    %s392 = sld [smem:[#allocation8 + $0x3]]
    %s393 = sld [smem:[#allocation8 + $0x34]]
    %v394 = vstv %s392
    %v395 = vmul.f32 %v394, %v79
    %v396 = vmul.f32 %v394, %v86
    %v397 = vmul.f32 %v394, %v93
    %v398 = vmul.f32 %v394, %v108
    %v399 = vmul.f32 %v394, %v115
    %v400 = vmul.f32 %v394, %v122
    %407 = vrot.lane.b32.xlu0 %v395, 125
    %v408 = vpop.permute.xlu0 %407
    %409 = vrot.lane.b32.xlu0 %v396, 125
    %v410 = vpop.permute.xlu0 %409
    %411 = vrot.lane.b32.xlu0 %v397, 125
    %v412 = vpop.permute.xlu0 %411
    %413 = vrot.lane.b32.xlu0 %v398, 125
    %v414 = vpop.permute.xlu0 %413
    %415 = vrot.lane.b32.xlu0 %v399, 125
    %v416 = vpop.permute.xlu0 %415
    %417 = vrot.lane.b32.xlu0 %v400, 125
    %v418 = vpop.permute.xlu0 %417
    %vm419 = vcmask 1022976
    %v420 = vsel %vm419, %v408, %v410
    %v421 = vsel %vm419, %v410, %v412
    %v422 = vsel %vm419, %v414, %v416
    %v423 = vsel %vm419, %v416, %v418
    %v430 = vadd.f32 %v345, %v420
    %v431 = vadd.f32 %v346, %v421
    %v432 = vadd.f32 %v347, %v412
    %v433 = vadd.f32 %v348, %v422
    %v434 = vadd.f32 %v349, %v423
    %v435 = vadd.f32 %v350, %v418
    %v436 = vstv %s393
    %v437 = vmul.f32 %v436, %v186
    %v438 = vmul.f32 %v436, %v187
    %v439 = vmul.f32 %v436, %v188
    %v440 = vmul.f32 %v436, %v190
    %v441 = vmul.f32 %v436, %v191
    %v442 = vmul.f32 %v436, %v192
    %449 = vrot.lane.b32.xlu0 %v437, 125
    %v450 = vpop.permute.xlu0 %449
    %451 = vrot.lane.b32.xlu0 %v438, 125
    %v452 = vpop.permute.xlu0 %451
    %453 = vrot.lane.b32.xlu0 %v439, 125
    %v454 = vpop.permute.xlu0 %453
    %455 = vrot.lane.b32.xlu0 %v440, 125
    %v456 = vpop.permute.xlu0 %455
    %457 = vrot.lane.b32.xlu0 %v441, 125
    %v458 = vpop.permute.xlu0 %457
    %459 = vrot.lane.b32.xlu0 %v442, 125
    %v460 = vpop.permute.xlu0 %459
    %v461 = vsel %vm419, %v450, %v452
    %v462 = vsel %vm419, %v452, %v454
    %v463 = vsel %vm419, %v456, %v458
    %v464 = vsel %vm419, %v458, %v460
    %v471 = vadd.f32 %v386, %v461
    %v472 = vadd.f32 %v387, %v462
    %v473 = vadd.f32 %v388, %v454
    %v474 = vadd.f32 %v389, %v463
    %v475 = vadd.f32 %v390, %v464
    %v476 = vadd.f32 %v391, %v460
    %s477 = sld [smem:[#allocation8 + $0x4]]
    %s478 = sld [smem:[#allocation8 + $0x35]]
    %v479 = vstv %s477
    %v480 = vmul.f32 %v479, %v79
    %v481 = vmul.f32 %v479, %v86
    %v482 = vmul.f32 %v479, %v93
    %v483 = vmul.f32 %v479, %v108
    %v484 = vmul.f32 %v479, %v115
    %v485 = vmul.f32 %v479, %v122
    %492 = vrot.lane.b32.xlu0 %v480, 124
    %v493 = vpop.permute.xlu0 %492
    %494 = vrot.lane.b32.xlu0 %v481, 124
    %v495 = vpop.permute.xlu0 %494
    %496 = vrot.lane.b32.xlu0 %v482, 124
    %v497 = vpop.permute.xlu0 %496
    %498 = vrot.lane.b32.xlu0 %v483, 124
    %v499 = vpop.permute.xlu0 %498
    %500 = vrot.lane.b32.xlu0 %v484, 124
    %v501 = vpop.permute.xlu0 %500
    %502 = vrot.lane.b32.xlu0 %v485, 124
    %v503 = vpop.permute.xlu0 %502
    %vm504 = vcmask 1014784
    %v505 = vsel %vm504, %v493, %v495
    %v506 = vsel %vm504, %v495, %v497
    %v507 = vsel %vm504, %v499, %v501
    %v508 = vsel %vm504, %v501, %v503
    %v515 = vadd.f32 %v430, %v505
    %v516 = vadd.f32 %v431, %v506
    %v517 = vadd.f32 %v432, %v497
    %v518 = vadd.f32 %v433, %v507
    %v519 = vadd.f32 %v434, %v508
    %v520 = vadd.f32 %v435, %v503
    %v521 = vstv %s478
    %v522 = vmul.f32 %v521, %v186
    %v523 = vmul.f32 %v521, %v187
    %v524 = vmul.f32 %v521, %v188
    %v525 = vmul.f32 %v521, %v190
    %v526 = vmul.f32 %v521, %v191
    %v527 = vmul.f32 %v521, %v192
    %534 = vrot.lane.b32.xlu0 %v522, 124
    %v535 = vpop.permute.xlu0 %534
    %536 = vrot.lane.b32.xlu0 %v523, 124
    %v537 = vpop.permute.xlu0 %536
    %538 = vrot.lane.b32.xlu0 %v524, 124
    %v539 = vpop.permute.xlu0 %538
    %540 = vrot.lane.b32.xlu0 %v525, 124
    %v541 = vpop.permute.xlu0 %540
    %542 = vrot.lane.b32.xlu0 %v526, 124
    %v543 = vpop.permute.xlu0 %542
    %544 = vrot.lane.b32.xlu0 %v527, 124
    %v545 = vpop.permute.xlu0 %544
    %v546 = vsel %vm504, %v535, %v537
    %v547 = vsel %vm504, %v537, %v539
    %v548 = vsel %vm504, %v541, %v543
    %v549 = vsel %vm504, %v543, %v545
    %v556 = vadd.f32 %v471, %v546
    %v557 = vadd.f32 %v472, %v547
    %v558 = vadd.f32 %v473, %v539
    %v559 = vadd.f32 %v474, %v548
    %v560 = vadd.f32 %v475, %v549
    %v561 = vadd.f32 %v476, %v545
    %s562 = sld [smem:[#allocation8 + $0x5]]
    %s563 = sld [smem:[#allocation8 + $0x36]]
    %v564 = vstv %s562
    %v565 = vmul.f32 %v564, %v79
    %v566 = vmul.f32 %v564, %v86
    %v567 = vmul.f32 %v564, %v93
    %v568 = vmul.f32 %v564, %v108
    %v569 = vmul.f32 %v564, %v115
    %v570 = vmul.f32 %v564, %v122
    %577 = vrot.lane.b32.xlu0 %v565, 123
    %v578 = vpop.permute.xlu0 %577
    %579 = vrot.lane.b32.xlu0 %v566, 123
    %v580 = vpop.permute.xlu0 %579
    %581 = vrot.lane.b32.xlu0 %v567, 123
    %v582 = vpop.permute.xlu0 %581
    %583 = vrot.lane.b32.xlu0 %v568, 123
    %v584 = vpop.permute.xlu0 %583
    %585 = vrot.lane.b32.xlu0 %v569, 123
    %v586 = vpop.permute.xlu0 %585
    %587 = vrot.lane.b32.xlu0 %v570, 123
    %v588 = vpop.permute.xlu0 %587
    %vm589 = vcmask 1006592
    %v590 = vsel %vm589, %v578, %v580
    %v591 = vsel %vm589, %v580, %v582
    %v592 = vsel %vm589, %v584, %v586
    %v593 = vsel %vm589, %v586, %v588
    %v600 = vadd.f32 %v515, %v590
    %v601 = vadd.f32 %v516, %v591
    %v602 = vadd.f32 %v517, %v582
    %v603 = vadd.f32 %v518, %v592
    %v604 = vadd.f32 %v519, %v593
    %v605 = vadd.f32 %v520, %v588
    %v606 = vstv %s563
    %v607 = vmul.f32 %v606, %v186
    %v608 = vmul.f32 %v606, %v187
    %v609 = vmul.f32 %v606, %v188
    %v610 = vmul.f32 %v606, %v190
    %v611 = vmul.f32 %v606, %v191
    %v612 = vmul.f32 %v606, %v192
    %619 = vrot.lane.b32.xlu0 %v607, 123
    %v620 = vpop.permute.xlu0 %619
    %621 = vrot.lane.b32.xlu0 %v608, 123
    %v622 = vpop.permute.xlu0 %621
    %623 = vrot.lane.b32.xlu0 %v609, 123
    %v624 = vpop.permute.xlu0 %623
    %625 = vrot.lane.b32.xlu0 %v610, 123
    %v626 = vpop.permute.xlu0 %625
    %627 = vrot.lane.b32.xlu0 %v611, 123
    %v628 = vpop.permute.xlu0 %627
    %629 = vrot.lane.b32.xlu0 %v612, 123
    %v630 = vpop.permute.xlu0 %629
    %v631 = vsel %vm589, %v620, %v622
    %v632 = vsel %vm589, %v622, %v624
    %v633 = vsel %vm589, %v626, %v628
    %v634 = vsel %vm589, %v628, %v630
    %v641 = vadd.f32 %v556, %v631
    %v642 = vadd.f32 %v557, %v632
    %v643 = vadd.f32 %v558, %v624
    %v644 = vadd.f32 %v559, %v633
    %v645 = vadd.f32 %v560, %v634
    %v646 = vadd.f32 %v561, %v630
    %s647 = sld [smem:[#allocation8 + $0x6]]
    %s648 = sld [smem:[#allocation8 + $0x37]]
    %v649 = vstv %s647
    %v650 = vmul.f32 %v649, %v79
    %v651 = vmul.f32 %v649, %v86
    %v652 = vmul.f32 %v649, %v93
    %v653 = vmul.f32 %v649, %v108
    %v654 = vmul.f32 %v649, %v115
    %v655 = vmul.f32 %v649, %v122
    %662 = vrot.lane.b32.xlu0 %v650, 122
    %v663 = vpop.permute.xlu0 %662
    %664 = vrot.lane.b32.xlu0 %v651, 122
    %v665 = vpop.permute.xlu0 %664
    %666 = vrot.lane.b32.xlu0 %v652, 122
    %v667 = vpop.permute.xlu0 %666
    %668 = vrot.lane.b32.xlu0 %v653, 122
    %v669 = vpop.permute.xlu0 %668
    %670 = vrot.lane.b32.xlu0 %v654, 122
    %v671 = vpop.permute.xlu0 %670
    %672 = vrot.lane.b32.xlu0 %v655, 122
    %v673 = vpop.permute.xlu0 %672
    %vm674 = vcmask 998400
    %v675 = vsel %vm674, %v663, %v665
    %v676 = vsel %vm674, %v665, %v667
    %v677 = vsel %vm674, %v669, %v671
    %v678 = vsel %vm674, %v671, %v673
    %v685 = vadd.f32 %v600, %v675
    %v686 = vadd.f32 %v601, %v676
    %v687 = vadd.f32 %v602, %v667
    %v688 = vadd.f32 %v603, %v677
    %v689 = vadd.f32 %v604, %v678
    %v690 = vadd.f32 %v605, %v673
    %v691 = vstv %s648
    %v692 = vmul.f32 %v691, %v186
    %v693 = vmul.f32 %v691, %v187
    %v694 = vmul.f32 %v691, %v188
    %v695 = vmul.f32 %v691, %v190
    %v696 = vmul.f32 %v691, %v191
    %v697 = vmul.f32 %v691, %v192
    %704 = vrot.lane.b32.xlu0 %v692, 122
    %v705 = vpop.permute.xlu0 %704
    %706 = vrot.lane.b32.xlu0 %v693, 122
    %v707 = vpop.permute.xlu0 %706
    %708 = vrot.lane.b32.xlu0 %v694, 122
    %v709 = vpop.permute.xlu0 %708
    %710 = vrot.lane.b32.xlu0 %v695, 122
    %v711 = vpop.permute.xlu0 %710
    %712 = vrot.lane.b32.xlu0 %v696, 122
    %v713 = vpop.permute.xlu0 %712
    %714 = vrot.lane.b32.xlu0 %v697, 122
    %v715 = vpop.permute.xlu0 %714
    %v716 = vsel %vm674, %v705, %v707
    %v717 = vsel %vm674, %v707, %v709
    %v718 = vsel %vm674, %v711, %v713
    %v719 = vsel %vm674, %v713, %v715
    %v726 = vadd.f32 %v641, %v716
    %v727 = vadd.f32 %v642, %v717
    %v728 = vadd.f32 %v643, %v709
    %v729 = vadd.f32 %v644, %v718
    %v730 = vadd.f32 %v645, %v719
    %v731 = vadd.f32 %v646, %v715
    %s732 = sld [smem:[#allocation8 + $0x7]]
    %s733 = sld [smem:[#allocation8 + $0x38]]
    %v734 = vstv %s732
    %v735 = vmul.f32 %v734, %v79
    %v736 = vmul.f32 %v734, %v86
    %v737 = vmul.f32 %v734, %v93
    %v738 = vmul.f32 %v734, %v108
    %v739 = vmul.f32 %v734, %v115
    %v740 = vmul.f32 %v734, %v122
    %v741 = vadd.f32 %v735, 0.0
    %v742 = vadd.f32 %v736, 0.0
    %v743 = vadd.f32 %v737, 0.0
    %v744 = vadd.f32 %v738, 0.0
    %v745 = vadd.f32 %v739, 0.0
    %v746 = vadd.f32 %v740, 0.0
    %v747 = vstv %s733
    %v748 = vmul.f32 %v747, %v186
    %v749 = vmul.f32 %v747, %v187
    %v750 = vmul.f32 %v747, %v188
    %v751 = vmul.f32 %v747, %v190
    %v752 = vmul.f32 %v747, %v191
    %v753 = vmul.f32 %v747, %v192
    %v754 = vadd.f32 %v748, 0.0
    %v755 = vadd.f32 %v749, 0.0
    %v756 = vadd.f32 %v750, 0.0
    %v757 = vadd.f32 %v751, 0.0
    %v758 = vadd.f32 %v752, 0.0
    %v759 = vadd.f32 %v753, 0.0
    %s760 = sld [smem:[#allocation8 + $0x8]]
    %s761 = sld [smem:[#allocation8 + $0x39]]
    %v762 = vstv %s760
    %v763 = vmul.f32 %v762, %v79
    %v764 = vmul.f32 %v762, %v86
    %v765 = vmul.f32 %v762, %v93
    %v766 = vmul.f32 %v762, %v108
    %v767 = vmul.f32 %v762, %v115
    %v768 = vmul.f32 %v762, %v122
    %775 = vrot.lane.b32.xlu0 %v763, 127
    %v776 = vpop.permute.xlu0 %775
    %777 = vrot.lane.b32.xlu0 %v764, 127
    %v778 = vpop.permute.xlu0 %777
    %779 = vrot.lane.b32.xlu0 %v765, 127
    %v780 = vpop.permute.xlu0 %779
    %781 = vrot.lane.b32.xlu0 %v766, 127
    %v782 = vpop.permute.xlu0 %781
    %783 = vrot.lane.b32.xlu0 %v767, 127
    %v784 = vpop.permute.xlu0 %783
    %785 = vrot.lane.b32.xlu0 %v768, 127
    %v786 = vpop.permute.xlu0 %785
    %v787 = vsel %vm249, %v776, %v778
    %v788 = vsel %vm249, %v778, %v780
    %v789 = vsel %vm249, %v782, %v784
    %v790 = vsel %vm249, %v784, %v786
    %v797 = vadd.f32 %v741, %v787
    %v798 = vadd.f32 %v742, %v788
    %v799 = vadd.f32 %v743, %v780
    %v800 = vadd.f32 %v744, %v789
    %v801 = vadd.f32 %v745, %v790
    %v802 = vadd.f32 %v746, %v786
    %v803 = vstv %s761
    %v804 = vmul.f32 %v803, %v186
    %v805 = vmul.f32 %v803, %v187
    %v806 = vmul.f32 %v803, %v188
    %v807 = vmul.f32 %v803, %v190
    %v808 = vmul.f32 %v803, %v191
    %v809 = vmul.f32 %v803, %v192
    %816 = vrot.lane.b32.xlu0 %v804, 127
    %v817 = vpop.permute.xlu0 %816
    %818 = vrot.lane.b32.xlu0 %v805, 127
    %v819 = vpop.permute.xlu0 %818
    %820 = vrot.lane.b32.xlu0 %v806, 127
    %v821 = vpop.permute.xlu0 %820
    %822 = vrot.lane.b32.xlu0 %v807, 127
    %v823 = vpop.permute.xlu0 %822
    %824 = vrot.lane.b32.xlu0 %v808, 127
    %v825 = vpop.permute.xlu0 %824
    %826 = vrot.lane.b32.xlu0 %v809, 127
    %v827 = vpop.permute.xlu0 %826
    %v828 = vsel %vm249, %v817, %v819
    %v829 = vsel %vm249, %v819, %v821
    %v830 = vsel %vm249, %v823, %v825
    %v831 = vsel %vm249, %v825, %v827
    %v838 = vadd.f32 %v754, %v828
    %v839 = vadd.f32 %v755, %v829
    %v840 = vadd.f32 %v756, %v821
    %v841 = vadd.f32 %v757, %v830
    %v842 = vadd.f32 %v758, %v831
    %v843 = vadd.f32 %v759, %v827
    %s844 = sld [smem:[#allocation8 + $0x9]]
    %s845 = sld [smem:[#allocation8 + $0x3a]]
    %v846 = vstv %s844
    %v847 = vmul.f32 %v846, %v79
    %v848 = vmul.f32 %v846, %v86
    %v849 = vmul.f32 %v846, %v93
    %v850 = vmul.f32 %v846, %v108
    %v851 = vmul.f32 %v846, %v115
    %v852 = vmul.f32 %v846, %v122
    %859 = vrot.lane.b32.xlu0 %v847, 126
    %v860 = vpop.permute.xlu0 %859
    %861 = vrot.lane.b32.xlu0 %v848, 126
    %v862 = vpop.permute.xlu0 %861
    %863 = vrot.lane.b32.xlu0 %v849, 126
    %v864 = vpop.permute.xlu0 %863
    %865 = vrot.lane.b32.xlu0 %v850, 126
    %v866 = vpop.permute.xlu0 %865
    %867 = vrot.lane.b32.xlu0 %v851, 126
    %v868 = vpop.permute.xlu0 %867
    %869 = vrot.lane.b32.xlu0 %v852, 126
    %v870 = vpop.permute.xlu0 %869
    %v871 = vsel %vm334, %v860, %v862
    %v872 = vsel %vm334, %v862, %v864
    %v873 = vsel %vm334, %v866, %v868
    %v874 = vsel %vm334, %v868, %v870
    %v881 = vadd.f32 %v797, %v871
    %v882 = vadd.f32 %v798, %v872
    %v883 = vadd.f32 %v799, %v864
    %v884 = vadd.f32 %v800, %v873
    %v885 = vadd.f32 %v801, %v874
    %v886 = vadd.f32 %v802, %v870
    %v887 = vstv %s845
    %v888 = vmul.f32 %v887, %v186
    %v889 = vmul.f32 %v887, %v187
    %v890 = vmul.f32 %v887, %v188
    %v891 = vmul.f32 %v887, %v190
    %v892 = vmul.f32 %v887, %v191
    %v893 = vmul.f32 %v887, %v192
    %900 = vrot.lane.b32.xlu0 %v888, 126
    %v901 = vpop.permute.xlu0 %900
    %902 = vrot.lane.b32.xlu0 %v889, 126
    %v903 = vpop.permute.xlu0 %902
    %904 = vrot.lane.b32.xlu0 %v890, 126
    %v905 = vpop.permute.xlu0 %904
    %906 = vrot.lane.b32.xlu0 %v891, 126
    %v907 = vpop.permute.xlu0 %906
    %908 = vrot.lane.b32.xlu0 %v892, 126
    %v909 = vpop.permute.xlu0 %908
    %910 = vrot.lane.b32.xlu0 %v893, 126
    %v911 = vpop.permute.xlu0 %910
    %v912 = vsel %vm334, %v901, %v903
    %v913 = vsel %vm334, %v903, %v905
    %v914 = vsel %vm334, %v907, %v909
    %v915 = vsel %vm334, %v909, %v911
    %v922 = vadd.f32 %v838, %v912
    %v923 = vadd.f32 %v839, %v913
    %v924 = vadd.f32 %v840, %v905
    %v925 = vadd.f32 %v841, %v914
    %v926 = vadd.f32 %v842, %v915
    %v927 = vadd.f32 %v843, %v911
    %s928 = sld [smem:[#allocation8 + $0xa]]
    %s929 = sld [smem:[#allocation8 + $0x3b]]
    %v930 = vstv %s928
    %v931 = vmul.f32 %v930, %v79
    %v932 = vmul.f32 %v930, %v86
    %v933 = vmul.f32 %v930, %v93
    %v934 = vmul.f32 %v930, %v108
    %v935 = vmul.f32 %v930, %v115
    %v936 = vmul.f32 %v930, %v122
    %943 = vrot.lane.b32.xlu0 %v931, 125
    %v944 = vpop.permute.xlu0 %943
    %945 = vrot.lane.b32.xlu0 %v932, 125
    %v946 = vpop.permute.xlu0 %945
    %947 = vrot.lane.b32.xlu0 %v933, 125
    %v948 = vpop.permute.xlu0 %947
    %949 = vrot.lane.b32.xlu0 %v934, 125
    %v950 = vpop.permute.xlu0 %949
    %951 = vrot.lane.b32.xlu0 %v935, 125
    %v952 = vpop.permute.xlu0 %951
    %953 = vrot.lane.b32.xlu0 %v936, 125
    %v954 = vpop.permute.xlu0 %953
    %v955 = vsel %vm419, %v944, %v946
    %v956 = vsel %vm419, %v946, %v948
    %v957 = vsel %vm419, %v950, %v952
    %v958 = vsel %vm419, %v952, %v954
    %v965 = vadd.f32 %v881, %v955
    %v966 = vadd.f32 %v882, %v956
    %v967 = vadd.f32 %v883, %v948
    %v968 = vadd.f32 %v884, %v957
    %v969 = vadd.f32 %v885, %v958
    %v970 = vadd.f32 %v886, %v954
    %v971 = vstv %s929
    %v972 = vmul.f32 %v971, %v186
    %v973 = vmul.f32 %v971, %v187
    %v974 = vmul.f32 %v971, %v188
    %v975 = vmul.f32 %v971, %v190
    %v976 = vmul.f32 %v971, %v191
    %v977 = vmul.f32 %v971, %v192
    %984 = vrot.lane.b32.xlu0 %v972, 125
    %v985 = vpop.permute.xlu0 %984
    %986 = vrot.lane.b32.xlu0 %v973, 125
    %v987 = vpop.permute.xlu0 %986
    %988 = vrot.lane.b32.xlu0 %v974, 125
    %v989 = vpop.permute.xlu0 %988
    %990 = vrot.lane.b32.xlu0 %v975, 125
    %v991 = vpop.permute.xlu0 %990
    %992 = vrot.lane.b32.xlu0 %v976, 125
    %v993 = vpop.permute.xlu0 %992
    %994 = vrot.lane.b32.xlu0 %v977, 125
    %v995 = vpop.permute.xlu0 %994
    %v996 = vsel %vm419, %v985, %v987
    %v997 = vsel %vm419, %v987, %v989
    %v998 = vsel %vm419, %v991, %v993
    %v999 = vsel %vm419, %v993, %v995
    %v1006 = vadd.f32 %v922, %v996
    %v1007 = vadd.f32 %v923, %v997
    %v1008 = vadd.f32 %v924, %v989
    %v1009 = vadd.f32 %v925, %v998
    %v1010 = vadd.f32 %v926, %v999
    %v1011 = vadd.f32 %v927, %v995
    %s1012 = sld [smem:[#allocation8 + $0xb]]
    %s1013 = sld [smem:[#allocation8 + $0x3c]]
    %v1014 = vstv %s1012
    %v1015 = vmul.f32 %v1014, %v79
    %v1016 = vmul.f32 %v1014, %v86
    %v1017 = vmul.f32 %v1014, %v93
    %v1018 = vmul.f32 %v1014, %v108
    %v1019 = vmul.f32 %v1014, %v115
    %v1020 = vmul.f32 %v1014, %v122
    %1027 = vrot.lane.b32.xlu0 %v1015, 124
    %v1028 = vpop.permute.xlu0 %1027
    %1029 = vrot.lane.b32.xlu0 %v1016, 124
    %v1030 = vpop.permute.xlu0 %1029
    %1031 = vrot.lane.b32.xlu0 %v1017, 124
    %v1032 = vpop.permute.xlu0 %1031
    %1033 = vrot.lane.b32.xlu0 %v1018, 124
    %v1034 = vpop.permute.xlu0 %1033
    %1035 = vrot.lane.b32.xlu0 %v1019, 124
    %v1036 = vpop.permute.xlu0 %1035
    %1037 = vrot.lane.b32.xlu0 %v1020, 124
    %v1038 = vpop.permute.xlu0 %1037
    %v1039 = vsel %vm504, %v1028, %v1030
    %v1040 = vsel %vm504, %v1030, %v1032
    %v1041 = vsel %vm504, %v1034, %v1036
    %v1042 = vsel %vm504, %v1036, %v1038
    %v1049 = vadd.f32 %v965, %v1039
    %v1050 = vadd.f32 %v966, %v1040
    %v1051 = vadd.f32 %v967, %v1032
    %v1052 = vadd.f32 %v968, %v1041
    %v1053 = vadd.f32 %v969, %v1042
    %v1054 = vadd.f32 %v970, %v1038
    %v1055 = vstv %s1013
    %v1056 = vmul.f32 %v1055, %v186
    %v1057 = vmul.f32 %v1055, %v187
    %v1058 = vmul.f32 %v1055, %v188
    %v1059 = vmul.f32 %v1055, %v190
    %v1060 = vmul.f32 %v1055, %v191
    %v1061 = vmul.f32 %v1055, %v192
    %1068 = vrot.lane.b32.xlu0 %v1056, 124
    %v1069 = vpop.permute.xlu0 %1068
    %1070 = vrot.lane.b32.xlu0 %v1057, 124
    %v1071 = vpop.permute.xlu0 %1070
    %1072 = vrot.lane.b32.xlu0 %v1058, 124
    %v1073 = vpop.permute.xlu0 %1072
    %1074 = vrot.lane.b32.xlu0 %v1059, 124
    %v1075 = vpop.permute.xlu0 %1074
    %1076 = vrot.lane.b32.xlu0 %v1060, 124
    %v1077 = vpop.permute.xlu0 %1076
    %1078 = vrot.lane.b32.xlu0 %v1061, 124
    %v1079 = vpop.permute.xlu0 %1078
    %v1080 = vsel %vm504, %v1069, %v1071
    %v1081 = vsel %vm504, %v1071, %v1073
    %v1082 = vsel %vm504, %v1075, %v1077
    %v1083 = vsel %vm504, %v1077, %v1079
    %v1090 = vadd.f32 %v1006, %v1080
    %v1091 = vadd.f32 %v1007, %v1081
    %v1092 = vadd.f32 %v1008, %v1073
    %v1093 = vadd.f32 %v1009, %v1082
    %v1094 = vadd.f32 %v1010, %v1083
    %v1095 = vadd.f32 %v1011, %v1079
    %s1096 = sld [smem:[#allocation8 + $0xc]]
    %s1097 = sld [smem:[#allocation8 + $0x3d]]
    %v1098 = vstv %s1096
    %v1099 = vmul.f32 %v1098, %v79
    %v1100 = vmul.f32 %v1098, %v86
    %v1101 = vmul.f32 %v1098, %v93
    %v1102 = vmul.f32 %v1098, %v108
    %v1103 = vmul.f32 %v1098, %v115
    %v1104 = vmul.f32 %v1098, %v122
    %1111 = vrot.lane.b32.xlu0 %v1099, 123
    %v1112 = vpop.permute.xlu0 %1111
    %1113 = vrot.lane.b32.xlu0 %v1100, 123
    %v1114 = vpop.permute.xlu0 %1113
    %1115 = vrot.lane.b32.xlu0 %v1101, 123
    %v1116 = vpop.permute.xlu0 %1115
    %1117 = vrot.lane.b32.xlu0 %v1102, 123
    %v1118 = vpop.permute.xlu0 %1117
    %1119 = vrot.lane.b32.xlu0 %v1103, 123
    %v1120 = vpop.permute.xlu0 %1119
    %1121 = vrot.lane.b32.xlu0 %v1104, 123
    %v1122 = vpop.permute.xlu0 %1121
    %v1123 = vsel %vm589, %v1112, %v1114
    %v1124 = vsel %vm589, %v1114, %v1116
    %v1125 = vsel %vm589, %v1118, %v1120
    %v1126 = vsel %vm589, %v1120, %v1122
    %v1133 = vadd.f32 %v1049, %v1123
    %v1134 = vadd.f32 %v1050, %v1124
    %v1135 = vadd.f32 %v1051, %v1116
    %v1136 = vadd.f32 %v1052, %v1125
    %v1137 = vadd.f32 %v1053, %v1126
    %v1138 = vadd.f32 %v1054, %v1122
    %v1139 = vstv %s1097
    %v1140 = vmul.f32 %v1139, %v186
    %v1141 = vmul.f32 %v1139, %v187
    %v1142 = vmul.f32 %v1139, %v188
    %v1143 = vmul.f32 %v1139, %v190
    %v1144 = vmul.f32 %v1139, %v191
    %v1145 = vmul.f32 %v1139, %v192
    %1152 = vrot.lane.b32.xlu0 %v1140, 123
    %v1153 = vpop.permute.xlu0 %1152
    %1154 = vrot.lane.b32.xlu0 %v1141, 123
    %v1155 = vpop.permute.xlu0 %1154
    %1156 = vrot.lane.b32.xlu0 %v1142, 123
    %v1157 = vpop.permute.xlu0 %1156
    %1158 = vrot.lane.b32.xlu0 %v1143, 123
    %v1159 = vpop.permute.xlu0 %1158
    %1160 = vrot.lane.b32.xlu0 %v1144, 123
    %v1161 = vpop.permute.xlu0 %1160
    %1162 = vrot.lane.b32.xlu0 %v1145, 123
    %v1163 = vpop.permute.xlu0 %1162
    %v1164 = vsel %vm589, %v1153, %v1155
    %v1165 = vsel %vm589, %v1155, %v1157
    %v1166 = vsel %vm589, %v1159, %v1161
    %v1167 = vsel %vm589, %v1161, %v1163
    %v1174 = vadd.f32 %v1090, %v1164
    %v1175 = vadd.f32 %v1091, %v1165
    %v1176 = vadd.f32 %v1092, %v1157
    %v1177 = vadd.f32 %v1093, %v1166
    %v1178 = vadd.f32 %v1094, %v1167
    %v1179 = vadd.f32 %v1095, %v1163
    %s1180 = sld [smem:[#allocation8 + $0xd]]
    %s1181 = sld [smem:[#allocation8 + $0x3e]]
    %v1182 = vstv %s1180
    %v1183 = vmul.f32 %v1182, %v79
    %v1184 = vmul.f32 %v1182, %v86
    %v1185 = vmul.f32 %v1182, %v93
    %v1186 = vmul.f32 %v1182, %v108
    %v1187 = vmul.f32 %v1182, %v115
    %v1188 = vmul.f32 %v1182, %v122
    %1195 = vrot.lane.b32.xlu0 %v1183, 122
    %v1196 = vpop.permute.xlu0 %1195
    %1197 = vrot.lane.b32.xlu0 %v1184, 122
    %v1198 = vpop.permute.xlu0 %1197
    %1199 = vrot.lane.b32.xlu0 %v1185, 122
    %v1200 = vpop.permute.xlu0 %1199
    %1201 = vrot.lane.b32.xlu0 %v1186, 122
    %v1202 = vpop.permute.xlu0 %1201
    %1203 = vrot.lane.b32.xlu0 %v1187, 122
    %v1204 = vpop.permute.xlu0 %1203
    %1205 = vrot.lane.b32.xlu0 %v1188, 122
    %v1206 = vpop.permute.xlu0 %1205
    %v1207 = vsel %vm674, %v1196, %v1198
    %v1208 = vsel %vm674, %v1198, %v1200
    %v1209 = vsel %vm674, %v1202, %v1204
    %v1210 = vsel %vm674, %v1204, %v1206
    %v1217 = vadd.f32 %v1133, %v1207
    %v1218 = vadd.f32 %v1134, %v1208
    %v1219 = vadd.f32 %v1135, %v1200
    %v1220 = vadd.f32 %v1136, %v1209
    %v1221 = vadd.f32 %v1137, %v1210
    %v1222 = vadd.f32 %v1138, %v1206
    %v1223 = vstv %s1181
    %v1224 = vmul.f32 %v1223, %v186
    %v1225 = vmul.f32 %v1223, %v187
    %v1226 = vmul.f32 %v1223, %v188
    %v1227 = vmul.f32 %v1223, %v190
    %v1228 = vmul.f32 %v1223, %v191
    %v1229 = vmul.f32 %v1223, %v192
    %1236 = vrot.lane.b32.xlu0 %v1224, 122
    %v1237 = vpop.permute.xlu0 %1236
    %1238 = vrot.lane.b32.xlu0 %v1225, 122
    %v1239 = vpop.permute.xlu0 %1238
    %1240 = vrot.lane.b32.xlu0 %v1226, 122
    %v1241 = vpop.permute.xlu0 %1240
    %1242 = vrot.lane.b32.xlu0 %v1227, 122
    %v1243 = vpop.permute.xlu0 %1242
    %1244 = vrot.lane.b32.xlu0 %v1228, 122
    %v1245 = vpop.permute.xlu0 %1244
    %1246 = vrot.lane.b32.xlu0 %v1229, 122
    %v1247 = vpop.permute.xlu0 %1246
    %v1248 = vsel %vm674, %v1237, %v1239
    %v1249 = vsel %vm674, %v1239, %v1241
    %v1250 = vsel %vm674, %v1243, %v1245
    %v1251 = vsel %vm674, %v1245, %v1247
    %v1258 = vadd.f32 %v1174, %v1248
    %v1259 = vadd.f32 %v1175, %v1249
    %v1260 = vadd.f32 %v1176, %v1241
    %v1261 = vadd.f32 %v1177, %v1250
    %v1262 = vadd.f32 %v1178, %v1251
    %v1263 = vadd.f32 %v1179, %v1247
    %s1264 = sld [smem:[#allocation8 + $0xe]]
    %s1265 = sld [smem:[#allocation8 + $0x3f]]
    %v1266 = vstv %s1264
    %v1267 = vmul.f32 %v1266, %v79
    %v1268 = vmul.f32 %v1266, %v86
    %v1269 = vmul.f32 %v1266, %v93
    %v1270 = vmul.f32 %v1266, %v101
    %v1271 = vmul.f32 %v1266, %v108
    %v1272 = vmul.f32 %v1266, %v115
    %v1273 = vmul.f32 %v1266, %v122
    %v1274 = vmul.f32 %v1266, %v129
    %1283 = vrot.lane.b32.xlu0 %v1267, 84
    %v1284 = vpop.permute.xlu0 %1283
    %1285 = vrot.lane.b32.xlu0 %v1268, 84
    %v1286 = vpop.permute.xlu0 %1285
    %1287 = vrot.lane.b32.xlu0 %v1269, 84
    %v1288 = vpop.permute.xlu0 %1287
    %1289 = vrot.lane.b32.xlu0 %v1270, 84
    %v1290 = vpop.permute.xlu0 %1289
    %1291 = vrot.lane.b32.xlu0 %v1271, 84
    %v1292 = vpop.permute.xlu0 %1291
    %1293 = vrot.lane.b32.xlu0 %v1272, 84
    %v1294 = vpop.permute.xlu0 %1293
    %1295 = vrot.lane.b32.xlu0 %v1273, 84
    %v1296 = vpop.permute.xlu0 %1295
    %1297 = vrot.lane.b32.xlu0 %v1274, 84
    %v1298 = vpop.permute.xlu0 %1297
    %vm1299 = vcmask 687104
    %v1300 = vsel %vm1299, %v1284, %v1286
    %v1301 = vsel %vm1299, %v1286, %v1288
    %v1302 = vsel %vm1299, %v1288, %v1290
    %v1303 = vsel %vm1299, %v1292, %v1294
    %v1304 = vsel %vm1299, %v1294, %v1296
    %v1305 = vsel %vm1299, %v1296, %v1298
    %v1312 = vadd.f32 %v685, %v1300
    %v1313 = vadd.f32 %v686, %v1301
    %v1314 = vadd.f32 %v687, %v1302
    %v1315 = vadd.f32 %v688, %v1303
    %v1316 = vadd.f32 %v689, %v1304
    %v1317 = vadd.f32 %v690, %v1305
    %v1318 = vstv %s1265
    %v1319 = vmul.f32 %v1318, %v186
    %v1320 = vmul.f32 %v1318, %v187
    %v1321 = vmul.f32 %v1318, %v188
    %v1322 = vmul.f32 %v1318, %v189
    %v1323 = vmul.f32 %v1318, %v190
    %v1324 = vmul.f32 %v1318, %v191
    %v1325 = vmul.f32 %v1318, %v192
    %v1326 = vmul.f32 %v1318, %v193
    %1335 = vrot.lane.b32.xlu0 %v1319, 84
    %v1336 = vpop.permute.xlu0 %1335
    %1337 = vrot.lane.b32.xlu0 %v1320, 84
    %v1338 = vpop.permute.xlu0 %1337
    %1339 = vrot.lane.b32.xlu0 %v1321, 84
    %v1340 = vpop.permute.xlu0 %1339
    %1341 = vrot.lane.b32.xlu0 %v1322, 84
    %v1342 = vpop.permute.xlu0 %1341
    %1343 = vrot.lane.b32.xlu0 %v1323, 84
    %v1344 = vpop.permute.xlu0 %1343
    %1345 = vrot.lane.b32.xlu0 %v1324, 84
    %v1346 = vpop.permute.xlu0 %1345
    %1347 = vrot.lane.b32.xlu0 %v1325, 84
    %v1348 = vpop.permute.xlu0 %1347
    %1349 = vrot.lane.b32.xlu0 %v1326, 84
    %v1350 = vpop.permute.xlu0 %1349
    %v1351 = vsel %vm1299, %v1336, %v1338
    %v1352 = vsel %vm1299, %v1338, %v1340
    %v1353 = vsel %vm1299, %v1340, %v1342
    %v1354 = vsel %vm1299, %v1344, %v1346
    %v1355 = vsel %vm1299, %v1346, %v1348
    %v1356 = vsel %vm1299, %v1348, %v1350
    %v1363 = vadd.f32 %v726, %v1351
    %v1364 = vadd.f32 %v727, %v1352
    %v1365 = vadd.f32 %v728, %v1353
    %v1366 = vadd.f32 %v729, %v1354
    %v1367 = vadd.f32 %v730, %v1355
    %v1368 = vadd.f32 %v731, %v1356
    %s1369 = sld [smem:[#allocation8 + $0xf]]
    %s1370 = sld [smem:[#allocation8 + $0x40]]
    %v1371 = vstv %s1369
    %v1372 = vmul.f32 %v1371, %v79
    %v1373 = vmul.f32 %v1371, %v86
    %v1374 = vmul.f32 %v1371, %v93
    %v1375 = vmul.f32 %v1371, %v101
    %v1376 = vmul.f32 %v1371, %v108
    %v1377 = vmul.f32 %v1371, %v115
    %v1378 = vmul.f32 %v1371, %v122
    %v1379 = vmul.f32 %v1371, %v129
    %1388 = vrot.lane.b32.xlu0 %v1372, 83
    %v1389 = vpop.permute.xlu0 %1388
    %1390 = vrot.lane.b32.xlu0 %v1373, 83
    %v1391 = vpop.permute.xlu0 %1390
    %1392 = vrot.lane.b32.xlu0 %v1374, 83
    %v1393 = vpop.permute.xlu0 %1392
    %1394 = vrot.lane.b32.xlu0 %v1375, 83
    %v1395 = vpop.permute.xlu0 %1394
    %1396 = vrot.lane.b32.xlu0 %v1376, 83
    %v1397 = vpop.permute.xlu0 %1396
    %1398 = vrot.lane.b32.xlu0 %v1377, 83
    %v1399 = vpop.permute.xlu0 %1398
    %1400 = vrot.lane.b32.xlu0 %v1378, 83
    %v1401 = vpop.permute.xlu0 %1400
    %1402 = vrot.lane.b32.xlu0 %v1379, 83
    %v1403 = vpop.permute.xlu0 %1402
    %vm1404 = vcmask 678912
    %v1405 = vsel %vm1404, %v1389, %v1391
    %v1406 = vsel %vm1404, %v1391, %v1393
    %v1407 = vsel %vm1404, %v1393, %v1395
    %v1408 = vsel %vm1404, %v1397, %v1399
    %v1409 = vsel %vm1404, %v1399, %v1401
    %v1410 = vsel %vm1404, %v1401, %v1403
    %v1417 = vadd.f32 %v1312, %v1405
    %v1418 = vadd.f32 %v1313, %v1406
    %v1419 = vadd.f32 %v1314, %v1407
    %v1420 = vadd.f32 %v1315, %v1408
    %v1421 = vadd.f32 %v1316, %v1409
    %v1422 = vadd.f32 %v1317, %v1410
    %v1423 = vstv %s1370
    %v1424 = vmul.f32 %v1423, %v186
    %v1425 = vmul.f32 %v1423, %v187
    %v1426 = vmul.f32 %v1423, %v188
    %v1427 = vmul.f32 %v1423, %v189
    %v1428 = vmul.f32 %v1423, %v190
    %v1429 = vmul.f32 %v1423, %v191
    %v1430 = vmul.f32 %v1423, %v192
    %v1431 = vmul.f32 %v1423, %v193
    %1440 = vrot.lane.b32.xlu0 %v1424, 83
    %v1441 = vpop.permute.xlu0 %1440
    %1442 = vrot.lane.b32.xlu0 %v1425, 83
    %v1443 = vpop.permute.xlu0 %1442
    %1444 = vrot.lane.b32.xlu0 %v1426, 83
    %v1445 = vpop.permute.xlu0 %1444
    %1446 = vrot.lane.b32.xlu0 %v1427, 83
    %v1447 = vpop.permute.xlu0 %1446
    %1448 = vrot.lane.b32.xlu0 %v1428, 83
    %v1449 = vpop.permute.xlu0 %1448
    %1450 = vrot.lane.b32.xlu0 %v1429, 83
    %v1451 = vpop.permute.xlu0 %1450
    %1452 = vrot.lane.b32.xlu0 %v1430, 83
    %v1453 = vpop.permute.xlu0 %1452
    %1454 = vrot.lane.b32.xlu0 %v1431, 83
    %v1455 = vpop.permute.xlu0 %1454
    %v1456 = vsel %vm1404, %v1441, %v1443
    %v1457 = vsel %vm1404, %v1443, %v1445
    %v1458 = vsel %vm1404, %v1445, %v1447
    %v1459 = vsel %vm1404, %v1449, %v1451
    %v1460 = vsel %vm1404, %v1451, %v1453
    %v1461 = vsel %vm1404, %v1453, %v1455
    %v1468 = vadd.f32 %v1363, %v1456
    %v1469 = vadd.f32 %v1364, %v1457
    %v1470 = vadd.f32 %v1365, %v1458
    %v1471 = vadd.f32 %v1366, %v1459
    %v1472 = vadd.f32 %v1367, %v1460
    %v1473 = vadd.f32 %v1368, %v1461
    %s1474 = sld [smem:[#allocation8 + $0x10]]
    %s1475 = sld [smem:[#allocation8 + $0x41]]
    %v1476 = vstv %s1474
    %v1477 = vmul.f32 %v1476, %v79
    %v1478 = vmul.f32 %v1476, %v86
    %v1479 = vmul.f32 %v1476, %v93
    %v1480 = vmul.f32 %v1476, %v101
    %v1481 = vmul.f32 %v1476, %v108
    %v1482 = vmul.f32 %v1476, %v115
    %v1483 = vmul.f32 %v1476, %v122
    %v1484 = vmul.f32 %v1476, %v129
    %1493 = vrot.lane.b32.xlu0 %v1477, 82
    %v1494 = vpop.permute.xlu0 %1493
    %1495 = vrot.lane.b32.xlu0 %v1478, 82
    %v1496 = vpop.permute.xlu0 %1495
    %1497 = vrot.lane.b32.xlu0 %v1479, 82
    %v1498 = vpop.permute.xlu0 %1497
    %1499 = vrot.lane.b32.xlu0 %v1480, 82
    %v1500 = vpop.permute.xlu0 %1499
    %1501 = vrot.lane.b32.xlu0 %v1481, 82
    %v1502 = vpop.permute.xlu0 %1501
    %1503 = vrot.lane.b32.xlu0 %v1482, 82
    %v1504 = vpop.permute.xlu0 %1503
    %1505 = vrot.lane.b32.xlu0 %v1483, 82
    %v1506 = vpop.permute.xlu0 %1505
    %1507 = vrot.lane.b32.xlu0 %v1484, 82
    %v1508 = vpop.permute.xlu0 %1507
    %vm1509 = vcmask 670720
    %v1510 = vsel %vm1509, %v1494, %v1496
    %v1511 = vsel %vm1509, %v1496, %v1498
    %v1512 = vsel %vm1509, %v1498, %v1500
    %v1513 = vsel %vm1509, %v1502, %v1504
    %v1514 = vsel %vm1509, %v1504, %v1506
    %v1515 = vsel %vm1509, %v1506, %v1508
    %v1522 = vadd.f32 %v1417, %v1510
    %v1523 = vadd.f32 %v1418, %v1511
    %v1524 = vadd.f32 %v1419, %v1512
    %v1525 = vadd.f32 %v1420, %v1513
    %v1526 = vadd.f32 %v1421, %v1514
    %v1527 = vadd.f32 %v1422, %v1515
    %v1528 = vstv %s1475
    %v1529 = vmul.f32 %v1528, %v186
    %v1530 = vmul.f32 %v1528, %v187
    %v1531 = vmul.f32 %v1528, %v188
    %v1532 = vmul.f32 %v1528, %v189
    %v1533 = vmul.f32 %v1528, %v190
    %v1534 = vmul.f32 %v1528, %v191
    %v1535 = vmul.f32 %v1528, %v192
    %v1536 = vmul.f32 %v1528, %v193
    %1545 = vrot.lane.b32.xlu0 %v1529, 82
    %v1546 = vpop.permute.xlu0 %1545
    %1547 = vrot.lane.b32.xlu0 %v1530, 82
    %v1548 = vpop.permute.xlu0 %1547
    %1549 = vrot.lane.b32.xlu0 %v1531, 82
    %v1550 = vpop.permute.xlu0 %1549
    %1551 = vrot.lane.b32.xlu0 %v1532, 82
    %v1552 = vpop.permute.xlu0 %1551
    %1553 = vrot.lane.b32.xlu0 %v1533, 82
    %v1554 = vpop.permute.xlu0 %1553
    %1555 = vrot.lane.b32.xlu0 %v1534, 82
    %v1556 = vpop.permute.xlu0 %1555
    %1557 = vrot.lane.b32.xlu0 %v1535, 82
    %v1558 = vpop.permute.xlu0 %1557
    %1559 = vrot.lane.b32.xlu0 %v1536, 82
    %v1560 = vpop.permute.xlu0 %1559
    %v1561 = vsel %vm1509, %v1546, %v1548
    %v1562 = vsel %vm1509, %v1548, %v1550
    %v1563 = vsel %vm1509, %v1550, %v1552
    %v1564 = vsel %vm1509, %v1554, %v1556
    %v1565 = vsel %vm1509, %v1556, %v1558
    %v1566 = vsel %vm1509, %v1558, %v1560
    %v1573 = vadd.f32 %v1468, %v1561
    %v1574 = vadd.f32 %v1469, %v1562
    %v1575 = vadd.f32 %v1470, %v1563
    %v1576 = vadd.f32 %v1471, %v1564
    %v1577 = vadd.f32 %v1472, %v1565
    %v1578 = vadd.f32 %v1473, %v1566
    %s1579 = sld [smem:[#allocation8 + $0x11]]
    %s1580 = sld [smem:[#allocation8 + $0x42]]
    %v1581 = vstv %s1579
    %v1582 = vmul.f32 %v1581, %v79
    %v1583 = vmul.f32 %v1581, %v86
    %v1584 = vmul.f32 %v1581, %v93
    %v1585 = vmul.f32 %v1581, %v101
    %v1586 = vmul.f32 %v1581, %v108
    %v1587 = vmul.f32 %v1581, %v115
    %v1588 = vmul.f32 %v1581, %v122
    %v1589 = vmul.f32 %v1581, %v129
    %1598 = vrot.lane.b32.xlu0 %v1582, 81
    %v1599 = vpop.permute.xlu0 %1598
    %1600 = vrot.lane.b32.xlu0 %v1583, 81
    %v1601 = vpop.permute.xlu0 %1600
    %1602 = vrot.lane.b32.xlu0 %v1584, 81
    %v1603 = vpop.permute.xlu0 %1602
    %1604 = vrot.lane.b32.xlu0 %v1585, 81
    %v1605 = vpop.permute.xlu0 %1604
    %1606 = vrot.lane.b32.xlu0 %v1586, 81
    %v1607 = vpop.permute.xlu0 %1606
    %1608 = vrot.lane.b32.xlu0 %v1587, 81
    %v1609 = vpop.permute.xlu0 %1608
    %1610 = vrot.lane.b32.xlu0 %v1588, 81
    %v1611 = vpop.permute.xlu0 %1610
    %1612 = vrot.lane.b32.xlu0 %v1589, 81
    %v1613 = vpop.permute.xlu0 %1612
    %vm1614 = vcmask 662528
    %v1615 = vsel %vm1614, %v1599, %v1601
    %v1616 = vsel %vm1614, %v1601, %v1603
    %v1617 = vsel %vm1614, %v1603, %v1605
    %v1618 = vsel %vm1614, %v1607, %v1609
    %v1619 = vsel %vm1614, %v1609, %v1611
    %v1620 = vsel %vm1614, %v1611, %v1613
    %v1627 = vadd.f32 %v1522, %v1615
    %v1628 = vadd.f32 %v1523, %v1616
    %v1629 = vadd.f32 %v1524, %v1617
    %v1630 = vadd.f32 %v1525, %v1618
    %v1631 = vadd.f32 %v1526, %v1619
    %v1632 = vadd.f32 %v1527, %v1620
    %v1633 = vstv %s1580
    %v1634 = vmul.f32 %v1633, %v186
    %v1635 = vmul.f32 %v1633, %v187
    %v1636 = vmul.f32 %v1633, %v188
    %v1637 = vmul.f32 %v1633, %v189
    %v1638 = vmul.f32 %v1633, %v190
    %v1639 = vmul.f32 %v1633, %v191
    %v1640 = vmul.f32 %v1633, %v192
    %v1641 = vmul.f32 %v1633, %v193
    %1650 = vrot.lane.b32.xlu0 %v1634, 81
    %v1651 = vpop.permute.xlu0 %1650
    %1652 = vrot.lane.b32.xlu0 %v1635, 81
    %v1653 = vpop.permute.xlu0 %1652
    %1654 = vrot.lane.b32.xlu0 %v1636, 81
    %v1655 = vpop.permute.xlu0 %1654
    %1656 = vrot.lane.b32.xlu0 %v1637, 81
    %v1657 = vpop.permute.xlu0 %1656
    %1658 = vrot.lane.b32.xlu0 %v1638, 81
    %v1659 = vpop.permute.xlu0 %1658
    %1660 = vrot.lane.b32.xlu0 %v1639, 81
    %v1661 = vpop.permute.xlu0 %1660
    %1662 = vrot.lane.b32.xlu0 %v1640, 81
    %v1663 = vpop.permute.xlu0 %1662
    %1664 = vrot.lane.b32.xlu0 %v1641, 81
    %v1665 = vpop.permute.xlu0 %1664
    %v1666 = vsel %vm1614, %v1651, %v1653
    %v1667 = vsel %vm1614, %v1653, %v1655
    %v1668 = vsel %vm1614, %v1655, %v1657
    %v1669 = vsel %vm1614, %v1659, %v1661
    %v1670 = vsel %vm1614, %v1661, %v1663
    %v1671 = vsel %vm1614, %v1663, %v1665
    %v1678 = vadd.f32 %v1573, %v1666
    %v1679 = vadd.f32 %v1574, %v1667
    %v1680 = vadd.f32 %v1575, %v1668
    %v1681 = vadd.f32 %v1576, %v1669
    %v1682 = vadd.f32 %v1577, %v1670
    %v1683 = vadd.f32 %v1578, %v1671
    %s1684 = sld [smem:[#allocation8 + $0x12]]
    %s1685 = sld [smem:[#allocation8 + $0x43]]
    %v1686 = vstv %s1684
    %v1687 = vmul.f32 %v1686, %v79
    %v1688 = vmul.f32 %v1686, %v86
    %v1689 = vmul.f32 %v1686, %v93
    %v1690 = vmul.f32 %v1686, %v101
    %v1691 = vmul.f32 %v1686, %v108
    %v1692 = vmul.f32 %v1686, %v115
    %v1693 = vmul.f32 %v1686, %v122
    %v1694 = vmul.f32 %v1686, %v129
    %1703 = vrot.lane.b32.xlu0 %v1687, 80
    %v1704 = vpop.permute.xlu0 %1703
    %1705 = vrot.lane.b32.xlu0 %v1688, 80
    %v1706 = vpop.permute.xlu0 %1705
    %1707 = vrot.lane.b32.xlu0 %v1689, 80
    %v1708 = vpop.permute.xlu0 %1707
    %1709 = vrot.lane.b32.xlu0 %v1690, 80
    %v1710 = vpop.permute.xlu0 %1709
    %1711 = vrot.lane.b32.xlu0 %v1691, 80
    %v1712 = vpop.permute.xlu0 %1711
    %1713 = vrot.lane.b32.xlu0 %v1692, 80
    %v1714 = vpop.permute.xlu0 %1713
    %1715 = vrot.lane.b32.xlu0 %v1693, 80
    %v1716 = vpop.permute.xlu0 %1715
    %1717 = vrot.lane.b32.xlu0 %v1694, 80
    %v1718 = vpop.permute.xlu0 %1717
    %vm1719 = vcmask 654336
    %v1720 = vsel %vm1719, %v1704, %v1706
    %v1721 = vsel %vm1719, %v1706, %v1708
    %v1722 = vsel %vm1719, %v1708, %v1710
    %v1723 = vsel %vm1719, %v1712, %v1714
    %v1724 = vsel %vm1719, %v1714, %v1716
    %v1725 = vsel %vm1719, %v1716, %v1718
    %v1732 = vadd.f32 %v1627, %v1720
    %v1733 = vadd.f32 %v1628, %v1721
    %v1734 = vadd.f32 %v1629, %v1722
    %v1735 = vadd.f32 %v1630, %v1723
    %v1736 = vadd.f32 %v1631, %v1724
    %v1737 = vadd.f32 %v1632, %v1725
    %v1738 = vstv %s1685
    %v1739 = vmul.f32 %v1738, %v186
    %v1740 = vmul.f32 %v1738, %v187
    %v1741 = vmul.f32 %v1738, %v188
    %v1742 = vmul.f32 %v1738, %v189
    %v1743 = vmul.f32 %v1738, %v190
    %v1744 = vmul.f32 %v1738, %v191
    %v1745 = vmul.f32 %v1738, %v192
    %v1746 = vmul.f32 %v1738, %v193
    %1755 = vrot.lane.b32.xlu0 %v1739, 80
    %v1756 = vpop.permute.xlu0 %1755
    %1757 = vrot.lane.b32.xlu0 %v1740, 80
    %v1758 = vpop.permute.xlu0 %1757
    %1759 = vrot.lane.b32.xlu0 %v1741, 80
    %v1760 = vpop.permute.xlu0 %1759
    %1761 = vrot.lane.b32.xlu0 %v1742, 80
    %v1762 = vpop.permute.xlu0 %1761
    %1763 = vrot.lane.b32.xlu0 %v1743, 80
    %v1764 = vpop.permute.xlu0 %1763
    %1765 = vrot.lane.b32.xlu0 %v1744, 80
    %v1766 = vpop.permute.xlu0 %1765
    %1767 = vrot.lane.b32.xlu0 %v1745, 80
    %v1768 = vpop.permute.xlu0 %1767
    %1769 = vrot.lane.b32.xlu0 %v1746, 80
    %v1770 = vpop.permute.xlu0 %1769
    %v1771 = vsel %vm1719, %v1756, %v1758
    %v1772 = vsel %vm1719, %v1758, %v1760
    %v1773 = vsel %vm1719, %v1760, %v1762
    %v1774 = vsel %vm1719, %v1764, %v1766
    %v1775 = vsel %vm1719, %v1766, %v1768
    %v1776 = vsel %vm1719, %v1768, %v1770
    %v1783 = vadd.f32 %v1678, %v1771
    %v1784 = vadd.f32 %v1679, %v1772
    %v1785 = vadd.f32 %v1680, %v1773
    %v1786 = vadd.f32 %v1681, %v1774
    %v1787 = vadd.f32 %v1682, %v1775
    %v1788 = vadd.f32 %v1683, %v1776
    %s1789 = sld [smem:[#allocation8 + $0x13]]
    %s1790 = sld [smem:[#allocation8 + $0x44]]
    %v1791 = vstv %s1789
    %v1792 = vmul.f32 %v1791, %v79
    %v1793 = vmul.f32 %v1791, %v86
    %v1794 = vmul.f32 %v1791, %v93
    %v1795 = vmul.f32 %v1791, %v101
    %v1796 = vmul.f32 %v1791, %v108
    %v1797 = vmul.f32 %v1791, %v115
    %v1798 = vmul.f32 %v1791, %v122
    %v1799 = vmul.f32 %v1791, %v129
    %1808 = vrot.lane.b32.xlu0 %v1792, 79
    %v1809 = vpop.permute.xlu0 %1808
    %1810 = vrot.lane.b32.xlu0 %v1793, 79
    %v1811 = vpop.permute.xlu0 %1810
    %1812 = vrot.lane.b32.xlu0 %v1794, 79
    %v1813 = vpop.permute.xlu0 %1812
    %1814 = vrot.lane.b32.xlu0 %v1795, 79
    %v1815 = vpop.permute.xlu0 %1814
    %1816 = vrot.lane.b32.xlu0 %v1796, 79
    %v1817 = vpop.permute.xlu0 %1816
    %1818 = vrot.lane.b32.xlu0 %v1797, 79
    %v1819 = vpop.permute.xlu0 %1818
    %1820 = vrot.lane.b32.xlu0 %v1798, 79
    %v1821 = vpop.permute.xlu0 %1820
    %1822 = vrot.lane.b32.xlu0 %v1799, 79
    %v1823 = vpop.permute.xlu0 %1822
    %vm1824 = vcmask 646144
    %v1825 = vsel %vm1824, %v1809, %v1811
    %v1826 = vsel %vm1824, %v1811, %v1813
    %v1827 = vsel %vm1824, %v1813, %v1815
    %v1828 = vsel %vm1824, %v1817, %v1819
    %v1829 = vsel %vm1824, %v1819, %v1821
    %v1830 = vsel %vm1824, %v1821, %v1823
    %v1837 = vadd.f32 %v1732, %v1825
    %v1838 = vadd.f32 %v1733, %v1826
    %v1839 = vadd.f32 %v1734, %v1827
    %v1840 = vadd.f32 %v1735, %v1828
    %v1841 = vadd.f32 %v1736, %v1829
    %v1842 = vadd.f32 %v1737, %v1830
    %v1843 = vstv %s1790
    %v1844 = vmul.f32 %v1843, %v186
    %v1845 = vmul.f32 %v1843, %v187
    %v1846 = vmul.f32 %v1843, %v188
    %v1847 = vmul.f32 %v1843, %v189
    %v1848 = vmul.f32 %v1843, %v190
    %v1849 = vmul.f32 %v1843, %v191
    %v1850 = vmul.f32 %v1843, %v192
    %v1851 = vmul.f32 %v1843, %v193
    %1860 = vrot.lane.b32.xlu0 %v1844, 79
    %v1861 = vpop.permute.xlu0 %1860
    %1862 = vrot.lane.b32.xlu0 %v1845, 79
    %v1863 = vpop.permute.xlu0 %1862
    %1864 = vrot.lane.b32.xlu0 %v1846, 79
    %v1865 = vpop.permute.xlu0 %1864
    %1866 = vrot.lane.b32.xlu0 %v1847, 79
    %v1867 = vpop.permute.xlu0 %1866
    %1868 = vrot.lane.b32.xlu0 %v1848, 79
    %v1869 = vpop.permute.xlu0 %1868
    %1870 = vrot.lane.b32.xlu0 %v1849, 79
    %v1871 = vpop.permute.xlu0 %1870
    %1872 = vrot.lane.b32.xlu0 %v1850, 79
    %v1873 = vpop.permute.xlu0 %1872
    %1874 = vrot.lane.b32.xlu0 %v1851, 79
    %v1875 = vpop.permute.xlu0 %1874
    %v1876 = vsel %vm1824, %v1861, %v1863
    %v1877 = vsel %vm1824, %v1863, %v1865
    %v1878 = vsel %vm1824, %v1865, %v1867
    %v1879 = vsel %vm1824, %v1869, %v1871
    %v1880 = vsel %vm1824, %v1871, %v1873
    %v1881 = vsel %vm1824, %v1873, %v1875
    %v1888 = vadd.f32 %v1783, %v1876
    %v1889 = vadd.f32 %v1784, %v1877
    %v1890 = vadd.f32 %v1785, %v1878
    %v1891 = vadd.f32 %v1786, %v1879
    %v1892 = vadd.f32 %v1787, %v1880
    %v1893 = vadd.f32 %v1788, %v1881
    %s1894 = sld [smem:[#allocation8 + $0x14]]
    %s1895 = sld [smem:[#allocation8 + $0x45]]
    %v1896 = vstv %s1894
    %v1897 = vmul.f32 %v1896, %v79
    %v1898 = vmul.f32 %v1896, %v86
    %v1899 = vmul.f32 %v1896, %v93
    %v1900 = vmul.f32 %v1896, %v101
    %v1901 = vmul.f32 %v1896, %v108
    %v1902 = vmul.f32 %v1896, %v115
    %v1903 = vmul.f32 %v1896, %v122
    %v1904 = vmul.f32 %v1896, %v129
    %1913 = vrot.lane.b32.xlu0 %v1897, 78
    %v1914 = vpop.permute.xlu0 %1913
    %1915 = vrot.lane.b32.xlu0 %v1898, 78
    %v1916 = vpop.permute.xlu0 %1915
    %1917 = vrot.lane.b32.xlu0 %v1899, 78
    %v1918 = vpop.permute.xlu0 %1917
    %1919 = vrot.lane.b32.xlu0 %v1900, 78
    %v1920 = vpop.permute.xlu0 %1919
    %1921 = vrot.lane.b32.xlu0 %v1901, 78
    %v1922 = vpop.permute.xlu0 %1921
    %1923 = vrot.lane.b32.xlu0 %v1902, 78
    %v1924 = vpop.permute.xlu0 %1923
    %1925 = vrot.lane.b32.xlu0 %v1903, 78
    %v1926 = vpop.permute.xlu0 %1925
    %1927 = vrot.lane.b32.xlu0 %v1904, 78
    %v1928 = vpop.permute.xlu0 %1927
    %vm1929 = vcmask 637952
    %v1930 = vsel %vm1929, %v1914, %v1916
    %v1931 = vsel %vm1929, %v1916, %v1918
    %v1932 = vsel %vm1929, %v1918, %v1920
    %v1933 = vsel %vm1929, %v1922, %v1924
    %v1934 = vsel %vm1929, %v1924, %v1926
    %v1935 = vsel %vm1929, %v1926, %v1928
    %v1942 = vadd.f32 %v1837, %v1930
    %v1943 = vadd.f32 %v1838, %v1931
    %v1944 = vadd.f32 %v1839, %v1932
    %v1945 = vadd.f32 %v1840, %v1933
    %v1946 = vadd.f32 %v1841, %v1934
    %v1947 = vadd.f32 %v1842, %v1935
    %v1948 = vstv %s1895
    %v1949 = vmul.f32 %v1948, %v186
    %v1950 = vmul.f32 %v1948, %v187
    %v1951 = vmul.f32 %v1948, %v188
    %v1952 = vmul.f32 %v1948, %v189
    %v1953 = vmul.f32 %v1948, %v190
    %v1954 = vmul.f32 %v1948, %v191
    %v1955 = vmul.f32 %v1948, %v192
    %v1956 = vmul.f32 %v1948, %v193
    %1965 = vrot.lane.b32.xlu0 %v1949, 78
    %v1966 = vpop.permute.xlu0 %1965
    %1967 = vrot.lane.b32.xlu0 %v1950, 78
    %v1968 = vpop.permute.xlu0 %1967
    %1969 = vrot.lane.b32.xlu0 %v1951, 78
    %v1970 = vpop.permute.xlu0 %1969
    %1971 = vrot.lane.b32.xlu0 %v1952, 78
    %v1972 = vpop.permute.xlu0 %1971
    %1973 = vrot.lane.b32.xlu0 %v1953, 78
    %v1974 = vpop.permute.xlu0 %1973
    %1975 = vrot.lane.b32.xlu0 %v1954, 78
    %v1976 = vpop.permute.xlu0 %1975
    %1977 = vrot.lane.b32.xlu0 %v1955, 78
    %v1978 = vpop.permute.xlu0 %1977
    %1979 = vrot.lane.b32.xlu0 %v1956, 78
    %v1980 = vpop.permute.xlu0 %1979
    %v1981 = vsel %vm1929, %v1966, %v1968
    %v1982 = vsel %vm1929, %v1968, %v1970
    %v1983 = vsel %vm1929, %v1970, %v1972
    %v1984 = vsel %vm1929, %v1974, %v1976
    %v1985 = vsel %vm1929, %v1976, %v1978
    %v1986 = vsel %vm1929, %v1978, %v1980
    %v1993 = vadd.f32 %v1888, %v1981
    %v1994 = vadd.f32 %v1889, %v1982
    %v1995 = vadd.f32 %v1890, %v1983
    %v1996 = vadd.f32 %v1891, %v1984
    %v1997 = vadd.f32 %v1892, %v1985
    %v1998 = vadd.f32 %v1893, %v1986
    %s1999 = sld [smem:[#allocation8 + $0x15]]
    %s2000 = sld [smem:[#allocation8 + $0x46]]
    %v2001 = vstv %s1999
    %v2002 = vmul.f32 %v2001, %v79
    %v2003 = vmul.f32 %v2001, %v86
    %v2004 = vmul.f32 %v2001, %v93
    %v2005 = vmul.f32 %v2001, %v101
    %v2006 = vmul.f32 %v2001, %v108
    %v2007 = vmul.f32 %v2001, %v115
    %v2008 = vmul.f32 %v2001, %v122
    %v2009 = vmul.f32 %v2001, %v129
    %2018 = vrot.lane.b32.xlu0 %v2002, 84
    %v2019 = vpop.permute.xlu0 %2018
    %2020 = vrot.lane.b32.xlu0 %v2003, 84
    %v2021 = vpop.permute.xlu0 %2020
    %2022 = vrot.lane.b32.xlu0 %v2004, 84
    %v2023 = vpop.permute.xlu0 %2022
    %2024 = vrot.lane.b32.xlu0 %v2005, 84
    %v2025 = vpop.permute.xlu0 %2024
    %2026 = vrot.lane.b32.xlu0 %v2006, 84
    %v2027 = vpop.permute.xlu0 %2026
    %2028 = vrot.lane.b32.xlu0 %v2007, 84
    %v2029 = vpop.permute.xlu0 %2028
    %2030 = vrot.lane.b32.xlu0 %v2008, 84
    %v2031 = vpop.permute.xlu0 %2030
    %2032 = vrot.lane.b32.xlu0 %v2009, 84
    %v2033 = vpop.permute.xlu0 %2032
    %v2034 = vsel %vm1299, %v2019, %v2021
    %v2035 = vsel %vm1299, %v2021, %v2023
    %v2036 = vsel %vm1299, %v2023, %v2025
    %v2037 = vsel %vm1299, %v2027, %v2029
    %v2038 = vsel %vm1299, %v2029, %v2031
    %v2039 = vsel %vm1299, %v2031, %v2033
    %v2046 = vadd.f32 %v1217, %v2034
    %v2047 = vadd.f32 %v1218, %v2035
    %v2048 = vadd.f32 %v1219, %v2036
    %v2049 = vadd.f32 %v1220, %v2037
    %v2050 = vadd.f32 %v1221, %v2038
    %v2051 = vadd.f32 %v1222, %v2039
    %v2052 = vstv %s2000
    %v2053 = vmul.f32 %v2052, %v186
    %v2054 = vmul.f32 %v2052, %v187
    %v2055 = vmul.f32 %v2052, %v188
    %v2056 = vmul.f32 %v2052, %v189
    %v2057 = vmul.f32 %v2052, %v190
    %v2058 = vmul.f32 %v2052, %v191
    %v2059 = vmul.f32 %v2052, %v192
    %v2060 = vmul.f32 %v2052, %v193
    %2069 = vrot.lane.b32.xlu0 %v2053, 84
    %v2070 = vpop.permute.xlu0 %2069
    %2071 = vrot.lane.b32.xlu0 %v2054, 84
    %v2072 = vpop.permute.xlu0 %2071
    %2073 = vrot.lane.b32.xlu0 %v2055, 84
    %v2074 = vpop.permute.xlu0 %2073
    %2075 = vrot.lane.b32.xlu0 %v2056, 84
    %v2076 = vpop.permute.xlu0 %2075
    %2077 = vrot.lane.b32.xlu0 %v2057, 84
    %v2078 = vpop.permute.xlu0 %2077
    %2079 = vrot.lane.b32.xlu0 %v2058, 84
    %v2080 = vpop.permute.xlu0 %2079
    %2081 = vrot.lane.b32.xlu0 %v2059, 84
    %v2082 = vpop.permute.xlu0 %2081
    %2083 = vrot.lane.b32.xlu0 %v2060, 84
    %v2084 = vpop.permute.xlu0 %2083
    %v2085 = vsel %vm1299, %v2070, %v2072
    %v2086 = vsel %vm1299, %v2072, %v2074
    %v2087 = vsel %vm1299, %v2074, %v2076
    %v2088 = vsel %vm1299, %v2078, %v2080
    %v2089 = vsel %vm1299, %v2080, %v2082
    %v2090 = vsel %vm1299, %v2082, %v2084
    %v2097 = vadd.f32 %v1258, %v2085
    %v2098 = vadd.f32 %v1259, %v2086
    %v2099 = vadd.f32 %v1260, %v2087
    %v2100 = vadd.f32 %v1261, %v2088
    %v2101 = vadd.f32 %v1262, %v2089
    %v2102 = vadd.f32 %v1263, %v2090
    %s2103 = sld [smem:[#allocation8 + $0x16]]
    %s2104 = sld [smem:[#allocation8 + $0x47]]
    %v2105 = vstv %s2103
    %v2106 = vmul.f32 %v2105, %v79
    %v2107 = vmul.f32 %v2105, %v86
    %v2108 = vmul.f32 %v2105, %v93
    %v2109 = vmul.f32 %v2105, %v101
    %v2110 = vmul.f32 %v2105, %v108
    %v2111 = vmul.f32 %v2105, %v115
    %v2112 = vmul.f32 %v2105, %v122
    %v2113 = vmul.f32 %v2105, %v129
    %2122 = vrot.lane.b32.xlu0 %v2106, 83
    %v2123 = vpop.permute.xlu0 %2122
    %2124 = vrot.lane.b32.xlu0 %v2107, 83
    %v2125 = vpop.permute.xlu0 %2124
    %2126 = vrot.lane.b32.xlu0 %v2108, 83
    %v2127 = vpop.permute.xlu0 %2126
    %2128 = vrot.lane.b32.xlu0 %v2109, 83
    %v2129 = vpop.permute.xlu0 %2128
    %2130 = vrot.lane.b32.xlu0 %v2110, 83
    %v2131 = vpop.permute.xlu0 %2130
    %2132 = vrot.lane.b32.xlu0 %v2111, 83
    %v2133 = vpop.permute.xlu0 %2132
    %2134 = vrot.lane.b32.xlu0 %v2112, 83
    %v2135 = vpop.permute.xlu0 %2134
    %2136 = vrot.lane.b32.xlu0 %v2113, 83
    %v2137 = vpop.permute.xlu0 %2136
    %v2138 = vsel %vm1404, %v2123, %v2125
    %v2139 = vsel %vm1404, %v2125, %v2127
    %v2140 = vsel %vm1404, %v2127, %v2129
    %v2141 = vsel %vm1404, %v2131, %v2133
    %v2142 = vsel %vm1404, %v2133, %v2135
    %v2143 = vsel %vm1404, %v2135, %v2137
    %v2150 = vadd.f32 %v2046, %v2138
    %v2151 = vadd.f32 %v2047, %v2139
    %v2152 = vadd.f32 %v2048, %v2140
    %v2153 = vadd.f32 %v2049, %v2141
    %v2154 = vadd.f32 %v2050, %v2142
    %v2155 = vadd.f32 %v2051, %v2143
    %v2156 = vstv %s2104
    %v2157 = vmul.f32 %v2156, %v186
    %v2158 = vmul.f32 %v2156, %v187
    %v2159 = vmul.f32 %v2156, %v188
    %v2160 = vmul.f32 %v2156, %v189
    %v2161 = vmul.f32 %v2156, %v190
    %v2162 = vmul.f32 %v2156, %v191
    %v2163 = vmul.f32 %v2156, %v192
    %v2164 = vmul.f32 %v2156, %v193
    %2173 = vrot.lane.b32.xlu0 %v2157, 83
    %v2174 = vpop.permute.xlu0 %2173
    %2175 = vrot.lane.b32.xlu0 %v2158, 83
    %v2176 = vpop.permute.xlu0 %2175
    %2177 = vrot.lane.b32.xlu0 %v2159, 83
    %v2178 = vpop.permute.xlu0 %2177
    %2179 = vrot.lane.b32.xlu0 %v2160, 83
    %v2180 = vpop.permute.xlu0 %2179
    %2181 = vrot.lane.b32.xlu0 %v2161, 83
    %v2182 = vpop.permute.xlu0 %2181
    %2183 = vrot.lane.b32.xlu0 %v2162, 83
    %v2184 = vpop.permute.xlu0 %2183
    %2185 = vrot.lane.b32.xlu0 %v2163, 83
    %v2186 = vpop.permute.xlu0 %2185
    %2187 = vrot.lane.b32.xlu0 %v2164, 83
    %v2188 = vpop.permute.xlu0 %2187
    %v2189 = vsel %vm1404, %v2174, %v2176
    %v2190 = vsel %vm1404, %v2176, %v2178
    %v2191 = vsel %vm1404, %v2178, %v2180
    %v2192 = vsel %vm1404, %v2182, %v2184
    %v2193 = vsel %vm1404, %v2184, %v2186
    %v2194 = vsel %vm1404, %v2186, %v2188
    %v2201 = vadd.f32 %v2097, %v2189
    %v2202 = vadd.f32 %v2098, %v2190
    %v2203 = vadd.f32 %v2099, %v2191
    %v2204 = vadd.f32 %v2100, %v2192
    %v2205 = vadd.f32 %v2101, %v2193
    %v2206 = vadd.f32 %v2102, %v2194
    %s2207 = sld [smem:[#allocation8 + $0x17]]
    %s2208 = sld [smem:[#allocation8 + $0x48]]
    %v2209 = vstv %s2207
    %v2210 = vmul.f32 %v2209, %v79
    %v2211 = vmul.f32 %v2209, %v86
    %v2212 = vmul.f32 %v2209, %v93
    %v2213 = vmul.f32 %v2209, %v101
    %v2214 = vmul.f32 %v2209, %v108
    %v2215 = vmul.f32 %v2209, %v115
    %v2216 = vmul.f32 %v2209, %v122
    %v2217 = vmul.f32 %v2209, %v129
    %2226 = vrot.lane.b32.xlu0 %v2210, 82
    %v2227 = vpop.permute.xlu0 %2226
    %2228 = vrot.lane.b32.xlu0 %v2211, 82
    %v2229 = vpop.permute.xlu0 %2228
    %2230 = vrot.lane.b32.xlu0 %v2212, 82
    %v2231 = vpop.permute.xlu0 %2230
    %2232 = vrot.lane.b32.xlu0 %v2213, 82
    %v2233 = vpop.permute.xlu0 %2232
    %2234 = vrot.lane.b32.xlu0 %v2214, 82
    %v2235 = vpop.permute.xlu0 %2234
    %2236 = vrot.lane.b32.xlu0 %v2215, 82
    %v2237 = vpop.permute.xlu0 %2236
    %2238 = vrot.lane.b32.xlu0 %v2216, 82
    %v2239 = vpop.permute.xlu0 %2238
    %2240 = vrot.lane.b32.xlu0 %v2217, 82
    %v2241 = vpop.permute.xlu0 %2240
    %v2242 = vsel %vm1509, %v2227, %v2229
    %v2243 = vsel %vm1509, %v2229, %v2231
    %v2244 = vsel %vm1509, %v2231, %v2233
    %v2245 = vsel %vm1509, %v2235, %v2237
    %v2246 = vsel %vm1509, %v2237, %v2239
    %v2247 = vsel %vm1509, %v2239, %v2241
    %v2254 = vadd.f32 %v2150, %v2242
    %v2255 = vadd.f32 %v2151, %v2243
    %v2256 = vadd.f32 %v2152, %v2244
    %v2257 = vadd.f32 %v2153, %v2245
    %v2258 = vadd.f32 %v2154, %v2246
    %v2259 = vadd.f32 %v2155, %v2247
    %v2260 = vstv %s2208
    %v2261 = vmul.f32 %v2260, %v186
    %v2262 = vmul.f32 %v2260, %v187
    %v2263 = vmul.f32 %v2260, %v188
    %v2264 = vmul.f32 %v2260, %v189
    %v2265 = vmul.f32 %v2260, %v190
    %v2266 = vmul.f32 %v2260, %v191
    %v2267 = vmul.f32 %v2260, %v192
    %v2268 = vmul.f32 %v2260, %v193
    %2277 = vrot.lane.b32.xlu0 %v2261, 82
    %v2278 = vpop.permute.xlu0 %2277
    %2279 = vrot.lane.b32.xlu0 %v2262, 82
    %v2280 = vpop.permute.xlu0 %2279
    %2281 = vrot.lane.b32.xlu0 %v2263, 82
    %v2282 = vpop.permute.xlu0 %2281
    %2283 = vrot.lane.b32.xlu0 %v2264, 82
    %v2284 = vpop.permute.xlu0 %2283
    %2285 = vrot.lane.b32.xlu0 %v2265, 82
    %v2286 = vpop.permute.xlu0 %2285
    %2287 = vrot.lane.b32.xlu0 %v2266, 82
    %v2288 = vpop.permute.xlu0 %2287
    %2289 = vrot.lane.b32.xlu0 %v2267, 82
    %v2290 = vpop.permute.xlu0 %2289
    %2291 = vrot.lane.b32.xlu0 %v2268, 82
    %v2292 = vpop.permute.xlu0 %2291
    %v2293 = vsel %vm1509, %v2278, %v2280
    %v2294 = vsel %vm1509, %v2280, %v2282
    %v2295 = vsel %vm1509, %v2282, %v2284
    %v2296 = vsel %vm1509, %v2286, %v2288
    %v2297 = vsel %vm1509, %v2288, %v2290
    %v2298 = vsel %vm1509, %v2290, %v2292
    %v2305 = vadd.f32 %v2201, %v2293
    %v2306 = vadd.f32 %v2202, %v2294
    %v2307 = vadd.f32 %v2203, %v2295
    %v2308 = vadd.f32 %v2204, %v2296
    %v2309 = vadd.f32 %v2205, %v2297
    %v2310 = vadd.f32 %v2206, %v2298
    %s2311 = sld [smem:[#allocation8 + $0x18]]
    %s2312 = sld [smem:[#allocation8 + $0x49]]
    %v2313 = vstv %s2311
    %v2314 = vmul.f32 %v2313, %v79
    %v2315 = vmul.f32 %v2313, %v86
    %v2316 = vmul.f32 %v2313, %v93
    %v2317 = vmul.f32 %v2313, %v101
    %v2318 = vmul.f32 %v2313, %v108
    %v2319 = vmul.f32 %v2313, %v115
    %v2320 = vmul.f32 %v2313, %v122
    %v2321 = vmul.f32 %v2313, %v129
    %2330 = vrot.lane.b32.xlu0 %v2314, 81
    %v2331 = vpop.permute.xlu0 %2330
    %2332 = vrot.lane.b32.xlu0 %v2315, 81
    %v2333 = vpop.permute.xlu0 %2332
    %2334 = vrot.lane.b32.xlu0 %v2316, 81
    %v2335 = vpop.permute.xlu0 %2334
    %2336 = vrot.lane.b32.xlu0 %v2317, 81
    %v2337 = vpop.permute.xlu0 %2336
    %2338 = vrot.lane.b32.xlu0 %v2318, 81
    %v2339 = vpop.permute.xlu0 %2338
    %2340 = vrot.lane.b32.xlu0 %v2319, 81
    %v2341 = vpop.permute.xlu0 %2340
    %2342 = vrot.lane.b32.xlu0 %v2320, 81
    %v2343 = vpop.permute.xlu0 %2342
    %2344 = vrot.lane.b32.xlu0 %v2321, 81
    %v2345 = vpop.permute.xlu0 %2344
    %v2346 = vsel %vm1614, %v2331, %v2333
    %v2347 = vsel %vm1614, %v2333, %v2335
    %v2348 = vsel %vm1614, %v2335, %v2337
    %v2349 = vsel %vm1614, %v2339, %v2341
    %v2350 = vsel %vm1614, %v2341, %v2343
    %v2351 = vsel %vm1614, %v2343, %v2345
    %v2358 = vadd.f32 %v2254, %v2346
    %v2359 = vadd.f32 %v2255, %v2347
    %v2360 = vadd.f32 %v2256, %v2348
    %v2361 = vadd.f32 %v2257, %v2349
    %v2362 = vadd.f32 %v2258, %v2350
    %v2363 = vadd.f32 %v2259, %v2351
    %v2364 = vstv %s2312
    %v2365 = vmul.f32 %v2364, %v186
    %v2366 = vmul.f32 %v2364, %v187
    %v2367 = vmul.f32 %v2364, %v188
    %v2368 = vmul.f32 %v2364, %v189
    %v2369 = vmul.f32 %v2364, %v190
    %v2370 = vmul.f32 %v2364, %v191
    %v2371 = vmul.f32 %v2364, %v192
    %v2372 = vmul.f32 %v2364, %v193
    %2381 = vrot.lane.b32.xlu0 %v2365, 81
    %v2382 = vpop.permute.xlu0 %2381
    %2383 = vrot.lane.b32.xlu0 %v2366, 81
    %v2384 = vpop.permute.xlu0 %2383
    %2385 = vrot.lane.b32.xlu0 %v2367, 81
    %v2386 = vpop.permute.xlu0 %2385
    %2387 = vrot.lane.b32.xlu0 %v2368, 81
    %v2388 = vpop.permute.xlu0 %2387
    %2389 = vrot.lane.b32.xlu0 %v2369, 81
    %v2390 = vpop.permute.xlu0 %2389
    %2391 = vrot.lane.b32.xlu0 %v2370, 81
    %v2392 = vpop.permute.xlu0 %2391
    %2393 = vrot.lane.b32.xlu0 %v2371, 81
    %v2394 = vpop.permute.xlu0 %2393
    %2395 = vrot.lane.b32.xlu0 %v2372, 81
    %v2396 = vpop.permute.xlu0 %2395
    %v2397 = vsel %vm1614, %v2382, %v2384
    %v2398 = vsel %vm1614, %v2384, %v2386
    %v2399 = vsel %vm1614, %v2386, %v2388
    %v2400 = vsel %vm1614, %v2390, %v2392
    %v2401 = vsel %vm1614, %v2392, %v2394
    %v2402 = vsel %vm1614, %v2394, %v2396
    %v2409 = vadd.f32 %v2305, %v2397
    %v2410 = vadd.f32 %v2306, %v2398
    %v2411 = vadd.f32 %v2307, %v2399
    %v2412 = vadd.f32 %v2308, %v2400
    %v2413 = vadd.f32 %v2309, %v2401
    %v2414 = vadd.f32 %v2310, %v2402
    %s2415 = sld [smem:[#allocation8 + $0x19]]
    %s2416 = sld [smem:[#allocation8 + $0x4a]]
    %v2417 = vstv %s2415
    %v2418 = vmul.f32 %v2417, %v79
    %v2419 = vmul.f32 %v2417, %v86
    %v2420 = vmul.f32 %v2417, %v93
    %v2421 = vmul.f32 %v2417, %v101
    %v2422 = vmul.f32 %v2417, %v108
    %v2423 = vmul.f32 %v2417, %v115
    %v2424 = vmul.f32 %v2417, %v122
    %v2425 = vmul.f32 %v2417, %v129
    %2434 = vrot.lane.b32.xlu0 %v2418, 80
    %v2435 = vpop.permute.xlu0 %2434
    %2436 = vrot.lane.b32.xlu0 %v2419, 80
    %v2437 = vpop.permute.xlu0 %2436
    %2438 = vrot.lane.b32.xlu0 %v2420, 80
    %v2439 = vpop.permute.xlu0 %2438
    %2440 = vrot.lane.b32.xlu0 %v2421, 80
    %v2441 = vpop.permute.xlu0 %2440
    %2442 = vrot.lane.b32.xlu0 %v2422, 80
    %v2443 = vpop.permute.xlu0 %2442
    %2444 = vrot.lane.b32.xlu0 %v2423, 80
    %v2445 = vpop.permute.xlu0 %2444
    %2446 = vrot.lane.b32.xlu0 %v2424, 80
    %v2447 = vpop.permute.xlu0 %2446
    %2448 = vrot.lane.b32.xlu0 %v2425, 80
    %v2449 = vpop.permute.xlu0 %2448
    %v2450 = vsel %vm1719, %v2435, %v2437
    %v2451 = vsel %vm1719, %v2437, %v2439
    %v2452 = vsel %vm1719, %v2439, %v2441
    %v2453 = vsel %vm1719, %v2443, %v2445
    %v2454 = vsel %vm1719, %v2445, %v2447
    %v2455 = vsel %vm1719, %v2447, %v2449
    %v2462 = vadd.f32 %v2358, %v2450
    %v2463 = vadd.f32 %v2359, %v2451
    %v2464 = vadd.f32 %v2360, %v2452
    %v2465 = vadd.f32 %v2361, %v2453
    %v2466 = vadd.f32 %v2362, %v2454
    %v2467 = vadd.f32 %v2363, %v2455
    %v2468 = vstv %s2416
    %v2469 = vmul.f32 %v2468, %v186
    %v2470 = vmul.f32 %v2468, %v187
    %v2471 = vmul.f32 %v2468, %v188
    %v2472 = vmul.f32 %v2468, %v189
    %v2473 = vmul.f32 %v2468, %v190
    %v2474 = vmul.f32 %v2468, %v191
    %v2475 = vmul.f32 %v2468, %v192
    %v2476 = vmul.f32 %v2468, %v193
    %2485 = vrot.lane.b32.xlu0 %v2469, 80
    %v2486 = vpop.permute.xlu0 %2485
    %2487 = vrot.lane.b32.xlu0 %v2470, 80
    %v2488 = vpop.permute.xlu0 %2487
    %2489 = vrot.lane.b32.xlu0 %v2471, 80
    %v2490 = vpop.permute.xlu0 %2489
    %2491 = vrot.lane.b32.xlu0 %v2472, 80
    %v2492 = vpop.permute.xlu0 %2491
    %2493 = vrot.lane.b32.xlu0 %v2473, 80
    %v2494 = vpop.permute.xlu0 %2493
    %2495 = vrot.lane.b32.xlu0 %v2474, 80
    %v2496 = vpop.permute.xlu0 %2495
    %2497 = vrot.lane.b32.xlu0 %v2475, 80
    %v2498 = vpop.permute.xlu0 %2497
    %2499 = vrot.lane.b32.xlu0 %v2476, 80
    %v2500 = vpop.permute.xlu0 %2499
    %v2501 = vsel %vm1719, %v2486, %v2488
    %v2502 = vsel %vm1719, %v2488, %v2490
    %v2503 = vsel %vm1719, %v2490, %v2492
    %v2504 = vsel %vm1719, %v2494, %v2496
    %v2505 = vsel %vm1719, %v2496, %v2498
    %v2506 = vsel %vm1719, %v2498, %v2500
    %v2513 = vadd.f32 %v2409, %v2501
    %v2514 = vadd.f32 %v2410, %v2502
    %v2515 = vadd.f32 %v2411, %v2503
    %v2516 = vadd.f32 %v2412, %v2504
    %v2517 = vadd.f32 %v2413, %v2505
    %v2518 = vadd.f32 %v2414, %v2506
    %s2519 = sld [smem:[#allocation8 + $0x1a]]
    %s2520 = sld [smem:[#allocation8 + $0x4b]]
    %v2521 = vstv %s2519
    %v2522 = vmul.f32 %v2521, %v79
    %v2523 = vmul.f32 %v2521, %v86
    %v2524 = vmul.f32 %v2521, %v93
    %v2525 = vmul.f32 %v2521, %v101
    %v2526 = vmul.f32 %v2521, %v108
    %v2527 = vmul.f32 %v2521, %v115
    %v2528 = vmul.f32 %v2521, %v122
    %v2529 = vmul.f32 %v2521, %v129
    %2538 = vrot.lane.b32.xlu0 %v2522, 79
    %v2539 = vpop.permute.xlu0 %2538
    %2540 = vrot.lane.b32.xlu0 %v2523, 79
    %v2541 = vpop.permute.xlu0 %2540
    %2542 = vrot.lane.b32.xlu0 %v2524, 79
    %v2543 = vpop.permute.xlu0 %2542
    %2544 = vrot.lane.b32.xlu0 %v2525, 79
    %v2545 = vpop.permute.xlu0 %2544
    %2546 = vrot.lane.b32.xlu0 %v2526, 79
    %v2547 = vpop.permute.xlu0 %2546
    %2548 = vrot.lane.b32.xlu0 %v2527, 79
    %v2549 = vpop.permute.xlu0 %2548
    %2550 = vrot.lane.b32.xlu0 %v2528, 79
    %v2551 = vpop.permute.xlu0 %2550
    %2552 = vrot.lane.b32.xlu0 %v2529, 79
    %v2553 = vpop.permute.xlu0 %2552
    %v2554 = vsel %vm1824, %v2539, %v2541
    %v2555 = vsel %vm1824, %v2541, %v2543
    %v2556 = vsel %vm1824, %v2543, %v2545
    %v2557 = vsel %vm1824, %v2547, %v2549
    %v2558 = vsel %vm1824, %v2549, %v2551
    %v2559 = vsel %vm1824, %v2551, %v2553
    %v2566 = vadd.f32 %v2462, %v2554
    %v2567 = vadd.f32 %v2463, %v2555
    %v2568 = vadd.f32 %v2464, %v2556
    %v2569 = vadd.f32 %v2465, %v2557
    %v2570 = vadd.f32 %v2466, %v2558
    %v2571 = vadd.f32 %v2467, %v2559
    %v2572 = vstv %s2520
    %v2573 = vmul.f32 %v2572, %v186
    %v2574 = vmul.f32 %v2572, %v187
    %v2575 = vmul.f32 %v2572, %v188
    %v2576 = vmul.f32 %v2572, %v189
    %v2577 = vmul.f32 %v2572, %v190
    %v2578 = vmul.f32 %v2572, %v191
    %v2579 = vmul.f32 %v2572, %v192
    %v2580 = vmul.f32 %v2572, %v193
    %2589 = vrot.lane.b32.xlu0 %v2573, 79
    %v2590 = vpop.permute.xlu0 %2589
    %2591 = vrot.lane.b32.xlu0 %v2574, 79
    %v2592 = vpop.permute.xlu0 %2591
    %2593 = vrot.lane.b32.xlu0 %v2575, 79
    %v2594 = vpop.permute.xlu0 %2593
    %2595 = vrot.lane.b32.xlu0 %v2576, 79
    %v2596 = vpop.permute.xlu0 %2595
    %2597 = vrot.lane.b32.xlu0 %v2577, 79
    %v2598 = vpop.permute.xlu0 %2597
    %2599 = vrot.lane.b32.xlu0 %v2578, 79
    %v2600 = vpop.permute.xlu0 %2599
    %2601 = vrot.lane.b32.xlu0 %v2579, 79
    %v2602 = vpop.permute.xlu0 %2601
    %2603 = vrot.lane.b32.xlu0 %v2580, 79
    %v2604 = vpop.permute.xlu0 %2603
    %v2605 = vsel %vm1824, %v2590, %v2592
    %v2606 = vsel %vm1824, %v2592, %v2594
    %v2607 = vsel %vm1824, %v2594, %v2596
    %v2608 = vsel %vm1824, %v2598, %v2600
    %v2609 = vsel %vm1824, %v2600, %v2602
    %v2610 = vsel %vm1824, %v2602, %v2604
    %v2617 = vadd.f32 %v2513, %v2605
    %v2618 = vadd.f32 %v2514, %v2606
    %v2619 = vadd.f32 %v2515, %v2607
    %v2620 = vadd.f32 %v2516, %v2608
    %v2621 = vadd.f32 %v2517, %v2609
    %v2622 = vadd.f32 %v2518, %v2610
    %s2623 = sld [smem:[#allocation8 + $0x1b]]
    %s2624 = sld [smem:[#allocation8 + $0x4c]]
    %v2625 = vstv %s2623
    %v2626 = vmul.f32 %v2625, %v79
    %v2627 = vmul.f32 %v2625, %v86
    %v2628 = vmul.f32 %v2625, %v93
    %v2629 = vmul.f32 %v2625, %v101
    %v2630 = vmul.f32 %v2625, %v108
    %v2631 = vmul.f32 %v2625, %v115
    %v2632 = vmul.f32 %v2625, %v122
    %v2633 = vmul.f32 %v2625, %v129
    %2642 = vrot.lane.b32.xlu0 %v2626, 78
    %v2643 = vpop.permute.xlu0 %2642
    %2644 = vrot.lane.b32.xlu0 %v2627, 78
    %v2645 = vpop.permute.xlu0 %2644
    %2646 = vrot.lane.b32.xlu0 %v2628, 78
    %v2647 = vpop.permute.xlu0 %2646
    %2648 = vrot.lane.b32.xlu0 %v2629, 78
    %v2649 = vpop.permute.xlu0 %2648
    %2650 = vrot.lane.b32.xlu0 %v2630, 78
    %v2651 = vpop.permute.xlu0 %2650
    %2652 = vrot.lane.b32.xlu0 %v2631, 78
    %v2653 = vpop.permute.xlu0 %2652
    %2654 = vrot.lane.b32.xlu0 %v2632, 78
    %v2655 = vpop.permute.xlu0 %2654
    %2656 = vrot.lane.b32.xlu0 %v2633, 78
    %v2657 = vpop.permute.xlu0 %2656
    %v2658 = vsel %vm1929, %v2643, %v2645
    %v2659 = vsel %vm1929, %v2645, %v2647
    %v2660 = vsel %vm1929, %v2647, %v2649
    %v2661 = vsel %vm1929, %v2651, %v2653
    %v2662 = vsel %vm1929, %v2653, %v2655
    %v2663 = vsel %vm1929, %v2655, %v2657
    %v2670 = vadd.f32 %v2566, %v2658
    %v2671 = vadd.f32 %v2567, %v2659
    %v2672 = vadd.f32 %v2568, %v2660
    %v2673 = vadd.f32 %v2569, %v2661
    %v2674 = vadd.f32 %v2570, %v2662
    %v2675 = vadd.f32 %v2571, %v2663
    %v2676 = vstv %s2624
    %v2677 = vmul.f32 %v2676, %v186
    %v2678 = vmul.f32 %v2676, %v187
    %v2679 = vmul.f32 %v2676, %v188
    %v2680 = vmul.f32 %v2676, %v189
    %v2681 = vmul.f32 %v2676, %v190
    %v2682 = vmul.f32 %v2676, %v191
    %v2683 = vmul.f32 %v2676, %v192
    %v2684 = vmul.f32 %v2676, %v193
    %2693 = vrot.lane.b32.xlu0 %v2677, 78
    %v2694 = vpop.permute.xlu0 %2693
    %2695 = vrot.lane.b32.xlu0 %v2678, 78
    %v2696 = vpop.permute.xlu0 %2695
    %2697 = vrot.lane.b32.xlu0 %v2679, 78
    %v2698 = vpop.permute.xlu0 %2697
    %2699 = vrot.lane.b32.xlu0 %v2680, 78
    %v2700 = vpop.permute.xlu0 %2699
    %2701 = vrot.lane.b32.xlu0 %v2681, 78
    %v2702 = vpop.permute.xlu0 %2701
    %2703 = vrot.lane.b32.xlu0 %v2682, 78
    %v2704 = vpop.permute.xlu0 %2703
    %2705 = vrot.lane.b32.xlu0 %v2683, 78
    %v2706 = vpop.permute.xlu0 %2705
    %2707 = vrot.lane.b32.xlu0 %v2684, 78
    %v2708 = vpop.permute.xlu0 %2707
    %v2709 = vsel %vm1929, %v2694, %v2696
    %v2710 = vsel %vm1929, %v2696, %v2698
    %v2711 = vsel %vm1929, %v2698, %v2700
    %v2712 = vsel %vm1929, %v2702, %v2704
    %v2713 = vsel %vm1929, %v2704, %v2706
    %v2714 = vsel %vm1929, %v2706, %v2708
    %v2721 = vadd.f32 %v2617, %v2709
    %v2722 = vadd.f32 %v2618, %v2710
    %v2723 = vadd.f32 %v2619, %v2711
    %v2724 = vadd.f32 %v2620, %v2712
    %v2725 = vadd.f32 %v2621, %v2713
    %v2726 = vadd.f32 %v2622, %v2714
    %s2727 = sld [smem:[#allocation8 + $0x1c]]
    %s2728 = sld [smem:[#allocation8 + $0x4d]]
    %v2729 = vstv %s2727
    %v2730 = vmul.f32 %v2729, %v79
    %v2731 = vmul.f32 %v2729, %v86
    %v2732 = vmul.f32 %v2729, %v93
    %v2733 = vmul.f32 %v2729, %v101
    %v2734 = vmul.f32 %v2729, %v108
    %v2735 = vmul.f32 %v2729, %v115
    %v2736 = vmul.f32 %v2729, %v122
    %v2737 = vmul.f32 %v2729, %v129
    %2746 = vrot.lane.b32.xlu0 %v2730, 40
    %v2747 = vpop.permute.xlu0 %2746
    %2748 = vrot.lane.b32.xlu0 %v2731, 40
    %v2749 = vpop.permute.xlu0 %2748
    %2750 = vrot.lane.b32.xlu0 %v2732, 40
    %v2751 = vpop.permute.xlu0 %2750
    %2752 = vrot.lane.b32.xlu0 %v2733, 40
    %v2753 = vpop.permute.xlu0 %2752
    %2754 = vrot.lane.b32.xlu0 %v2734, 40
    %v2755 = vpop.permute.xlu0 %2754
    %2756 = vrot.lane.b32.xlu0 %v2735, 40
    %v2757 = vpop.permute.xlu0 %2756
    %2758 = vrot.lane.b32.xlu0 %v2736, 40
    %v2759 = vpop.permute.xlu0 %2758
    %2760 = vrot.lane.b32.xlu0 %v2737, 40
    %v2761 = vpop.permute.xlu0 %2760
    %vm2762 = vcmask 326656
    %v2763 = vsel %vm2762, %v2747, %v2749
    %v2764 = vsel %vm2762, %v2749, %v2751
    %v2765 = vsel %vm2762, %v2751, %v2753
    %v2766 = vsel %vm2762, %v2755, %v2757
    %v2767 = vsel %vm2762, %v2757, %v2759
    %v2768 = vsel %vm2762, %v2759, %v2761
    %v2775 = vadd.f32 %v1942, %v2763
    %v2776 = vadd.f32 %v1943, %v2764
    %v2777 = vadd.f32 %v1944, %v2765
    %v2778 = vadd.f32 %v1945, %v2766
    %v2779 = vadd.f32 %v1946, %v2767
    %v2780 = vadd.f32 %v1947, %v2768
    %v2781 = vstv %s2728
    %v2782 = vmul.f32 %v2781, %v186
    %v2783 = vmul.f32 %v2781, %v187
    %v2784 = vmul.f32 %v2781, %v188
    %v2785 = vmul.f32 %v2781, %v189
    %v2786 = vmul.f32 %v2781, %v190
    %v2787 = vmul.f32 %v2781, %v191
    %v2788 = vmul.f32 %v2781, %v192
    %v2789 = vmul.f32 %v2781, %v193
    %2798 = vrot.lane.b32.xlu0 %v2782, 40
    %v2799 = vpop.permute.xlu0 %2798
    %2800 = vrot.lane.b32.xlu0 %v2783, 40
    %v2801 = vpop.permute.xlu0 %2800
    %2802 = vrot.lane.b32.xlu0 %v2784, 40
    %v2803 = vpop.permute.xlu0 %2802
    %2804 = vrot.lane.b32.xlu0 %v2785, 40
    %v2805 = vpop.permute.xlu0 %2804
    %2806 = vrot.lane.b32.xlu0 %v2786, 40
    %v2807 = vpop.permute.xlu0 %2806
    %2808 = vrot.lane.b32.xlu0 %v2787, 40
    %v2809 = vpop.permute.xlu0 %2808
    %2810 = vrot.lane.b32.xlu0 %v2788, 40
    %v2811 = vpop.permute.xlu0 %2810
    %2812 = vrot.lane.b32.xlu0 %v2789, 40
    %v2813 = vpop.permute.xlu0 %2812
    %v2814 = vsel %vm2762, %v2799, %v2801
    %v2815 = vsel %vm2762, %v2801, %v2803
    %v2816 = vsel %vm2762, %v2803, %v2805
    %v2817 = vsel %vm2762, %v2807, %v2809
    %v2818 = vsel %vm2762, %v2809, %v2811
    %v2819 = vsel %vm2762, %v2811, %v2813
    %v2826 = vadd.f32 %v1993, %v2814
    %v2827 = vadd.f32 %v1994, %v2815
    %v2828 = vadd.f32 %v1995, %v2816
    %v2829 = vadd.f32 %v1996, %v2817
    %v2830 = vadd.f32 %v1997, %v2818
    %v2831 = vadd.f32 %v1998, %v2819
    %s2832 = sld [smem:[#allocation8 + $0x1d]]
    %s2833 = sld [smem:[#allocation8 + $0x4e]]
    %v2834 = vstv %s2832
    %v2835 = vmul.f32 %v2834, %v79
    %v2836 = vmul.f32 %v2834, %v86
    %v2837 = vmul.f32 %v2834, %v93
    %v2838 = vmul.f32 %v2834, %v101
    %v2839 = vmul.f32 %v2834, %v108
    %v2840 = vmul.f32 %v2834, %v115
    %v2841 = vmul.f32 %v2834, %v122
    %v2842 = vmul.f32 %v2834, %v129
    %2851 = vrot.lane.b32.xlu0 %v2835, 39
    %v2852 = vpop.permute.xlu0 %2851
    %2853 = vrot.lane.b32.xlu0 %v2836, 39
    %v2854 = vpop.permute.xlu0 %2853
    %2855 = vrot.lane.b32.xlu0 %v2837, 39
    %v2856 = vpop.permute.xlu0 %2855
    %2857 = vrot.lane.b32.xlu0 %v2838, 39
    %v2858 = vpop.permute.xlu0 %2857
    %2859 = vrot.lane.b32.xlu0 %v2839, 39
    %v2860 = vpop.permute.xlu0 %2859
    %2861 = vrot.lane.b32.xlu0 %v2840, 39
    %v2862 = vpop.permute.xlu0 %2861
    %2863 = vrot.lane.b32.xlu0 %v2841, 39
    %v2864 = vpop.permute.xlu0 %2863
    %2865 = vrot.lane.b32.xlu0 %v2842, 39
    %v2866 = vpop.permute.xlu0 %2865
    %vm2867 = vcmask 318464
    %v2868 = vsel %vm2867, %v2852, %v2854
    %v2869 = vsel %vm2867, %v2854, %v2856
    %v2870 = vsel %vm2867, %v2856, %v2858
    %v2871 = vsel %vm2867, %v2860, %v2862
    %v2872 = vsel %vm2867, %v2862, %v2864
    %v2873 = vsel %vm2867, %v2864, %v2866
    %v2880 = vadd.f32 %v2775, %v2868
    %v2881 = vadd.f32 %v2776, %v2869
    %v2882 = vadd.f32 %v2777, %v2870
    %v2883 = vadd.f32 %v2778, %v2871
    %v2884 = vadd.f32 %v2779, %v2872
    %v2885 = vadd.f32 %v2780, %v2873
    %v2886 = vstv %s2833
    %v2887 = vmul.f32 %v2886, %v186
    %v2888 = vmul.f32 %v2886, %v187
    %v2889 = vmul.f32 %v2886, %v188
    %v2890 = vmul.f32 %v2886, %v189
    %v2891 = vmul.f32 %v2886, %v190
    %v2892 = vmul.f32 %v2886, %v191
    %v2893 = vmul.f32 %v2886, %v192
    %v2894 = vmul.f32 %v2886, %v193
    %2903 = vrot.lane.b32.xlu0 %v2887, 39
    %v2904 = vpop.permute.xlu0 %2903
    %2905 = vrot.lane.b32.xlu0 %v2888, 39
    %v2906 = vpop.permute.xlu0 %2905
    %2907 = vrot.lane.b32.xlu0 %v2889, 39
    %v2908 = vpop.permute.xlu0 %2907
    %2909 = vrot.lane.b32.xlu0 %v2890, 39
    %v2910 = vpop.permute.xlu0 %2909
    %2911 = vrot.lane.b32.xlu0 %v2891, 39
    %v2912 = vpop.permute.xlu0 %2911
    %2913 = vrot.lane.b32.xlu0 %v2892, 39
    %v2914 = vpop.permute.xlu0 %2913
    %2915 = vrot.lane.b32.xlu0 %v2893, 39
    %v2916 = vpop.permute.xlu0 %2915
    %2917 = vrot.lane.b32.xlu0 %v2894, 39
    %v2918 = vpop.permute.xlu0 %2917
    %v2919 = vsel %vm2867, %v2904, %v2906
    %v2920 = vsel %vm2867, %v2906, %v2908
    %v2921 = vsel %vm2867, %v2908, %v2910
    %v2922 = vsel %vm2867, %v2912, %v2914
    %v2923 = vsel %vm2867, %v2914, %v2916
    %v2924 = vsel %vm2867, %v2916, %v2918
    %v2931 = vadd.f32 %v2826, %v2919
    %v2932 = vadd.f32 %v2827, %v2920
    %v2933 = vadd.f32 %v2828, %v2921
    %v2934 = vadd.f32 %v2829, %v2922
    %v2935 = vadd.f32 %v2830, %v2923
    %v2936 = vadd.f32 %v2831, %v2924
    %s2937 = sld [smem:[#allocation8 + $0x1e]]
    %s2938 = sld [smem:[#allocation8 + $0x4f]]
    %v2939 = vstv %s2937
    %v2940 = vmul.f32 %v2939, %v79
    %v2941 = vmul.f32 %v2939, %v86
    %v2942 = vmul.f32 %v2939, %v93
    %v2943 = vmul.f32 %v2939, %v101
    %v2944 = vmul.f32 %v2939, %v108
    %v2945 = vmul.f32 %v2939, %v115
    %v2946 = vmul.f32 %v2939, %v122
    %v2947 = vmul.f32 %v2939, %v129
    %2956 = vrot.lane.b32.xlu0 %v2940, 38
    %v2957 = vpop.permute.xlu0 %2956
    %2958 = vrot.lane.b32.xlu0 %v2941, 38
    %v2959 = vpop.permute.xlu0 %2958
    %2960 = vrot.lane.b32.xlu0 %v2942, 38
    %v2961 = vpop.permute.xlu0 %2960
    %2962 = vrot.lane.b32.xlu0 %v2943, 38
    %v2963 = vpop.permute.xlu0 %2962
    %2964 = vrot.lane.b32.xlu0 %v2944, 38
    %v2965 = vpop.permute.xlu0 %2964
    %2966 = vrot.lane.b32.xlu0 %v2945, 38
    %v2967 = vpop.permute.xlu0 %2966
    %2968 = vrot.lane.b32.xlu0 %v2946, 38
    %v2969 = vpop.permute.xlu0 %2968
    %2970 = vrot.lane.b32.xlu0 %v2947, 38
    %v2971 = vpop.permute.xlu0 %2970
    %vm2972 = vcmask 310272
    %v2973 = vsel %vm2972, %v2957, %v2959
    %v2974 = vsel %vm2972, %v2959, %v2961
    %v2975 = vsel %vm2972, %v2961, %v2963
    %v2976 = vsel %vm2972, %v2965, %v2967
    %v2977 = vsel %vm2972, %v2967, %v2969
    %v2978 = vsel %vm2972, %v2969, %v2971
    %v2985 = vadd.f32 %v2880, %v2973
    %v2986 = vadd.f32 %v2881, %v2974
    %v2987 = vadd.f32 %v2882, %v2975
    %v2988 = vadd.f32 %v2883, %v2976
    %v2989 = vadd.f32 %v2884, %v2977
    %v2990 = vadd.f32 %v2885, %v2978
    %v2991 = vstv %s2938
    %v2992 = vmul.f32 %v2991, %v186
    %v2993 = vmul.f32 %v2991, %v187
    %v2994 = vmul.f32 %v2991, %v188
    %v2995 = vmul.f32 %v2991, %v189
    %v2996 = vmul.f32 %v2991, %v190
    %v2997 = vmul.f32 %v2991, %v191
    %v2998 = vmul.f32 %v2991, %v192
    %v2999 = vmul.f32 %v2991, %v193
    %3008 = vrot.lane.b32.xlu0 %v2992, 38
    %v3009 = vpop.permute.xlu0 %3008
    %3010 = vrot.lane.b32.xlu0 %v2993, 38
    %v3011 = vpop.permute.xlu0 %3010
    %3012 = vrot.lane.b32.xlu0 %v2994, 38
    %v3013 = vpop.permute.xlu0 %3012
    %3014 = vrot.lane.b32.xlu0 %v2995, 38
    %v3015 = vpop.permute.xlu0 %3014
    %3016 = vrot.lane.b32.xlu0 %v2996, 38
    %v3017 = vpop.permute.xlu0 %3016
    %3018 = vrot.lane.b32.xlu0 %v2997, 38
    %v3019 = vpop.permute.xlu0 %3018
    %3020 = vrot.lane.b32.xlu0 %v2998, 38
    %v3021 = vpop.permute.xlu0 %3020
    %3022 = vrot.lane.b32.xlu0 %v2999, 38
    %v3023 = vpop.permute.xlu0 %3022
    %v3024 = vsel %vm2972, %v3009, %v3011
    %v3025 = vsel %vm2972, %v3011, %v3013
    %v3026 = vsel %vm2972, %v3013, %v3015
    %v3027 = vsel %vm2972, %v3017, %v3019
    %v3028 = vsel %vm2972, %v3019, %v3021
    %v3029 = vsel %vm2972, %v3021, %v3023
    %v3036 = vadd.f32 %v2931, %v3024
    %v3037 = vadd.f32 %v2932, %v3025
    %v3038 = vadd.f32 %v2933, %v3026
    %v3039 = vadd.f32 %v2934, %v3027
    %v3040 = vadd.f32 %v2935, %v3028
    %v3041 = vadd.f32 %v2936, %v3029
    %s3042 = sld [smem:[#allocation8 + $0x1f]]
    %s3043 = sld [smem:[#allocation8 + $0x50]]
    %v3044 = vstv %s3042
    %v3045 = vmul.f32 %v3044, %v79
    %v3046 = vmul.f32 %v3044, %v86
    %v3047 = vmul.f32 %v3044, %v93
    %v3048 = vmul.f32 %v3044, %v101
    %v3049 = vmul.f32 %v3044, %v108
    %v3050 = vmul.f32 %v3044, %v115
    %v3051 = vmul.f32 %v3044, %v122
    %v3052 = vmul.f32 %v3044, %v129
    %3061 = vrot.lane.b32.xlu0 %v3045, 37
    %v3062 = vpop.permute.xlu0 %3061
    %3063 = vrot.lane.b32.xlu0 %v3046, 37
    %v3064 = vpop.permute.xlu0 %3063
    %3065 = vrot.lane.b32.xlu0 %v3047, 37
    %v3066 = vpop.permute.xlu0 %3065
    %3067 = vrot.lane.b32.xlu0 %v3048, 37
    %v3068 = vpop.permute.xlu0 %3067
    %3069 = vrot.lane.b32.xlu0 %v3049, 37
    %v3070 = vpop.permute.xlu0 %3069
    %3071 = vrot.lane.b32.xlu0 %v3050, 37
    %v3072 = vpop.permute.xlu0 %3071
    %3073 = vrot.lane.b32.xlu0 %v3051, 37
    %v3074 = vpop.permute.xlu0 %3073
    %3075 = vrot.lane.b32.xlu0 %v3052, 37
    %v3076 = vpop.permute.xlu0 %3075
    %vm3077 = vcmask 302080
    %v3078 = vsel %vm3077, %v3062, %v3064
    %v3079 = vsel %vm3077, %v3064, %v3066
    %v3080 = vsel %vm3077, %v3066, %v3068
    %v3081 = vsel %vm3077, %v3070, %v3072
    %v3082 = vsel %vm3077, %v3072, %v3074
    %v3083 = vsel %vm3077, %v3074, %v3076
    %v3090 = vadd.f32 %v2985, %v3078
    %v3091 = vadd.f32 %v2986, %v3079
    %v3092 = vadd.f32 %v2987, %v3080
    %v3093 = vadd.f32 %v2988, %v3081
    %v3094 = vadd.f32 %v2989, %v3082
    %v3095 = vadd.f32 %v2990, %v3083
    %v3096 = vstv %s3043
    %v3097 = vmul.f32 %v3096, %v186
    %v3098 = vmul.f32 %v3096, %v187
    %v3099 = vmul.f32 %v3096, %v188
    %v3100 = vmul.f32 %v3096, %v189
    %v3101 = vmul.f32 %v3096, %v190
    %v3102 = vmul.f32 %v3096, %v191
    %v3103 = vmul.f32 %v3096, %v192
    %v3104 = vmul.f32 %v3096, %v193
    %3113 = vrot.lane.b32.xlu0 %v3097, 37
    %v3114 = vpop.permute.xlu0 %3113
    %3115 = vrot.lane.b32.xlu0 %v3098, 37
    %v3116 = vpop.permute.xlu0 %3115
    %3117 = vrot.lane.b32.xlu0 %v3099, 37
    %v3118 = vpop.permute.xlu0 %3117
    %3119 = vrot.lane.b32.xlu0 %v3100, 37
    %v3120 = vpop.permute.xlu0 %3119
    %3121 = vrot.lane.b32.xlu0 %v3101, 37
    %v3122 = vpop.permute.xlu0 %3121
    %3123 = vrot.lane.b32.xlu0 %v3102, 37
    %v3124 = vpop.permute.xlu0 %3123
    %3125 = vrot.lane.b32.xlu0 %v3103, 37
    %v3126 = vpop.permute.xlu0 %3125
    %3127 = vrot.lane.b32.xlu0 %v3104, 37
    %v3128 = vpop.permute.xlu0 %3127
    %v3129 = vsel %vm3077, %v3114, %v3116
    %v3130 = vsel %vm3077, %v3116, %v3118
    %v3131 = vsel %vm3077, %v3118, %v3120
    %v3132 = vsel %vm3077, %v3122, %v3124
    %v3133 = vsel %vm3077, %v3124, %v3126
    %v3134 = vsel %vm3077, %v3126, %v3128
    %v3141 = vadd.f32 %v3036, %v3129
    %v3142 = vadd.f32 %v3037, %v3130
    %v3143 = vadd.f32 %v3038, %v3131
    %v3144 = vadd.f32 %v3039, %v3132
    %v3145 = vadd.f32 %v3040, %v3133
    %v3146 = vadd.f32 %v3041, %v3134
    %s3147 = sld [smem:[#allocation8 + $0x20]]
    %s3148 = sld [smem:[#allocation8 + $0x51]]
    %v3149 = vstv %s3147
    %v3150 = vmul.f32 %v3149, %v79
    %v3151 = vmul.f32 %v3149, %v86
    %v3152 = vmul.f32 %v3149, %v93
    %v3153 = vmul.f32 %v3149, %v101
    %v3154 = vmul.f32 %v3149, %v108
    %v3155 = vmul.f32 %v3149, %v115
    %v3156 = vmul.f32 %v3149, %v122
    %v3157 = vmul.f32 %v3149, %v129
    %3166 = vrot.lane.b32.xlu0 %v3150, 36
    %v3167 = vpop.permute.xlu0 %3166
    %3168 = vrot.lane.b32.xlu0 %v3151, 36
    %v3169 = vpop.permute.xlu0 %3168
    %3170 = vrot.lane.b32.xlu0 %v3152, 36
    %v3171 = vpop.permute.xlu0 %3170
    %3172 = vrot.lane.b32.xlu0 %v3153, 36
    %v3173 = vpop.permute.xlu0 %3172
    %3174 = vrot.lane.b32.xlu0 %v3154, 36
    %v3175 = vpop.permute.xlu0 %3174
    %3176 = vrot.lane.b32.xlu0 %v3155, 36
    %v3177 = vpop.permute.xlu0 %3176
    %3178 = vrot.lane.b32.xlu0 %v3156, 36
    %v3179 = vpop.permute.xlu0 %3178
    %3180 = vrot.lane.b32.xlu0 %v3157, 36
    %v3181 = vpop.permute.xlu0 %3180
    %vm3182 = vcmask 293888
    %v3183 = vsel %vm3182, %v3167, %v3169
    %v3184 = vsel %vm3182, %v3169, %v3171
    %v3185 = vsel %vm3182, %v3171, %v3173
    %v3186 = vsel %vm3182, %v3175, %v3177
    %v3187 = vsel %vm3182, %v3177, %v3179
    %v3188 = vsel %vm3182, %v3179, %v3181
    %v3195 = vadd.f32 %v3090, %v3183
    %v3196 = vadd.f32 %v3091, %v3184
    %v3197 = vadd.f32 %v3092, %v3185
    %v3198 = vadd.f32 %v3093, %v3186
    %v3199 = vadd.f32 %v3094, %v3187
    %v3200 = vadd.f32 %v3095, %v3188
    %v3201 = vstv %s3148
    %v3202 = vmul.f32 %v3201, %v186
    %v3203 = vmul.f32 %v3201, %v187
    %v3204 = vmul.f32 %v3201, %v188
    %v3205 = vmul.f32 %v3201, %v189
    %v3206 = vmul.f32 %v3201, %v190
    %v3207 = vmul.f32 %v3201, %v191
    %v3208 = vmul.f32 %v3201, %v192
    %v3209 = vmul.f32 %v3201, %v193
    %3218 = vrot.lane.b32.xlu0 %v3202, 36
    %v3219 = vpop.permute.xlu0 %3218
    %3220 = vrot.lane.b32.xlu0 %v3203, 36
    %v3221 = vpop.permute.xlu0 %3220
    %3222 = vrot.lane.b32.xlu0 %v3204, 36
    %v3223 = vpop.permute.xlu0 %3222
    %3224 = vrot.lane.b32.xlu0 %v3205, 36
    %v3225 = vpop.permute.xlu0 %3224
    %3226 = vrot.lane.b32.xlu0 %v3206, 36
    %v3227 = vpop.permute.xlu0 %3226
    %3228 = vrot.lane.b32.xlu0 %v3207, 36
    %v3229 = vpop.permute.xlu0 %3228
    %3230 = vrot.lane.b32.xlu0 %v3208, 36
    %v3231 = vpop.permute.xlu0 %3230
    %3232 = vrot.lane.b32.xlu0 %v3209, 36
    %v3233 = vpop.permute.xlu0 %3232
    %v3234 = vsel %vm3182, %v3219, %v3221
    %v3235 = vsel %vm3182, %v3221, %v3223
    %v3236 = vsel %vm3182, %v3223, %v3225
    %v3237 = vsel %vm3182, %v3227, %v3229
    %v3238 = vsel %vm3182, %v3229, %v3231
    %v3239 = vsel %vm3182, %v3231, %v3233
    %v3246 = vadd.f32 %v3141, %v3234
    %v3247 = vadd.f32 %v3142, %v3235
    %v3248 = vadd.f32 %v3143, %v3236
    %v3249 = vadd.f32 %v3144, %v3237
    %v3250 = vadd.f32 %v3145, %v3238
    %v3251 = vadd.f32 %v3146, %v3239
    %s3252 = sld [smem:[#allocation8 + $0x21]]
    %s3253 = sld [smem:[#allocation8 + $0x52]]
    %v3254 = vstv %s3252
    %v3255 = vmul.f32 %v3254, %v79
    %v3256 = vmul.f32 %v3254, %v86
    %v3257 = vmul.f32 %v3254, %v93
    %v3258 = vmul.f32 %v3254, %v101
    %v3259 = vmul.f32 %v3254, %v108
    %v3260 = vmul.f32 %v3254, %v115
    %v3261 = vmul.f32 %v3254, %v122
    %v3262 = vmul.f32 %v3254, %v129
    %3271 = vrot.lane.b32.xlu0 %v3255, 35
    %v3272 = vpop.permute.xlu0 %3271
    %3273 = vrot.lane.b32.xlu0 %v3256, 35
    %v3274 = vpop.permute.xlu0 %3273
    %3275 = vrot.lane.b32.xlu0 %v3257, 35
    %v3276 = vpop.permute.xlu0 %3275
    %3277 = vrot.lane.b32.xlu0 %v3258, 35
    %v3278 = vpop.permute.xlu0 %3277
    %3279 = vrot.lane.b32.xlu0 %v3259, 35
    %v3280 = vpop.permute.xlu0 %3279
    %3281 = vrot.lane.b32.xlu0 %v3260, 35
    %v3282 = vpop.permute.xlu0 %3281
    %3283 = vrot.lane.b32.xlu0 %v3261, 35
    %v3284 = vpop.permute.xlu0 %3283
    %3285 = vrot.lane.b32.xlu0 %v3262, 35
    %v3286 = vpop.permute.xlu0 %3285
    %vm3287 = vcmask 285696
    %v3288 = vsel %vm3287, %v3272, %v3274
    %v3289 = vsel %vm3287, %v3274, %v3276
    %v3290 = vsel %vm3287, %v3276, %v3278
    %v3291 = vsel %vm3287, %v3280, %v3282
    %v3292 = vsel %vm3287, %v3282, %v3284
    %v3293 = vsel %vm3287, %v3284, %v3286
    %v3300 = vadd.f32 %v3195, %v3288
    %v3301 = vadd.f32 %v3196, %v3289
    %v3302 = vadd.f32 %v3197, %v3290
    %v3303 = vadd.f32 %v3198, %v3291
    %v3304 = vadd.f32 %v3199, %v3292
    %v3305 = vadd.f32 %v3200, %v3293
    %v3306 = vstv %s3253
    %v3307 = vmul.f32 %v3306, %v186
    %v3308 = vmul.f32 %v3306, %v187
    %v3309 = vmul.f32 %v3306, %v188
    %v3310 = vmul.f32 %v3306, %v189
    %v3311 = vmul.f32 %v3306, %v190
    %v3312 = vmul.f32 %v3306, %v191
    %v3313 = vmul.f32 %v3306, %v192
    %v3314 = vmul.f32 %v3306, %v193
    %3323 = vrot.lane.b32.xlu0 %v3307, 35
    %v3324 = vpop.permute.xlu0 %3323
    %3325 = vrot.lane.b32.xlu0 %v3308, 35
    %v3326 = vpop.permute.xlu0 %3325
    %3327 = vrot.lane.b32.xlu0 %v3309, 35
    %v3328 = vpop.permute.xlu0 %3327
    %3329 = vrot.lane.b32.xlu0 %v3310, 35
    %v3330 = vpop.permute.xlu0 %3329
    %3331 = vrot.lane.b32.xlu0 %v3311, 35
    %v3332 = vpop.permute.xlu0 %3331
    %3333 = vrot.lane.b32.xlu0 %v3312, 35
    %v3334 = vpop.permute.xlu0 %3333
    %3335 = vrot.lane.b32.xlu0 %v3313, 35
    %v3336 = vpop.permute.xlu0 %3335
    %3337 = vrot.lane.b32.xlu0 %v3314, 35
    %v3338 = vpop.permute.xlu0 %3337
    %v3339 = vsel %vm3287, %v3324, %v3326
    %v3340 = vsel %vm3287, %v3326, %v3328
    %v3341 = vsel %vm3287, %v3328, %v3330
    %v3342 = vsel %vm3287, %v3332, %v3334
    %v3343 = vsel %vm3287, %v3334, %v3336
    %v3344 = vsel %vm3287, %v3336, %v3338
    %v3351 = vadd.f32 %v3246, %v3339
    %v3352 = vadd.f32 %v3247, %v3340
    %v3353 = vadd.f32 %v3248, %v3341
    %v3354 = vadd.f32 %v3249, %v3342
    %v3355 = vadd.f32 %v3250, %v3343
    %v3356 = vadd.f32 %v3251, %v3344
    %s3357 = sld [smem:[#allocation8 + $0x22]]
    %s3358 = sld [smem:[#allocation8 + $0x53]]
    %v3359 = vstv %s3357
    %v3360 = vmul.f32 %v3359, %v79
    %v3361 = vmul.f32 %v3359, %v86
    %v3362 = vmul.f32 %v3359, %v93
    %v3363 = vmul.f32 %v3359, %v101
    %v3364 = vmul.f32 %v3359, %v108
    %v3365 = vmul.f32 %v3359, %v115
    %v3366 = vmul.f32 %v3359, %v122
    %v3367 = vmul.f32 %v3359, %v129
    %3376 = vrot.lane.b32.xlu0 %v3360, 34
    %v3377 = vpop.permute.xlu0 %3376
    %3378 = vrot.lane.b32.xlu0 %v3361, 34
    %v3379 = vpop.permute.xlu0 %3378
    %3380 = vrot.lane.b32.xlu0 %v3362, 34
    %v3381 = vpop.permute.xlu0 %3380
    %3382 = vrot.lane.b32.xlu0 %v3363, 34
    %v3383 = vpop.permute.xlu0 %3382
    %3384 = vrot.lane.b32.xlu0 %v3364, 34
    %v3385 = vpop.permute.xlu0 %3384
    %3386 = vrot.lane.b32.xlu0 %v3365, 34
    %v3387 = vpop.permute.xlu0 %3386
    %3388 = vrot.lane.b32.xlu0 %v3366, 34
    %v3389 = vpop.permute.xlu0 %3388
    %3390 = vrot.lane.b32.xlu0 %v3367, 34
    %v3391 = vpop.permute.xlu0 %3390
    %vm3392 = vcmask 277504
    %v3393 = vsel %vm3392, %v3377, %v3379
    %v3394 = vsel %vm3392, %v3379, %v3381
    %v3395 = vsel %vm3392, %v3381, %v3383
    %v3396 = vsel %vm3392, %v3385, %v3387
    %v3397 = vsel %vm3392, %v3387, %v3389
    %v3398 = vsel %vm3392, %v3389, %v3391
    %v3405 = vadd.f32 %v3300, %v3393
    %v3406 = vadd.f32 %v3301, %v3394
    %v3407 = vadd.f32 %v3302, %v3395
    %v3408 = vadd.f32 %v3303, %v3396
    %v3409 = vadd.f32 %v3304, %v3397
    %v3410 = vadd.f32 %v3305, %v3398
    %v3411 = vstv %s3358
    %v3412 = vmul.f32 %v3411, %v186
    %v3413 = vmul.f32 %v3411, %v187
    %v3414 = vmul.f32 %v3411, %v188
    %v3415 = vmul.f32 %v3411, %v189
    %v3416 = vmul.f32 %v3411, %v190
    %v3417 = vmul.f32 %v3411, %v191
    %v3418 = vmul.f32 %v3411, %v192
    %v3419 = vmul.f32 %v3411, %v193
    %3428 = vrot.lane.b32.xlu0 %v3412, 34
    %v3429 = vpop.permute.xlu0 %3428
    %3430 = vrot.lane.b32.xlu0 %v3413, 34
    %v3431 = vpop.permute.xlu0 %3430
    %3432 = vrot.lane.b32.xlu0 %v3414, 34
    %v3433 = vpop.permute.xlu0 %3432
    %3434 = vrot.lane.b32.xlu0 %v3415, 34
    %v3435 = vpop.permute.xlu0 %3434
    %3436 = vrot.lane.b32.xlu0 %v3416, 34
    %v3437 = vpop.permute.xlu0 %3436
    %3438 = vrot.lane.b32.xlu0 %v3417, 34
    %v3439 = vpop.permute.xlu0 %3438
    %3440 = vrot.lane.b32.xlu0 %v3418, 34
    %v3441 = vpop.permute.xlu0 %3440
    %3442 = vrot.lane.b32.xlu0 %v3419, 34
    %v3443 = vpop.permute.xlu0 %3442
    %v3444 = vsel %vm3392, %v3429, %v3431
    %v3445 = vsel %vm3392, %v3431, %v3433
    %v3446 = vsel %vm3392, %v3433, %v3435
    %v3447 = vsel %vm3392, %v3437, %v3439
    %v3448 = vsel %vm3392, %v3439, %v3441
    %v3449 = vsel %vm3392, %v3441, %v3443
    %v3456 = vadd.f32 %v3351, %v3444
    %v3457 = vadd.f32 %v3352, %v3445
    %v3458 = vadd.f32 %v3353, %v3446
    %v3459 = vadd.f32 %v3354, %v3447
    %v3460 = vadd.f32 %v3355, %v3448
    %v3461 = vadd.f32 %v3356, %v3449
    %s3462 = sld [smem:[#allocation8 + $0x23]]
    %s3463 = sld [smem:[#allocation8 + $0x54]]
    %v3464 = vstv %s3462
    %v3465 = vmul.f32 %v3464, %v79
    %v3466 = vmul.f32 %v3464, %v86
    %v3467 = vmul.f32 %v3464, %v93
    %v3468 = vmul.f32 %v3464, %v101
    %v3469 = vmul.f32 %v3464, %v108
    %v3470 = vmul.f32 %v3464, %v115
    %v3471 = vmul.f32 %v3464, %v122
    %v3472 = vmul.f32 %v3464, %v129
    %3481 = vrot.lane.b32.xlu0 %v3465, 40
    %v3482 = vpop.permute.xlu0 %3481
    %3483 = vrot.lane.b32.xlu0 %v3466, 40
    %v3484 = vpop.permute.xlu0 %3483
    %3485 = vrot.lane.b32.xlu0 %v3467, 40
    %v3486 = vpop.permute.xlu0 %3485
    %3487 = vrot.lane.b32.xlu0 %v3468, 40
    %v3488 = vpop.permute.xlu0 %3487
    %3489 = vrot.lane.b32.xlu0 %v3469, 40
    %v3490 = vpop.permute.xlu0 %3489
    %3491 = vrot.lane.b32.xlu0 %v3470, 40
    %v3492 = vpop.permute.xlu0 %3491
    %3493 = vrot.lane.b32.xlu0 %v3471, 40
    %v3494 = vpop.permute.xlu0 %3493
    %3495 = vrot.lane.b32.xlu0 %v3472, 40
    %v3496 = vpop.permute.xlu0 %3495
    %v3497 = vsel %vm2762, %v3482, %v3484
    %v3498 = vsel %vm2762, %v3484, %v3486
    %v3499 = vsel %vm2762, %v3486, %v3488
    %v3500 = vsel %vm2762, %v3490, %v3492
    %v3501 = vsel %vm2762, %v3492, %v3494
    %v3502 = vsel %vm2762, %v3494, %v3496
    %v3509 = vadd.f32 %v2670, %v3497
    %v3510 = vadd.f32 %v2671, %v3498
    %v3511 = vadd.f32 %v2672, %v3499
    %v3512 = vadd.f32 %v2673, %v3500
    %v3513 = vadd.f32 %v2674, %v3501
    %v3514 = vadd.f32 %v2675, %v3502
    %v3515 = vstv %s3463
    %v3516 = vmul.f32 %v3515, %v186
    %v3517 = vmul.f32 %v3515, %v187
    %v3518 = vmul.f32 %v3515, %v188
    %v3519 = vmul.f32 %v3515, %v189
    %v3520 = vmul.f32 %v3515, %v190
    %v3521 = vmul.f32 %v3515, %v191
    %v3522 = vmul.f32 %v3515, %v192
    %v3523 = vmul.f32 %v3515, %v193
    %3532 = vrot.lane.b32.xlu0 %v3516, 40
    %v3533 = vpop.permute.xlu0 %3532
    %3534 = vrot.lane.b32.xlu0 %v3517, 40
    %v3535 = vpop.permute.xlu0 %3534
    %3536 = vrot.lane.b32.xlu0 %v3518, 40
    %v3537 = vpop.permute.xlu0 %3536
    %3538 = vrot.lane.b32.xlu0 %v3519, 40
    %v3539 = vpop.permute.xlu0 %3538
    %3540 = vrot.lane.b32.xlu0 %v3520, 40
    %v3541 = vpop.permute.xlu0 %3540
    %3542 = vrot.lane.b32.xlu0 %v3521, 40
    %v3543 = vpop.permute.xlu0 %3542
    %3544 = vrot.lane.b32.xlu0 %v3522, 40
    %v3545 = vpop.permute.xlu0 %3544
    %3546 = vrot.lane.b32.xlu0 %v3523, 40
    %v3547 = vpop.permute.xlu0 %3546
    %v3548 = vsel %vm2762, %v3533, %v3535
    %v3549 = vsel %vm2762, %v3535, %v3537
    %v3550 = vsel %vm2762, %v3537, %v3539
    %v3551 = vsel %vm2762, %v3541, %v3543
    %v3552 = vsel %vm2762, %v3543, %v3545
    %v3553 = vsel %vm2762, %v3545, %v3547
    %v3560 = vadd.f32 %v2721, %v3548
    %v3561 = vadd.f32 %v2722, %v3549
    %v3562 = vadd.f32 %v2723, %v3550
    %v3563 = vadd.f32 %v2724, %v3551
    %v3564 = vadd.f32 %v2725, %v3552
    %v3565 = vadd.f32 %v2726, %v3553
    %s3566 = sld [smem:[#allocation8 + $0x24]]
    %s3567 = sld [smem:[#allocation8 + $0x55]]
    %v3568 = vstv %s3566
    %v3569 = vmul.f32 %v3568, %v79
    %v3570 = vmul.f32 %v3568, %v86
    %v3571 = vmul.f32 %v3568, %v93
    %v3572 = vmul.f32 %v3568, %v101
    %v3573 = vmul.f32 %v3568, %v108
    %v3574 = vmul.f32 %v3568, %v115
    %v3575 = vmul.f32 %v3568, %v122
    %v3576 = vmul.f32 %v3568, %v129
    %3585 = vrot.lane.b32.xlu0 %v3569, 39
    %v3586 = vpop.permute.xlu0 %3585
    %3587 = vrot.lane.b32.xlu0 %v3570, 39
    %v3588 = vpop.permute.xlu0 %3587
    %3589 = vrot.lane.b32.xlu0 %v3571, 39
    %v3590 = vpop.permute.xlu0 %3589
    %3591 = vrot.lane.b32.xlu0 %v3572, 39
    %v3592 = vpop.permute.xlu0 %3591
    %3593 = vrot.lane.b32.xlu0 %v3573, 39
    %v3594 = vpop.permute.xlu0 %3593
    %3595 = vrot.lane.b32.xlu0 %v3574, 39
    %v3596 = vpop.permute.xlu0 %3595
    %3597 = vrot.lane.b32.xlu0 %v3575, 39
    %v3598 = vpop.permute.xlu0 %3597
    %3599 = vrot.lane.b32.xlu0 %v3576, 39
    %v3600 = vpop.permute.xlu0 %3599
    %v3601 = vsel %vm2867, %v3586, %v3588
    %v3602 = vsel %vm2867, %v3588, %v3590
    %v3603 = vsel %vm2867, %v3590, %v3592
    %v3604 = vsel %vm2867, %v3594, %v3596
    %v3605 = vsel %vm2867, %v3596, %v3598
    %v3606 = vsel %vm2867, %v3598, %v3600
    %v3613 = vadd.f32 %v3509, %v3601
    %v3614 = vadd.f32 %v3510, %v3602
    %v3615 = vadd.f32 %v3511, %v3603
    %v3616 = vadd.f32 %v3512, %v3604
    %v3617 = vadd.f32 %v3513, %v3605
    %v3618 = vadd.f32 %v3514, %v3606
    %v3619 = vstv %s3567
    %v3620 = vmul.f32 %v3619, %v186
    %v3621 = vmul.f32 %v3619, %v187
    %v3622 = vmul.f32 %v3619, %v188
    %v3623 = vmul.f32 %v3619, %v189
    %v3624 = vmul.f32 %v3619, %v190
    %v3625 = vmul.f32 %v3619, %v191
    %v3626 = vmul.f32 %v3619, %v192
    %v3627 = vmul.f32 %v3619, %v193
    %3636 = vrot.lane.b32.xlu0 %v3620, 39
    %v3637 = vpop.permute.xlu0 %3636
    %3638 = vrot.lane.b32.xlu0 %v3621, 39
    %v3639 = vpop.permute.xlu0 %3638
    %3640 = vrot.lane.b32.xlu0 %v3622, 39
    %v3641 = vpop.permute.xlu0 %3640
    %3642 = vrot.lane.b32.xlu0 %v3623, 39
    %v3643 = vpop.permute.xlu0 %3642
    %3644 = vrot.lane.b32.xlu0 %v3624, 39
    %v3645 = vpop.permute.xlu0 %3644
    %3646 = vrot.lane.b32.xlu0 %v3625, 39
    %v3647 = vpop.permute.xlu0 %3646
    %3648 = vrot.lane.b32.xlu0 %v3626, 39
    %v3649 = vpop.permute.xlu0 %3648
    %3650 = vrot.lane.b32.xlu0 %v3627, 39
    %v3651 = vpop.permute.xlu0 %3650
    %v3652 = vsel %vm2867, %v3637, %v3639
    %v3653 = vsel %vm2867, %v3639, %v3641
    %v3654 = vsel %vm2867, %v3641, %v3643
    %v3655 = vsel %vm2867, %v3645, %v3647
    %v3656 = vsel %vm2867, %v3647, %v3649
    %v3657 = vsel %vm2867, %v3649, %v3651
    %v3664 = vadd.f32 %v3560, %v3652
    %v3665 = vadd.f32 %v3561, %v3653
    %v3666 = vadd.f32 %v3562, %v3654
    %v3667 = vadd.f32 %v3563, %v3655
    %v3668 = vadd.f32 %v3564, %v3656
    %v3669 = vadd.f32 %v3565, %v3657
    %s3670 = sld [smem:[#allocation8 + $0x25]]
    %s3671 = sld [smem:[#allocation8 + $0x56]]
    %v3672 = vstv %s3670
    %v3673 = vmul.f32 %v3672, %v79
    %v3674 = vmul.f32 %v3672, %v86
    %v3675 = vmul.f32 %v3672, %v93
    %v3676 = vmul.f32 %v3672, %v101
    %v3677 = vmul.f32 %v3672, %v108
    %v3678 = vmul.f32 %v3672, %v115
    %v3679 = vmul.f32 %v3672, %v122
    %v3680 = vmul.f32 %v3672, %v129
    %3689 = vrot.lane.b32.xlu0 %v3673, 38
    %v3690 = vpop.permute.xlu0 %3689
    %3691 = vrot.lane.b32.xlu0 %v3674, 38
    %v3692 = vpop.permute.xlu0 %3691
    %3693 = vrot.lane.b32.xlu0 %v3675, 38
    %v3694 = vpop.permute.xlu0 %3693
    %3695 = vrot.lane.b32.xlu0 %v3676, 38
    %v3696 = vpop.permute.xlu0 %3695
    %3697 = vrot.lane.b32.xlu0 %v3677, 38
    %v3698 = vpop.permute.xlu0 %3697
    %3699 = vrot.lane.b32.xlu0 %v3678, 38
    %v3700 = vpop.permute.xlu0 %3699
    %3701 = vrot.lane.b32.xlu0 %v3679, 38
    %v3702 = vpop.permute.xlu0 %3701
    %3703 = vrot.lane.b32.xlu0 %v3680, 38
    %v3704 = vpop.permute.xlu0 %3703
    %v3705 = vsel %vm2972, %v3690, %v3692
    %v3706 = vsel %vm2972, %v3692, %v3694
    %v3707 = vsel %vm2972, %v3694, %v3696
    %v3708 = vsel %vm2972, %v3698, %v3700
    %v3709 = vsel %vm2972, %v3700, %v3702
    %v3710 = vsel %vm2972, %v3702, %v3704
    %v3717 = vadd.f32 %v3613, %v3705
    %v3718 = vadd.f32 %v3614, %v3706
    %v3719 = vadd.f32 %v3615, %v3707
    %v3720 = vadd.f32 %v3616, %v3708
    %v3721 = vadd.f32 %v3617, %v3709
    %v3722 = vadd.f32 %v3618, %v3710
    %v3723 = vstv %s3671
    %v3724 = vmul.f32 %v3723, %v186
    %v3725 = vmul.f32 %v3723, %v187
    %v3726 = vmul.f32 %v3723, %v188
    %v3727 = vmul.f32 %v3723, %v189
    %v3728 = vmul.f32 %v3723, %v190
    %v3729 = vmul.f32 %v3723, %v191
    %v3730 = vmul.f32 %v3723, %v192
    %v3731 = vmul.f32 %v3723, %v193
    %3740 = vrot.lane.b32.xlu0 %v3724, 38
    %v3741 = vpop.permute.xlu0 %3740
    %3742 = vrot.lane.b32.xlu0 %v3725, 38
    %v3743 = vpop.permute.xlu0 %3742
    %3744 = vrot.lane.b32.xlu0 %v3726, 38
    %v3745 = vpop.permute.xlu0 %3744
    %3746 = vrot.lane.b32.xlu0 %v3727, 38
    %v3747 = vpop.permute.xlu0 %3746
    %3748 = vrot.lane.b32.xlu0 %v3728, 38
    %v3749 = vpop.permute.xlu0 %3748
    %3750 = vrot.lane.b32.xlu0 %v3729, 38
    %v3751 = vpop.permute.xlu0 %3750
    %3752 = vrot.lane.b32.xlu0 %v3730, 38
    %v3753 = vpop.permute.xlu0 %3752
    %3754 = vrot.lane.b32.xlu0 %v3731, 38
    %v3755 = vpop.permute.xlu0 %3754
    %v3756 = vsel %vm2972, %v3741, %v3743
    %v3757 = vsel %vm2972, %v3743, %v3745
    %v3758 = vsel %vm2972, %v3745, %v3747
    %v3759 = vsel %vm2972, %v3749, %v3751
    %v3760 = vsel %vm2972, %v3751, %v3753
    %v3761 = vsel %vm2972, %v3753, %v3755
    %v3768 = vadd.f32 %v3664, %v3756
    %v3769 = vadd.f32 %v3665, %v3757
    %v3770 = vadd.f32 %v3666, %v3758
    %v3771 = vadd.f32 %v3667, %v3759
    %v3772 = vadd.f32 %v3668, %v3760
    %v3773 = vadd.f32 %v3669, %v3761
    %s3774 = sld [smem:[#allocation8 + $0x26]]
    %s3775 = sld [smem:[#allocation8 + $0x57]]
    %v3776 = vstv %s3774
    %v3777 = vmul.f32 %v3776, %v79
    %v3778 = vmul.f32 %v3776, %v86
    %v3779 = vmul.f32 %v3776, %v93
    %v3780 = vmul.f32 %v3776, %v101
    %v3781 = vmul.f32 %v3776, %v108
    %v3782 = vmul.f32 %v3776, %v115
    %v3783 = vmul.f32 %v3776, %v122
    %v3784 = vmul.f32 %v3776, %v129
    %3793 = vrot.lane.b32.xlu0 %v3777, 37
    %v3794 = vpop.permute.xlu0 %3793
    %3795 = vrot.lane.b32.xlu0 %v3778, 37
    %v3796 = vpop.permute.xlu0 %3795
    %3797 = vrot.lane.b32.xlu0 %v3779, 37
    %v3798 = vpop.permute.xlu0 %3797
    %3799 = vrot.lane.b32.xlu0 %v3780, 37
    %v3800 = vpop.permute.xlu0 %3799
    %3801 = vrot.lane.b32.xlu0 %v3781, 37
    %v3802 = vpop.permute.xlu0 %3801
    %3803 = vrot.lane.b32.xlu0 %v3782, 37
    %v3804 = vpop.permute.xlu0 %3803
    %3805 = vrot.lane.b32.xlu0 %v3783, 37
    %v3806 = vpop.permute.xlu0 %3805
    %3807 = vrot.lane.b32.xlu0 %v3784, 37
    %v3808 = vpop.permute.xlu0 %3807
    %v3809 = vsel %vm3077, %v3794, %v3796
    %v3810 = vsel %vm3077, %v3796, %v3798
    %v3811 = vsel %vm3077, %v3798, %v3800
    %v3812 = vsel %vm3077, %v3802, %v3804
    %v3813 = vsel %vm3077, %v3804, %v3806
    %v3814 = vsel %vm3077, %v3806, %v3808
    %v3821 = vadd.f32 %v3717, %v3809
    %v3822 = vadd.f32 %v3718, %v3810
    %v3823 = vadd.f32 %v3719, %v3811
    %v3824 = vadd.f32 %v3720, %v3812
    %v3825 = vadd.f32 %v3721, %v3813
    %v3826 = vadd.f32 %v3722, %v3814
    %v3827 = vstv %s3775
    %v3828 = vmul.f32 %v3827, %v186
    %v3829 = vmul.f32 %v3827, %v187
    %v3830 = vmul.f32 %v3827, %v188
    %v3831 = vmul.f32 %v3827, %v189
    %v3832 = vmul.f32 %v3827, %v190
    %v3833 = vmul.f32 %v3827, %v191
    %v3834 = vmul.f32 %v3827, %v192
    %v3835 = vmul.f32 %v3827, %v193
    %3844 = vrot.lane.b32.xlu0 %v3828, 37
    %v3845 = vpop.permute.xlu0 %3844
    %3846 = vrot.lane.b32.xlu0 %v3829, 37
    %v3847 = vpop.permute.xlu0 %3846
    %3848 = vrot.lane.b32.xlu0 %v3830, 37
    %v3849 = vpop.permute.xlu0 %3848
    %3850 = vrot.lane.b32.xlu0 %v3831, 37
    %v3851 = vpop.permute.xlu0 %3850
    %3852 = vrot.lane.b32.xlu0 %v3832, 37
    %v3853 = vpop.permute.xlu0 %3852
    %3854 = vrot.lane.b32.xlu0 %v3833, 37
    %v3855 = vpop.permute.xlu0 %3854
    %3856 = vrot.lane.b32.xlu0 %v3834, 37
    %v3857 = vpop.permute.xlu0 %3856
    %3858 = vrot.lane.b32.xlu0 %v3835, 37
    %v3859 = vpop.permute.xlu0 %3858
    %v3860 = vsel %vm3077, %v3845, %v3847
    %v3861 = vsel %vm3077, %v3847, %v3849
    %v3862 = vsel %vm3077, %v3849, %v3851
    %v3863 = vsel %vm3077, %v3853, %v3855
    %v3864 = vsel %vm3077, %v3855, %v3857
    %v3865 = vsel %vm3077, %v3857, %v3859
    %v3872 = vadd.f32 %v3768, %v3860
    %v3873 = vadd.f32 %v3769, %v3861
    %v3874 = vadd.f32 %v3770, %v3862
    %v3875 = vadd.f32 %v3771, %v3863
    %v3876 = vadd.f32 %v3772, %v3864
    %v3877 = vadd.f32 %v3773, %v3865
    %s3878 = sld [smem:[#allocation8 + $0x27]]
    %s3879 = sld [smem:[#allocation8 + $0x58]]
    %v3880 = vstv %s3878
    %v3881 = vmul.f32 %v3880, %v79
    %v3882 = vmul.f32 %v3880, %v86
    %v3883 = vmul.f32 %v3880, %v93
    %v3884 = vmul.f32 %v3880, %v101
    %v3885 = vmul.f32 %v3880, %v108
    %v3886 = vmul.f32 %v3880, %v115
    %v3887 = vmul.f32 %v3880, %v122
    %v3888 = vmul.f32 %v3880, %v129
    %3897 = vrot.lane.b32.xlu0 %v3881, 36
    %v3898 = vpop.permute.xlu0 %3897
    %3899 = vrot.lane.b32.xlu0 %v3882, 36
    %v3900 = vpop.permute.xlu0 %3899
    %3901 = vrot.lane.b32.xlu0 %v3883, 36
    %v3902 = vpop.permute.xlu0 %3901
    %3903 = vrot.lane.b32.xlu0 %v3884, 36
    %v3904 = vpop.permute.xlu0 %3903
    %3905 = vrot.lane.b32.xlu0 %v3885, 36
    %v3906 = vpop.permute.xlu0 %3905
    %3907 = vrot.lane.b32.xlu0 %v3886, 36
    %v3908 = vpop.permute.xlu0 %3907
    %3909 = vrot.lane.b32.xlu0 %v3887, 36
    %v3910 = vpop.permute.xlu0 %3909
    %3911 = vrot.lane.b32.xlu0 %v3888, 36
    %v3912 = vpop.permute.xlu0 %3911
    %v3913 = vsel %vm3182, %v3898, %v3900
    %v3914 = vsel %vm3182, %v3900, %v3902
    %v3915 = vsel %vm3182, %v3902, %v3904
    %v3916 = vsel %vm3182, %v3906, %v3908
    %v3917 = vsel %vm3182, %v3908, %v3910
    %v3918 = vsel %vm3182, %v3910, %v3912
    %v3925 = vadd.f32 %v3821, %v3913
    %v3926 = vadd.f32 %v3822, %v3914
    %v3927 = vadd.f32 %v3823, %v3915
    %v3928 = vadd.f32 %v3824, %v3916
    %v3929 = vadd.f32 %v3825, %v3917
    %v3930 = vadd.f32 %v3826, %v3918
    %v3931 = vstv %s3879
    %v3932 = vmul.f32 %v3931, %v186
    %v3933 = vmul.f32 %v3931, %v187
    %v3934 = vmul.f32 %v3931, %v188
    %v3935 = vmul.f32 %v3931, %v189
    %v3936 = vmul.f32 %v3931, %v190
    %v3937 = vmul.f32 %v3931, %v191
    %v3938 = vmul.f32 %v3931, %v192
    %v3939 = vmul.f32 %v3931, %v193
    %3948 = vrot.lane.b32.xlu0 %v3932, 36
    %v3949 = vpop.permute.xlu0 %3948
    %3950 = vrot.lane.b32.xlu0 %v3933, 36
    %v3951 = vpop.permute.xlu0 %3950
    %3952 = vrot.lane.b32.xlu0 %v3934, 36
    %v3953 = vpop.permute.xlu0 %3952
    %3954 = vrot.lane.b32.xlu0 %v3935, 36
    %v3955 = vpop.permute.xlu0 %3954
    %3956 = vrot.lane.b32.xlu0 %v3936, 36
    %v3957 = vpop.permute.xlu0 %3956
    %3958 = vrot.lane.b32.xlu0 %v3937, 36
    %v3959 = vpop.permute.xlu0 %3958
    %3960 = vrot.lane.b32.xlu0 %v3938, 36
    %v3961 = vpop.permute.xlu0 %3960
    %3962 = vrot.lane.b32.xlu0 %v3939, 36
    %v3963 = vpop.permute.xlu0 %3962
    %v3964 = vsel %vm3182, %v3949, %v3951
    %v3965 = vsel %vm3182, %v3951, %v3953
    %v3966 = vsel %vm3182, %v3953, %v3955
    %v3967 = vsel %vm3182, %v3957, %v3959
    %v3968 = vsel %vm3182, %v3959, %v3961
    %v3969 = vsel %vm3182, %v3961, %v3963
    %v3976 = vadd.f32 %v3872, %v3964
    %v3977 = vadd.f32 %v3873, %v3965
    %v3978 = vadd.f32 %v3874, %v3966
    %v3979 = vadd.f32 %v3875, %v3967
    %v3980 = vadd.f32 %v3876, %v3968
    %v3981 = vadd.f32 %v3877, %v3969
    %s3982 = sld [smem:[#allocation8 + $0x28]]
    %s3983 = sld [smem:[#allocation8 + $0x59]]
    %v3984 = vstv %s3982
    %v3985 = vmul.f32 %v3984, %v79
    %v3986 = vmul.f32 %v3984, %v86
    %v3987 = vmul.f32 %v3984, %v93
    %v3988 = vmul.f32 %v3984, %v101
    %v3989 = vmul.f32 %v3984, %v108
    %v3990 = vmul.f32 %v3984, %v115
    %v3991 = vmul.f32 %v3984, %v122
    %v3992 = vmul.f32 %v3984, %v129
    %4001 = vrot.lane.b32.xlu0 %v3985, 35
    %v4002 = vpop.permute.xlu0 %4001
    %4003 = vrot.lane.b32.xlu0 %v3986, 35
    %v4004 = vpop.permute.xlu0 %4003
    %4005 = vrot.lane.b32.xlu0 %v3987, 35
    %v4006 = vpop.permute.xlu0 %4005
    %4007 = vrot.lane.b32.xlu0 %v3988, 35
    %v4008 = vpop.permute.xlu0 %4007
    %4009 = vrot.lane.b32.xlu0 %v3989, 35
    %v4010 = vpop.permute.xlu0 %4009
    %4011 = vrot.lane.b32.xlu0 %v3990, 35
    %v4012 = vpop.permute.xlu0 %4011
    %4013 = vrot.lane.b32.xlu0 %v3991, 35
    %v4014 = vpop.permute.xlu0 %4013
    %4015 = vrot.lane.b32.xlu0 %v3992, 35
    %v4016 = vpop.permute.xlu0 %4015
    %v4017 = vsel %vm3287, %v4002, %v4004
    %v4018 = vsel %vm3287, %v4004, %v4006
    %v4019 = vsel %vm3287, %v4006, %v4008
    %v4020 = vsel %vm3287, %v4010, %v4012
    %v4021 = vsel %vm3287, %v4012, %v4014
    %v4022 = vsel %vm3287, %v4014, %v4016
    %v4029 = vadd.f32 %v3925, %v4017
    %v4030 = vadd.f32 %v3926, %v4018
    %v4031 = vadd.f32 %v3927, %v4019
    %v4032 = vadd.f32 %v3928, %v4020
    %v4033 = vadd.f32 %v3929, %v4021
    %v4034 = vadd.f32 %v3930, %v4022
    %v4035 = vstv %s3983
    %v4036 = vmul.f32 %v4035, %v186
    %v4037 = vmul.f32 %v4035, %v187
    %v4038 = vmul.f32 %v4035, %v188
    %v4039 = vmul.f32 %v4035, %v189
    %v4040 = vmul.f32 %v4035, %v190
    %v4041 = vmul.f32 %v4035, %v191
    %v4042 = vmul.f32 %v4035, %v192
    %v4043 = vmul.f32 %v4035, %v193
    %4052 = vrot.lane.b32.xlu0 %v4036, 35
    %v4053 = vpop.permute.xlu0 %4052
    %4054 = vrot.lane.b32.xlu0 %v4037, 35
    %v4055 = vpop.permute.xlu0 %4054
    %4056 = vrot.lane.b32.xlu0 %v4038, 35
    %v4057 = vpop.permute.xlu0 %4056
    %4058 = vrot.lane.b32.xlu0 %v4039, 35
    %v4059 = vpop.permute.xlu0 %4058
    %4060 = vrot.lane.b32.xlu0 %v4040, 35
    %v4061 = vpop.permute.xlu0 %4060
    %4062 = vrot.lane.b32.xlu0 %v4041, 35
    %v4063 = vpop.permute.xlu0 %4062
    %4064 = vrot.lane.b32.xlu0 %v4042, 35
    %v4065 = vpop.permute.xlu0 %4064
    %4066 = vrot.lane.b32.xlu0 %v4043, 35
    %v4067 = vpop.permute.xlu0 %4066
    %v4068 = vsel %vm3287, %v4053, %v4055
    %v4069 = vsel %vm3287, %v4055, %v4057
    %v4070 = vsel %vm3287, %v4057, %v4059
    %v4071 = vsel %vm3287, %v4061, %v4063
    %v4072 = vsel %vm3287, %v4063, %v4065
    %v4073 = vsel %vm3287, %v4065, %v4067
    %v4080 = vadd.f32 %v3976, %v4068
    %v4081 = vadd.f32 %v3977, %v4069
    %v4082 = vadd.f32 %v3978, %v4070
    %v4083 = vadd.f32 %v3979, %v4071
    %v4084 = vadd.f32 %v3980, %v4072
    %v4085 = vadd.f32 %v3981, %v4073
    %s4086 = sld [smem:[#allocation8 + $0x29]]
    %s4087 = sld [smem:[#allocation8 + $0x5a]]
    %v4088 = vstv %s4086
    %v4089 = vmul.f32 %v4088, %v79
    %v4090 = vmul.f32 %v4088, %v86
    %v4091 = vmul.f32 %v4088, %v93
    %v4092 = vmul.f32 %v4088, %v101
    %v4093 = vmul.f32 %v4088, %v108
    %v4094 = vmul.f32 %v4088, %v115
    %v4095 = vmul.f32 %v4088, %v122
    %v4096 = vmul.f32 %v4088, %v129
    %4105 = vrot.lane.b32.xlu0 %v4089, 34
    %v4106 = vpop.permute.xlu0 %4105
    %4107 = vrot.lane.b32.xlu0 %v4090, 34
    %v4108 = vpop.permute.xlu0 %4107
    %4109 = vrot.lane.b32.xlu0 %v4091, 34
    %v4110 = vpop.permute.xlu0 %4109
    %4111 = vrot.lane.b32.xlu0 %v4092, 34
    %v4112 = vpop.permute.xlu0 %4111
    %4113 = vrot.lane.b32.xlu0 %v4093, 34
    %v4114 = vpop.permute.xlu0 %4113
    %4115 = vrot.lane.b32.xlu0 %v4094, 34
    %v4116 = vpop.permute.xlu0 %4115
    %4117 = vrot.lane.b32.xlu0 %v4095, 34
    %v4118 = vpop.permute.xlu0 %4117
    %4119 = vrot.lane.b32.xlu0 %v4096, 34
    %v4120 = vpop.permute.xlu0 %4119
    %v4121 = vsel %vm3392, %v4106, %v4108
    %v4122 = vsel %vm3392, %v4108, %v4110
    %v4123 = vsel %vm3392, %v4110, %v4112
    %v4124 = vsel %vm3392, %v4114, %v4116
    %v4125 = vsel %vm3392, %v4116, %v4118
    %v4126 = vsel %vm3392, %v4118, %v4120
    %v4133 = vadd.f32 %v4029, %v4121
    %v4134 = vadd.f32 %v4030, %v4122
    %v4135 = vadd.f32 %v4031, %v4123
    %v4136 = vadd.f32 %v4032, %v4124
    %v4137 = vadd.f32 %v4033, %v4125
    %v4138 = vadd.f32 %v4034, %v4126
    %v4139 = vstv %s4087
    %v4140 = vmul.f32 %v4139, %v186
    %v4141 = vmul.f32 %v4139, %v187
    %v4142 = vmul.f32 %v4139, %v188
    %v4143 = vmul.f32 %v4139, %v189
    %v4144 = vmul.f32 %v4139, %v190
    %v4145 = vmul.f32 %v4139, %v191
    %v4146 = vmul.f32 %v4139, %v192
    %v4147 = vmul.f32 %v4139, %v193
    %4156 = vrot.lane.b32.xlu0 %v4140, 34
    %v4157 = vpop.permute.xlu0 %4156
    %4158 = vrot.lane.b32.xlu0 %v4141, 34
    %v4159 = vpop.permute.xlu0 %4158
    %4160 = vrot.lane.b32.xlu0 %v4142, 34
    %v4161 = vpop.permute.xlu0 %4160
    %4162 = vrot.lane.b32.xlu0 %v4143, 34
    %v4163 = vpop.permute.xlu0 %4162
    %4164 = vrot.lane.b32.xlu0 %v4144, 34
    %v4165 = vpop.permute.xlu0 %4164
    %4166 = vrot.lane.b32.xlu0 %v4145, 34
    %v4167 = vpop.permute.xlu0 %4166
    %4168 = vrot.lane.b32.xlu0 %v4146, 34
    %v4169 = vpop.permute.xlu0 %4168
    %4170 = vrot.lane.b32.xlu0 %v4147, 34
    %v4171 = vpop.permute.xlu0 %4170
    %v4172 = vsel %vm3392, %v4157, %v4159
    %v4173 = vsel %vm3392, %v4159, %v4161
    %v4174 = vsel %vm3392, %v4161, %v4163
    %v4175 = vsel %vm3392, %v4165, %v4167
    %v4176 = vsel %vm3392, %v4167, %v4169
    %v4177 = vsel %vm3392, %v4169, %v4171
    %v4184 = vadd.f32 %v4080, %v4172
    %v4185 = vadd.f32 %v4081, %v4173
    %v4186 = vadd.f32 %v4082, %v4174
    %v4187 = vadd.f32 %v4083, %v4175
    %v4188 = vadd.f32 %v4084, %v4176
    %v4189 = vadd.f32 %v4085, %v4177
    %s4190 = sld [smem:[#allocation8 + $0x2a]]
    %s4191 = sld [smem:[#allocation8 + $0x5b]]
    %v4192 = vstv %s4190
    %v4193 = vmul.f32 %v4192, %v86
    %v4194 = vmul.f32 %v4192, %v93
    %v4195 = vmul.f32 %v4192, %v101
    %v4196 = vmul.f32 %v4192, %v115
    %v4197 = vmul.f32 %v4192, %v122
    %v4198 = vmul.f32 %v4192, %v129
    %4205 = vrot.lane.b32.xlu0 %v4193, 124
    %v4206 = vpop.permute.xlu0 %4205
    %4207 = vrot.lane.b32.xlu0 %v4194, 124
    %v4208 = vpop.permute.xlu0 %4207
    %4209 = vrot.lane.b32.xlu0 %v4195, 124
    %v4210 = vpop.permute.xlu0 %4209
    %4211 = vrot.lane.b32.xlu0 %v4196, 124
    %v4212 = vpop.permute.xlu0 %4211
    %4213 = vrot.lane.b32.xlu0 %v4197, 124
    %v4214 = vpop.permute.xlu0 %4213
    %4215 = vrot.lane.b32.xlu0 %v4198, 124
    %v4216 = vpop.permute.xlu0 %4215
    %v4217 = vsel %vm504, %v4206, %v4208
    %v4218 = vsel %vm504, %v4208, %v4210
    %v4219 = vsel %vm504, %v4212, %v4214
    %v4220 = vsel %vm504, %v4214, %v4216
    %v4227 = vadd.f32 %v3405, %v4217
    %v4228 = vadd.f32 %v3406, %v4218
    %v4229 = vadd.f32 %v3407, %v4210
    %v4230 = vadd.f32 %v3408, %v4219
    %v4231 = vadd.f32 %v3409, %v4220
    %v4232 = vadd.f32 %v3410, %v4216
    %v4233 = vstv %s4191
    %v4234 = vmul.f32 %v4233, %v187
    %v4235 = vmul.f32 %v4233, %v188
    %v4236 = vmul.f32 %v4233, %v189
    %v4237 = vmul.f32 %v4233, %v191
    %v4238 = vmul.f32 %v4233, %v192
    %v4239 = vmul.f32 %v4233, %v193
    %4246 = vrot.lane.b32.xlu0 %v4234, 124
    %v4247 = vpop.permute.xlu0 %4246
    %4248 = vrot.lane.b32.xlu0 %v4235, 124
    %v4249 = vpop.permute.xlu0 %4248
    %4250 = vrot.lane.b32.xlu0 %v4236, 124
    %v4251 = vpop.permute.xlu0 %4250
    %4252 = vrot.lane.b32.xlu0 %v4237, 124
    %v4253 = vpop.permute.xlu0 %4252
    %4254 = vrot.lane.b32.xlu0 %v4238, 124
    %v4255 = vpop.permute.xlu0 %4254
    %4256 = vrot.lane.b32.xlu0 %v4239, 124
    %v4257 = vpop.permute.xlu0 %4256
    %v4258 = vsel %vm504, %v4247, %v4249
    %v4259 = vsel %vm504, %v4249, %v4251
    %v4260 = vsel %vm504, %v4253, %v4255
    %v4261 = vsel %vm504, %v4255, %v4257
    %v4268 = vadd.f32 %v3456, %v4258
    %v4269 = vadd.f32 %v3457, %v4259
    %v4270 = vadd.f32 %v3458, %v4251
    %v4271 = vadd.f32 %v3459, %v4260
    %v4272 = vadd.f32 %v3460, %v4261
    %v4273 = vadd.f32 %v3461, %v4257
    %s4274 = sld [smem:[#allocation8 + $0x2b]]
    %s4275 = sld [smem:[#allocation8 + $0x5c]]
    %v4276 = vstv %s4274
    %v4277 = vmul.f32 %v4276, %v86
    %v4278 = vmul.f32 %v4276, %v93
    %v4279 = vmul.f32 %v4276, %v101
    %v4280 = vmul.f32 %v4276, %v115
    %v4281 = vmul.f32 %v4276, %v122
    %v4282 = vmul.f32 %v4276, %v129
    %4289 = vrot.lane.b32.xlu0 %v4277, 123
    %v4290 = vpop.permute.xlu0 %4289
    %4291 = vrot.lane.b32.xlu0 %v4278, 123
    %v4292 = vpop.permute.xlu0 %4291
    %4293 = vrot.lane.b32.xlu0 %v4279, 123
    %v4294 = vpop.permute.xlu0 %4293
    %4295 = vrot.lane.b32.xlu0 %v4280, 123
    %v4296 = vpop.permute.xlu0 %4295
    %4297 = vrot.lane.b32.xlu0 %v4281, 123
    %v4298 = vpop.permute.xlu0 %4297
    %4299 = vrot.lane.b32.xlu0 %v4282, 123
    %v4300 = vpop.permute.xlu0 %4299
    %v4301 = vsel %vm589, %v4290, %v4292
    %v4302 = vsel %vm589, %v4292, %v4294
    %v4303 = vsel %vm589, %v4296, %v4298
    %v4304 = vsel %vm589, %v4298, %v4300
    %v4311 = vadd.f32 %v4227, %v4301
    %v4312 = vadd.f32 %v4228, %v4302
    %v4313 = vadd.f32 %v4229, %v4294
    %v4314 = vadd.f32 %v4230, %v4303
    %v4315 = vadd.f32 %v4231, %v4304
    %v4316 = vadd.f32 %v4232, %v4300
    %v4317 = vstv %s4275
    %v4318 = vmul.f32 %v4317, %v187
    %v4319 = vmul.f32 %v4317, %v188
    %v4320 = vmul.f32 %v4317, %v189
    %v4321 = vmul.f32 %v4317, %v191
    %v4322 = vmul.f32 %v4317, %v192
    %v4323 = vmul.f32 %v4317, %v193
    %4330 = vrot.lane.b32.xlu0 %v4318, 123
    %v4331 = vpop.permute.xlu0 %4330
    %4332 = vrot.lane.b32.xlu0 %v4319, 123
    %v4333 = vpop.permute.xlu0 %4332
    %4334 = vrot.lane.b32.xlu0 %v4320, 123
    %v4335 = vpop.permute.xlu0 %4334
    %4336 = vrot.lane.b32.xlu0 %v4321, 123
    %v4337 = vpop.permute.xlu0 %4336
    %4338 = vrot.lane.b32.xlu0 %v4322, 123
    %v4339 = vpop.permute.xlu0 %4338
    %4340 = vrot.lane.b32.xlu0 %v4323, 123
    %v4341 = vpop.permute.xlu0 %4340
    %v4342 = vsel %vm589, %v4331, %v4333
    %v4343 = vsel %vm589, %v4333, %v4335
    %v4344 = vsel %vm589, %v4337, %v4339
    %v4345 = vsel %vm589, %v4339, %v4341
    %v4352 = vadd.f32 %v4268, %v4342
    %v4353 = vadd.f32 %v4269, %v4343
    %v4354 = vadd.f32 %v4270, %v4335
    %v4355 = vadd.f32 %v4271, %v4344
    %v4356 = vadd.f32 %v4272, %v4345
    %v4357 = vadd.f32 %v4273, %v4341
    %s4358 = sld [smem:[#allocation8 + $0x2c]]
    %s4359 = sld [smem:[#allocation8 + $0x5d]]
    %v4360 = vstv %s4358
    %v4361 = vmul.f32 %v4360, %v86
    %v4362 = vmul.f32 %v4360, %v93
    %v4363 = vmul.f32 %v4360, %v101
    %v4364 = vmul.f32 %v4360, %v115
    %v4365 = vmul.f32 %v4360, %v122
    %v4366 = vmul.f32 %v4360, %v129
    %4373 = vrot.lane.b32.xlu0 %v4361, 122
    %v4374 = vpop.permute.xlu0 %4373
    %4375 = vrot.lane.b32.xlu0 %v4362, 122
    %v4376 = vpop.permute.xlu0 %4375
    %4377 = vrot.lane.b32.xlu0 %v4363, 122
    %v4378 = vpop.permute.xlu0 %4377
    %4379 = vrot.lane.b32.xlu0 %v4364, 122
    %v4380 = vpop.permute.xlu0 %4379
    %4381 = vrot.lane.b32.xlu0 %v4365, 122
    %v4382 = vpop.permute.xlu0 %4381
    %4383 = vrot.lane.b32.xlu0 %v4366, 122
    %v4384 = vpop.permute.xlu0 %4383
    %v4385 = vsel %vm674, %v4374, %v4376
    %v4386 = vsel %vm674, %v4376, %v4378
    %v4387 = vsel %vm674, %v4380, %v4382
    %v4388 = vsel %vm674, %v4382, %v4384
    %v4395 = vadd.f32 %v4311, %v4385
    %v4396 = vadd.f32 %v4312, %v4386
    %v4397 = vadd.f32 %v4313, %v4378
    %v4398 = vadd.f32 %v4314, %v4387
    %v4399 = vadd.f32 %v4315, %v4388
    %v4400 = vadd.f32 %v4316, %v4384
    %v4401 = vstv %s4359
    %v4402 = vmul.f32 %v4401, %v187
    %v4403 = vmul.f32 %v4401, %v188
    %v4404 = vmul.f32 %v4401, %v189
    %v4405 = vmul.f32 %v4401, %v191
    %v4406 = vmul.f32 %v4401, %v192
    %v4407 = vmul.f32 %v4401, %v193
    %4414 = vrot.lane.b32.xlu0 %v4402, 122
    %v4415 = vpop.permute.xlu0 %4414
    %4416 = vrot.lane.b32.xlu0 %v4403, 122
    %v4417 = vpop.permute.xlu0 %4416
    %4418 = vrot.lane.b32.xlu0 %v4404, 122
    %v4419 = vpop.permute.xlu0 %4418
    %4420 = vrot.lane.b32.xlu0 %v4405, 122
    %v4421 = vpop.permute.xlu0 %4420
    %4422 = vrot.lane.b32.xlu0 %v4406, 122
    %v4423 = vpop.permute.xlu0 %4422
    %4424 = vrot.lane.b32.xlu0 %v4407, 122
    %v4425 = vpop.permute.xlu0 %4424
    %v4426 = vsel %vm674, %v4415, %v4417
    %v4427 = vsel %vm674, %v4417, %v4419
    %v4428 = vsel %vm674, %v4421, %v4423
    %v4429 = vsel %vm674, %v4423, %v4425
    %v4436 = vadd.f32 %v4352, %v4426
    %v4437 = vadd.f32 %v4353, %v4427
    %v4438 = vadd.f32 %v4354, %v4419
    %v4439 = vadd.f32 %v4355, %v4428
    %v4440 = vadd.f32 %v4356, %v4429
    %v4441 = vadd.f32 %v4357, %v4425
    %s4442 = sld [smem:[#allocation8 + $0x2d]]
    %s4443 = sld [smem:[#allocation8 + $0x5e]]
    %v4444 = vstv %s4442
    %v4445 = vmul.f32 %v4444, %v86
    %v4446 = vmul.f32 %v4444, %v93
    %v4447 = vmul.f32 %v4444, %v101
    %v4448 = vmul.f32 %v4444, %v115
    %v4449 = vmul.f32 %v4444, %v122
    %v4450 = vmul.f32 %v4444, %v129
    %4457 = vrot.lane.b32.xlu0 %v4445, 121
    %v4458 = vpop.permute.xlu0 %4457
    %4459 = vrot.lane.b32.xlu0 %v4446, 121
    %v4460 = vpop.permute.xlu0 %4459
    %4461 = vrot.lane.b32.xlu0 %v4447, 121
    %v4462 = vpop.permute.xlu0 %4461
    %4463 = vrot.lane.b32.xlu0 %v4448, 121
    %v4464 = vpop.permute.xlu0 %4463
    %4465 = vrot.lane.b32.xlu0 %v4449, 121
    %v4466 = vpop.permute.xlu0 %4465
    %4467 = vrot.lane.b32.xlu0 %v4450, 121
    %v4468 = vpop.permute.xlu0 %4467
    %vm4469 = vcmask 990208
    %v4470 = vsel %vm4469, %v4458, %v4460
    %v4471 = vsel %vm4469, %v4460, %v4462
    %v4472 = vsel %vm4469, %v4464, %v4466
    %v4473 = vsel %vm4469, %v4466, %v4468
    %v4480 = vadd.f32 %v4395, %v4470
    %v4481 = vadd.f32 %v4396, %v4471
    %v4482 = vadd.f32 %v4397, %v4462
    %v4483 = vadd.f32 %v4398, %v4472
    %v4484 = vadd.f32 %v4399, %v4473
    %v4485 = vadd.f32 %v4400, %v4468
    %v4486 = vstv %s4443
    %v4487 = vmul.f32 %v4486, %v187
    %v4488 = vmul.f32 %v4486, %v188
    %v4489 = vmul.f32 %v4486, %v189
    %v4490 = vmul.f32 %v4486, %v191
    %v4491 = vmul.f32 %v4486, %v192
    %v4492 = vmul.f32 %v4486, %v193
    %4499 = vrot.lane.b32.xlu0 %v4487, 121
    %v4500 = vpop.permute.xlu0 %4499
    %4501 = vrot.lane.b32.xlu0 %v4488, 121
    %v4502 = vpop.permute.xlu0 %4501
    %4503 = vrot.lane.b32.xlu0 %v4489, 121
    %v4504 = vpop.permute.xlu0 %4503
    %4505 = vrot.lane.b32.xlu0 %v4490, 121
    %v4506 = vpop.permute.xlu0 %4505
    %4507 = vrot.lane.b32.xlu0 %v4491, 121
    %v4508 = vpop.permute.xlu0 %4507
    %4509 = vrot.lane.b32.xlu0 %v4492, 121
    %v4510 = vpop.permute.xlu0 %4509
    %v4511 = vsel %vm4469, %v4500, %v4502
    %v4512 = vsel %vm4469, %v4502, %v4504
    %v4513 = vsel %vm4469, %v4506, %v4508
    %v4514 = vsel %vm4469, %v4508, %v4510
    %v4521 = vadd.f32 %v4436, %v4511
    %v4522 = vadd.f32 %v4437, %v4512
    %v4523 = vadd.f32 %v4438, %v4504
    %v4524 = vadd.f32 %v4439, %v4513
    %v4525 = vadd.f32 %v4440, %v4514
    %v4526 = vadd.f32 %v4441, %v4510
    %s4527 = sld [smem:[#allocation8 + $0x2e]]
    %s4528 = sld [smem:[#allocation8 + $0x5f]]
    %v4529 = vstv %s4527
    %v4530 = vmul.f32 %v4529, %v86
    %v4531 = vmul.f32 %v4529, %v93
    %v4532 = vmul.f32 %v4529, %v101
    %v4533 = vmul.f32 %v4529, %v115
    %v4534 = vmul.f32 %v4529, %v122
    %v4535 = vmul.f32 %v4529, %v129
    %4542 = vrot.lane.b32.xlu0 %v4530, 120
    %v4543 = vpop.permute.xlu0 %4542
    %4544 = vrot.lane.b32.xlu0 %v4531, 120
    %v4545 = vpop.permute.xlu0 %4544
    %4546 = vrot.lane.b32.xlu0 %v4532, 120
    %v4547 = vpop.permute.xlu0 %4546
    %4548 = vrot.lane.b32.xlu0 %v4533, 120
    %v4549 = vpop.permute.xlu0 %4548
    %4550 = vrot.lane.b32.xlu0 %v4534, 120
    %v4551 = vpop.permute.xlu0 %4550
    %4552 = vrot.lane.b32.xlu0 %v4535, 120
    %v4553 = vpop.permute.xlu0 %4552
    %vm4554 = vcmask 982016
    %v4555 = vsel %vm4554, %v4543, %v4545
    %v4556 = vsel %vm4554, %v4545, %v4547
    %v4557 = vsel %vm4554, %v4549, %v4551
    %v4558 = vsel %vm4554, %v4551, %v4553
    %v4565 = vadd.f32 %v4480, %v4555
    %v4566 = vadd.f32 %v4481, %v4556
    %v4567 = vadd.f32 %v4482, %v4547
    %v4568 = vadd.f32 %v4483, %v4557
    %v4569 = vadd.f32 %v4484, %v4558
    %v4570 = vadd.f32 %v4485, %v4553
    %v4571 = vstv %s4528
    %v4572 = vmul.f32 %v4571, %v187
    %v4573 = vmul.f32 %v4571, %v188
    %v4574 = vmul.f32 %v4571, %v189
    %v4575 = vmul.f32 %v4571, %v191
    %v4576 = vmul.f32 %v4571, %v192
    %v4577 = vmul.f32 %v4571, %v193
    %4584 = vrot.lane.b32.xlu0 %v4572, 120
    %v4585 = vpop.permute.xlu0 %4584
    %4586 = vrot.lane.b32.xlu0 %v4573, 120
    %v4587 = vpop.permute.xlu0 %4586
    %4588 = vrot.lane.b32.xlu0 %v4574, 120
    %v4589 = vpop.permute.xlu0 %4588
    %4590 = vrot.lane.b32.xlu0 %v4575, 120
    %v4591 = vpop.permute.xlu0 %4590
    %4592 = vrot.lane.b32.xlu0 %v4576, 120
    %v4593 = vpop.permute.xlu0 %4592
    %4594 = vrot.lane.b32.xlu0 %v4577, 120
    %v4595 = vpop.permute.xlu0 %4594
    %v4596 = vsel %vm4554, %v4585, %v4587
    %v4597 = vsel %vm4554, %v4587, %v4589
    %v4598 = vsel %vm4554, %v4591, %v4593
    %v4599 = vsel %vm4554, %v4593, %v4595
    %v4606 = vadd.f32 %v4521, %v4596
    %v4607 = vadd.f32 %v4522, %v4597
    %v4608 = vadd.f32 %v4523, %v4589
    %v4609 = vadd.f32 %v4524, %v4598
    %v4610 = vadd.f32 %v4525, %v4599
    %v4611 = vadd.f32 %v4526, %v4595
    %s4612 = sld [smem:[#allocation8 + $0x2f]]
    %s4613 = sld [smem:[#allocation8 + $0x60]]
    %v4614 = vstv %s4612
    %v4615 = vmul.f32 %v4614, %v86
    %v4616 = vmul.f32 %v4614, %v93
    %v4617 = vmul.f32 %v4614, %v101
    %v4618 = vmul.f32 %v4614, %v115
    %v4619 = vmul.f32 %v4614, %v122
    %v4620 = vmul.f32 %v4614, %v129
    %4627 = vrot.lane.b32.xlu0 %v4615, 119
    %v4628 = vpop.permute.xlu0 %4627
    %4629 = vrot.lane.b32.xlu0 %v4616, 119
    %v4630 = vpop.permute.xlu0 %4629
    %4631 = vrot.lane.b32.xlu0 %v4617, 119
    %v4632 = vpop.permute.xlu0 %4631
    %4633 = vrot.lane.b32.xlu0 %v4618, 119
    %v4634 = vpop.permute.xlu0 %4633
    %4635 = vrot.lane.b32.xlu0 %v4619, 119
    %v4636 = vpop.permute.xlu0 %4635
    %4637 = vrot.lane.b32.xlu0 %v4620, 119
    %v4638 = vpop.permute.xlu0 %4637
    %vm4639 = vcmask 973824
    %v4640 = vsel %vm4639, %v4628, %v4630
    %v4641 = vsel %vm4639, %v4630, %v4632
    %v4642 = vsel %vm4639, %v4634, %v4636
    %v4643 = vsel %vm4639, %v4636, %v4638
    %v4650 = vadd.f32 %v4565, %v4640
    %v4651 = vadd.f32 %v4566, %v4641
    %v4652 = vadd.f32 %v4567, %v4632
    %v4653 = vadd.f32 %v4568, %v4642
    %v4654 = vadd.f32 %v4569, %v4643
    %v4655 = vadd.f32 %v4570, %v4638
    %v4656 = vstv %s4613
    %v4657 = vmul.f32 %v4656, %v187
    %v4658 = vmul.f32 %v4656, %v188
    %v4659 = vmul.f32 %v4656, %v189
    %v4660 = vmul.f32 %v4656, %v191
    %v4661 = vmul.f32 %v4656, %v192
    %v4662 = vmul.f32 %v4656, %v193
    %4669 = vrot.lane.b32.xlu0 %v4657, 119
    %v4670 = vpop.permute.xlu0 %4669
    %4671 = vrot.lane.b32.xlu0 %v4658, 119
    %v4672 = vpop.permute.xlu0 %4671
    %4673 = vrot.lane.b32.xlu0 %v4659, 119
    %v4674 = vpop.permute.xlu0 %4673
    %4675 = vrot.lane.b32.xlu0 %v4660, 119
    %v4676 = vpop.permute.xlu0 %4675
    %4677 = vrot.lane.b32.xlu0 %v4661, 119
    %v4678 = vpop.permute.xlu0 %4677
    %4679 = vrot.lane.b32.xlu0 %v4662, 119
    %v4680 = vpop.permute.xlu0 %4679
    %v4681 = vsel %vm4639, %v4670, %v4672
    %v4682 = vsel %vm4639, %v4672, %v4674
    %v4683 = vsel %vm4639, %v4676, %v4678
    %v4684 = vsel %vm4639, %v4678, %v4680
    %v4691 = vadd.f32 %v4606, %v4681
    %v4692 = vadd.f32 %v4607, %v4682
    %v4693 = vadd.f32 %v4608, %v4674
    %v4694 = vadd.f32 %v4609, %v4683
    %v4695 = vadd.f32 %v4610, %v4684
    %v4696 = vadd.f32 %v4611, %v4680
    %s4697 = sld [smem:[#allocation8 + $0x30]]
    %s4698 = sld [smem:[#allocation8 + $0x61]]
    %v4699 = vstv %s4697
    %v4700 = vmul.f32 %v4699, %v86
    %v4701 = vmul.f32 %v4699, %v93
    %v4702 = vmul.f32 %v4699, %v101
    %v4703 = vmul.f32 %v4699, %v115
    %v4704 = vmul.f32 %v4699, %v122
    %v4705 = vmul.f32 %v4699, %v129
    %4712 = vrot.lane.b32.xlu0 %v4700, 118
    %v4713 = vpop.permute.xlu0 %4712
    %4714 = vrot.lane.b32.xlu0 %v4701, 118
    %v4715 = vpop.permute.xlu0 %4714
    %4716 = vrot.lane.b32.xlu0 %v4702, 118
    %v4717 = vpop.permute.xlu0 %4716
    %4718 = vrot.lane.b32.xlu0 %v4703, 118
    %v4719 = vpop.permute.xlu0 %4718
    %4720 = vrot.lane.b32.xlu0 %v4704, 118
    %v4721 = vpop.permute.xlu0 %4720
    %4722 = vrot.lane.b32.xlu0 %v4705, 118
    %v4723 = vpop.permute.xlu0 %4722
    %vm4724 = vcmask 965632
    %v4725 = vsel %vm4724, %v4713, %v4715
    %v4726 = vsel %vm4724, %v4715, %v4717
    %v4727 = vsel %vm4724, %v4719, %v4721
    %v4728 = vsel %vm4724, %v4721, %v4723
    %v4735 = vadd.f32 %v4650, %v4725
    %v4736 = vadd.f32 %v4651, %v4726
    %v4737 = vadd.f32 %v4652, %v4717
    %v4738 = vadd.f32 %v4653, %v4727
    %v4739 = vadd.f32 %v4654, %v4728
    %v4740 = vadd.f32 %v4655, %v4723
    %v4741 = vstv %s4698
    %v4742 = vmul.f32 %v4741, %v187
    %v4743 = vmul.f32 %v4741, %v188
    %v4744 = vmul.f32 %v4741, %v189
    %v4745 = vmul.f32 %v4741, %v191
    %v4746 = vmul.f32 %v4741, %v192
    %v4747 = vmul.f32 %v4741, %v193
    %4754 = vrot.lane.b32.xlu0 %v4742, 118
    %v4755 = vpop.permute.xlu0 %4754
    %4756 = vrot.lane.b32.xlu0 %v4743, 118
    %v4757 = vpop.permute.xlu0 %4756
    %4758 = vrot.lane.b32.xlu0 %v4744, 118
    %v4759 = vpop.permute.xlu0 %4758
    %4760 = vrot.lane.b32.xlu0 %v4745, 118
    %v4761 = vpop.permute.xlu0 %4760
    %4762 = vrot.lane.b32.xlu0 %v4746, 118
    %v4763 = vpop.permute.xlu0 %4762
    %4764 = vrot.lane.b32.xlu0 %v4747, 118
    %v4765 = vpop.permute.xlu0 %4764
    %v4766 = vsel %vm4724, %v4755, %v4757
    %v4767 = vsel %vm4724, %v4757, %v4759
    %v4768 = vsel %vm4724, %v4761, %v4763
    %v4769 = vsel %vm4724, %v4763, %v4765
    %v4776 = vadd.f32 %v4691, %v4766
    %v4777 = vadd.f32 %v4692, %v4767
    %v4778 = vadd.f32 %v4693, %v4759
    %v4779 = vadd.f32 %v4694, %v4768
    %v4780 = vadd.f32 %v4695, %v4769
    %v4781 = vadd.f32 %v4696, %v4765
    %4788 = vrot.lane.b32.xlu0 %v4133, 106
    %v4789 = vpop.permute.xlu0 %4788
    %4790 = vrot.lane.b32.xlu0 %v4134, 106
    %v4791 = vpop.permute.xlu0 %4790
    %4792 = vrot.lane.b32.xlu0 %v4135, 106
    %v4793 = vpop.permute.xlu0 %4792
    %4794 = vrot.lane.b32.xlu0 %v4136, 106
    %v4795 = vpop.permute.xlu0 %4794
    %4796 = vrot.lane.b32.xlu0 %v4137, 106
    %v4797 = vpop.permute.xlu0 %4796
    %4798 = vrot.lane.b32.xlu0 %v4138, 106
    %v4799 = vpop.permute.xlu0 %4798
    %vm4800 = vcmask 867328
    %v4801 = vsel %vm4800, %v4789, %v4791
    %v4802 = vsel %vm4800, %v4791, %v4793
    %v4803 = vsel %vm4800, %v4795, %v4797
    %v4804 = vsel %vm4800, %v4797, %v4799
    %v4811 = vadd.f32 %v4735, %v4801
    %v4812 = vadd.f32 %v4736, %v4802
    %v4813 = vadd.f32 %v4737, %v4793
    %v4814 = vadd.f32 %v4738, %v4803
    %v4815 = vadd.f32 %v4739, %v4804
    %v4816 = vadd.f32 %v4740, %v4799
    %4823 = vrot.lane.b32.xlu0 %v4184, 106
    %v4824 = vpop.permute.xlu0 %4823
    %4825 = vrot.lane.b32.xlu0 %v4185, 106
    %v4826 = vpop.permute.xlu0 %4825
    %4827 = vrot.lane.b32.xlu0 %v4186, 106
    %v4828 = vpop.permute.xlu0 %4827
    %4829 = vrot.lane.b32.xlu0 %v4187, 106
    %v4830 = vpop.permute.xlu0 %4829
    %4831 = vrot.lane.b32.xlu0 %v4188, 106
    %v4832 = vpop.permute.xlu0 %4831
    %4833 = vrot.lane.b32.xlu0 %v4189, 106
    %v4834 = vpop.permute.xlu0 %4833
    %v4835 = vsel %vm4800, %v4824, %v4826
    %v4836 = vsel %vm4800, %v4826, %v4828
    %v4837 = vsel %vm4800, %v4830, %v4832
    %v4838 = vsel %vm4800, %v4832, %v4834
    %v4845 = vadd.f32 %v4776, %v4835
    %v4846 = vadd.f32 %v4777, %v4836
    %v4847 = vadd.f32 %v4778, %v4828
    %v4848 = vadd.f32 %v4779, %v4837
    %v4849 = vadd.f32 %v4780, %v4838
    %v4850 = vadd.f32 %v4781, %v4834
    %v4851 = vadd.f32 %v4811, %v4845
    %v4852 = vadd.f32 %v4812, %v4846
    %v4853 = vadd.f32 %v4813, %v4847
    %v4854 = vadd.f32 %v4814, %v4848
    %v4855 = vadd.f32 %v4815, %v4849
    %v4856 = vadd.f32 %v4816, %v4850
    %v4857 = vld [vmem:[%s1] sm:$0x7]
    %v4859 = vlaneseq
    %v4860 = vshrl.u32 %v4859, 7
    %v4861 = vsub.s32 0, %v4860
    %v4862 = vrot.slane %v4857, %v4861
    %v4863 = vlaneseq
    %v4864 = vshrl.u32 %v4863, 7
    %v4865 = vsub.s32 1, %v4864
    %v4866 = vrot.slane %v4857, %v4865
    %v4867 = vlaneseq
    %v4868 = vshrl.u32 %v4867, 7
    %v4869 = vsub.s32 2, %v4868
    %v4870 = vrot.slane %v4857, %v4869
    %v4874 = vmul.f32 %v4851, %v4862
    %v4875 = vmul.f32 %v4852, %v4866
    %v4876 = vmul.f32 %v4853, %v4870
    %v4877 = vmul.f32 %v4854, %v4862
    %v4878 = vmul.f32 %v4855, %v4866
    %v4879 = vmul.f32 %v4856, %v4870
    %v4886 = vrot.slane %v4877, 7
    %vm4887 = vcmask 1041409
    %v4888 = vsel %vm4887, %v4886, %v4874
    %v4889 = vrot.slane %v4878, 7
    %v4890 = vsel %vm4887, %v4889, %v4875
    %v4891 = vrot.slane %v4879, 7
    %v4892 = vsel %vm4887, %v4891, %v4876
    %vm4896 = vcmask 1041408
    %v4897 = vsel %vm4896, %v4888, 0.0
    %v4898 = vsel %vm4896, %v4890, 0.0
    %v4899 = vadd.f32 %v4897, %v4898
    %vm4900 = vcmask 730112
    %v4901 = vsel %vm4900, %v4892, 0.0
    %v4902 = vadd.f32 %v4899, %v4901
    %4903 = vadd.xlane.f32.xlu0 %v4902
    %v4904 = vpop.xlane.xlu0 %4903
    %v4905 = vrot.slane %v4904, 4
    %v4906 = vadd.f32 %v4904, %v4905
    %v4907 = vrot.slane %v4906, 2
    %v4908 = vadd.f32 %v4906, %v4907
    %v4909 = vrot.slane %v4908, 1
    %v4910 = vadd.f32 %v4908, %v4909
    %s4911 = vtos %v4910
    %v4912 = vstv %s4911
    %v4913 = vmul.f32 %v4912, 0.001953125
    %v4914 = vsub.f32 %v4851, %v4913
    %v4915 = vsub.f32 %v4852, %v4913
    %v4916 = vsub.f32 %v4853, %v4913
    %v4917 = vsub.f32 %v4854, %v4913
    %v4918 = vsub.f32 %v4855, %v4913
    %v4919 = vsub.f32 %v4856, %v4913
    %v4920 = vmul.f32 %v4914, %v4862
    %v4921 = vmul.f32 %v4915, %v4866
    %v4922 = vmul.f32 %v4916, %v4870
    %v4923 = vmul.f32 %v4917, %v4862
    %v4924 = vmul.f32 %v4918, %v4866
    %v4925 = vmul.f32 %v4919, %v4870
    %v4926 = vmul.f32 %v4920, %v4920
    %v4927 = vmul.f32 %v4921, %v4921
    %v4928 = vmul.f32 %v4922, %v4922
    %v4929 = vmul.f32 %v4923, %v4923
    %v4930 = vmul.f32 %v4924, %v4924
    %v4931 = vmul.f32 %v4925, %v4925
    %v4938 = vrot.slane %v4929, 7
    %v4939 = vsel %vm4887, %v4938, %v4926
    %v4940 = vrot.slane %v4930, 7
    %v4941 = vsel %vm4887, %v4940, %v4927
    %v4942 = vrot.slane %v4931, 7
    %v4943 = vsel %vm4887, %v4942, %v4928
    %v4947 = vsel %vm4896, %v4939, 0.0
    %v4948 = vsel %vm4896, %v4941, 0.0
    %v4949 = vadd.f32 %v4947, %v4948
    %v4950 = vsel %vm4900, %v4943, 0.0
    %v4951 = vadd.f32 %v4949, %v4950
    %4952 = vadd.xlane.f32.xlu0 %v4951
    %v4953 = vpop.xlane.xlu0 %4952
    %v4954 = vrot.slane %v4953, 4
    %v4955 = vadd.f32 %v4953, %v4954
    %v4956 = vrot.slane %v4955, 2
    %v4957 = vadd.f32 %v4955, %v4956
    %v4958 = vrot.slane %v4957, 1
    %v4959 = vadd.f32 %v4957, %v4958
    %s4960 = vtos %v4959
    %v4961 = vstv %s4960
    %v4962 = vmul.f32 %v4961, 0.001953125
    %v4963 = vadd.f32 %v4962, 1e-05
    %v4964 = vrsqrt.pop %v4963
    %s4965 = sld [smem:[#allocation2]]
    %v4966 = vstv %s4965
    %v4967 = vmul.f32 %v4964, %v4966
    %v4968 = vmul.f32 %v4914, %v4967
    %v4969 = vmul.f32 %v4915, %v4967
    %v4970 = vmul.f32 %v4916, %v4967
    %v4971 = vmul.f32 %v4917, %v4967
    %v4972 = vmul.f32 %v4918, %v4967
    %v4973 = vmul.f32 %v4919, %v4967
    %s4974 = sld [smem:[#allocation3]]
    %v4975 = vstv %s4974
    %v4976 = vadd.f32 %v4968, %v4975
    %v4977 = vadd.f32 %v4969, %v4975
    %v4978 = vadd.f32 %v4970, %v4975
    %v4979 = vadd.f32 %v4971, %v4975
    %v4980 = vadd.f32 %v4972, %v4975
    %v4981 = vadd.f32 %v4973, %v4975
    %v4982 = vmul.f32 %v4976, 0.5
    %v4983 = vmul.f32 %v4977, 0.5
    %v4984 = vmul.f32 %v4978, 0.5
    %v4985 = vmul.f32 %v4979, 0.5
    %v4986 = vmul.f32 %v4980, 0.5
    %v4987 = vmul.f32 %v4981, 0.5
    %v4988 = vtanh.pop %v4982
    %v4989 = vtanh.pop %v4983
    %v4990 = vtanh.pop %v4984
    %v4991 = vtanh.pop %v4985
    %v4992 = vtanh.pop %v4986
    %v4993 = vtanh.pop %v4987
    %v4994 = vmul.f32 %v4988, 0.5
    %v4995 = vmul.f32 %v4989, 0.5
    %v4996 = vmul.f32 %v4990, 0.5
    %v4997 = vmul.f32 %v4991, 0.5
    %v4998 = vmul.f32 %v4992, 0.5
    %v4999 = vmul.f32 %v4993, 0.5
    %v5000 = vadd.f32 %v4994, 0.5
    %v5001 = vadd.f32 %v4995, 0.5
    %v5002 = vadd.f32 %v4996, 0.5
    %v5003 = vadd.f32 %v4997, 0.5
    %v5004 = vadd.f32 %v4998, 0.5
    %v5005 = vadd.f32 %v4999, 0.5
    %v5006 = vlaneseq
    %v5007 = vshrl.u32 %v5006, 7
    %v5008 = vsub.s32 0, %v5007
    %v5009 = vrot.slane %v5000, %v5008
    %v5010 = vlaneseq
    %v5011 = vshrl.u32 %v5010, 7
    %v5012 = vsub.s32 0, %v5011
    %v5013 = vrot.slane %v5001, %v5012
    %v5014 = vlaneseq
    %v5015 = vshrl.u32 %v5014, 7
    %v5016 = vsub.s32 0, %v5015
    %v5017 = vrot.slane %v5002, %v5016
    %v5018 = vlaneseq
    %v5019 = vshrl.u32 %v5018, 7
    %v5020 = vsub.s32 0, %v5019
    %v5021 = vrot.slane %v5003, %v5020
    %v5022 = vlaneseq
    %v5023 = vshrl.u32 %v5022, 7
    %v5024 = vsub.s32 0, %v5023
    %v5025 = vrot.slane %v5004, %v5024
    %v5026 = vlaneseq
    %v5027 = vshrl.u32 %v5026, 7
    %v5028 = vsub.s32 0, %v5027
    %v5029 = vrot.slane %v5005, %v5028
    %v5036 = vcombine.low %v5009, %v5013
    %v5037 = vcombine.low %v5021, %v5025
    %5038 = vrot.lane.b32.xlu0 %v5036, 69
    %v5039 = vpop.permute.xlu0 %5038
    %5040 = vrot.lane.b32.xlu0 %v5017, 69
    %v5041 = vpop.permute.xlu0 %5040
    %5042 = vrot.lane.b32.xlu0 %v5037, 69
    %v5043 = vpop.permute.xlu0 %5042
    %5044 = vrot.lane.b32.xlu0 %v5029, 69
    %v5045 = vpop.permute.xlu0 %5044
    %v5046 = vrot.slane %v5039, 4
    %v5047 = vrot.slane %v5041, 4
    %v5048 = vrot.slane %v5043, 4
    %v5049 = vrot.slane %v5045, 4
    %vm5050 = vcmask 564224
    %v5051 = vsel %vm5050, %v5046, %v5039
    %v5052 = vsel %vm72, %v5046, %v5047
    %v5053 = vsel %vm5050, %v5052, %v5041
    %v5054 = vsel %vm5050, %v5048, %v5043
    %v5055 = vsel %vm72, %v5048, %v5049
    %v5056 = vsel %vm5050, %v5055, %v5045
    %v5061 = vmul.f32 %v56, %v5051
    %v5062 = vmul.f32 %v58, %v5053
    %v5063 = vmul.f32 %v57, %v5054
    %v5064 = vmul.f32 %v59, %v5056
    %v5069 = vcombine.low %v5061, %v5063
    %v5070 = vcombine.high %v5061, %v5063
    %v5071 = vcombine.low %v5062, %v5064
    %v5072 = vcombine.high %v5062, %v5064
    %5073 = vrot.lane.b32.xlu0 %v5069, 59
    %v5074 = vpop.permute.xlu0 %5073
    %5075 = vrot.lane.b32.xlu0 %v5070, 59
    %v5076 = vpop.permute.xlu0 %5075
    %5077 = vrot.lane.b32.xlu0 %v5071, 59
    %v5078 = vpop.permute.xlu0 %5077
    %5079 = vrot.lane.b32.xlu0 %v5072, 59
    %v5080 = vpop.permute.xlu0 %5079
    %vm5081 = vcmask 482304
    %v5082 = vsel %vm5081, %v5074, %v5076
    %v5083 = vsel %vm5081, %v5076, %v5078
    %v5084 = vsel %vm5081, %v5078, %v5080
    %5088 = vst [vmem:[#allocation9] sm:$0xff] %v5082
    %5089 = vst [vmem:[#allocation9 + $0x8] sm:$0xff] %v5083
    %vm5090 = vcmask 736256
    %5091 = vst.msk [vmem:[#allocation9 + $0x10] sm:$0xff] %vm5090, %v5084
    // Predicated region
    $region30: #{tpu_custom_call.1} parent=1 // pred_check
      _
    $region31: #{tpu_custom_call.1} parent=1 // pred_check_branch
      %5093 = sbr.rel (0) target = $region33
    $region32: #{tpu_custom_call.1} parent=1 // pred_region
      %s5095 = ssub.s32 384, 384
      %5096 = vsyncadd [#allocation6], %s5095
      %s5098 = sshll.u32 [#allocation9], 4
      %s5099 = int_to_ptr.vmem [resolvable:$true] %s5098
      %5101 = dma.vmem_to_hbm [thread:$0]  %s5099, 384, %s5, [#allocation6]
    $region33: #{tpu_custom_call.1} parent=1 // pred_fallthru
      _
    // Predicated region
    $region34: #{tpu_custom_call.1} parent=1 // pred_check
      _
    $region35: #{tpu_custom_call.1} parent=1 // pred_check_branch
      %5103 = sbr.rel (0) target = $region37
    $region36: #{tpu_custom_call.1} parent=1 // pred_region
      %5104 = dma.done [#allocation6], 384
    $region37: #{tpu_custom_call.1} parent=1 // pred_fallthru
      _
    %5105 = vsyncpa [#allocation5], 1
    %5106 = vsyncpa [#allocation6], 1
    %5107 = vsyncpa [#allocation7], 1

</llo_original>
